<compile_context>
chip_gen: v5e
topology: v5e:2x2
jax: 0.10.0
libtpu: 0.0.40
codegen_flags: <defaults>
</compile_context>

<pallas_src>
import math

import jax
import jax.numpy as jnp
from jax.experimental import pallas as pl
from jax.experimental.pallas import tpu as pltpu

# ----------------------------- configuration --------------------------------
NUM_LAYERS = 2
DIM_INPUT = 32
DIM_OUTPUT = 16
NUM_HEADS = 4          # heads per partition
NUM_PARTITIONS = 2
SEQ_LEN = 8

DP = DIM_INPUT // NUM_PARTITIONS          # per-partition width (16)
HD = DP // NUM_HEADS                      # head dim (4)
TOTAL_HEADS = NUM_PARTITIONS * NUM_HEADS  # 8
EPS = 1e-5


# ------------------------------ Pallas kernel -------------------------------
def _partition_layer_norm(x, gamma, beta):
    """LayerNorm applied independently to each DP-wide partition slice."""
    xr = x.reshape(SEQ_LEN, NUM_PARTITIONS, DP)
    mean = jnp.mean(xr, axis=-1, keepdims=True)
    var = jnp.mean((xr - mean) ** 2, axis=-1, keepdims=True)
    xn = ((xr - mean) * jax.lax.rsqrt(var + EPS)).reshape(SEQ_LEN, DIM_INPUT)
    return xn * gamma[None, :] + beta[None, :]


def encoder_kernel(x_ref, w_ref, vec_ref, cls_ref, out_ref):
    D = DIM_INPUT
    x = x_ref[...]                                    # (T, D)

    for l in range(NUM_LAYERS):                       # static unroll (L=2)
        w = w_ref[l]                                  # (D, 6D)
        vec = vec_ref[l]                              # (10, D)
        wqkv = w[:, 0:3 * D]                          # (D, 3D) block-diag, (in,out)
        wo = w[:, 3 * D:4 * D]                        # (D, D)
        w1 = w[:, 4 * D:5 * D]                        # (D, D)
        w2 = w[:, 5 * D:6 * D]                        # (D, D)
        bq, bk, bv = vec[0], vec[1], vec[2]
        bo, b1, b2 = vec[3], vec[4], vec[5]
        g1, bt1, g2, bt2 = vec[6], vec[7], vec[8], vec[9]

        # ---- self-attention: all partition-heads batched --------------------
        # NOTE: attention scale 1/sqrt(HD) is pre-folded into wq / bq at pack
        # time, so q needs no extra multiply here.
        qkv = jnp.dot(x, wqkv, preferred_element_type=jnp.float32)   # (T, 3D)
        q = qkv[:, 0:D] + bq[None, :]
        k = qkv[:, D:2 * D] + bk[None, :]
        v = qkv[:, 2 * D:3 * D] + bv[None, :]

        qh = jnp.transpose(q.reshape(SEQ_LEN, TOTAL_HEADS, HD), (1, 0, 2))
        kh = jnp.transpose(k.reshape(SEQ_LEN, TOTAL_HEADS, HD), (1, 0, 2))
        vh = jnp.transpose(v.reshape(SEQ_LEN, TOTAL_HEADS, HD), (1, 0, 2))

        s = jnp.einsum('htd,hsd->hts', qh, kh,
                       preferred_element_type=jnp.float32)           # (H, T, T)
        s = s - jnp.max(s, axis=-1, keepdims=True)
        e = jnp.exp(s)
        attn = e * pl.reciprocal(jnp.sum(e, axis=-1, keepdims=True),
                                 approx=True)
        ctx = jnp.einsum('hts,hsd->htd', attn, vh,
                         preferred_element_type=jnp.float32)          # (H, T, HD)
        ctx = jnp.transpose(ctx, (1, 0, 2)).reshape(SEQ_LEN, D)

        sa = jnp.dot(ctx, wo, preferred_element_type=jnp.float32) + bo[None, :]
        x = _partition_layer_norm(x + sa, g1, bt1)

        # ---- feed forward ----------------------------------------------------
        h1 = jnp.maximum(
            jnp.dot(x, w1, preferred_element_type=jnp.float32) + b1[None, :], 0.0)
        ff = jnp.dot(h1, w2, preferred_element_type=jnp.float32) + b2[None, :]
        x = _partition_layer_norm(x + ff, g2, bt2)

    # ---- classifier: ReLU then Linear ----------------------------------------
    cls = cls_ref[...]                                # (D+1, O)
    wc, bc = cls[0:DIM_INPUT, :], cls[DIM_INPUT, :]
    out_ref[...] = (jnp.dot(jnp.maximum(x, 0.0), wc,
                            preferred_element_type=jnp.float32) + bc[None, :])


# ------------------------------- wrapper -------------------------------------
def _block_diag(blocks):
    rows = []
    for i, bi in enumerate(blocks):
        row = [bi if j == i else jnp.zeros((bi.shape[0], bj.shape[1]), bi.dtype)
               for j, bj in enumerate(blocks)]
        rows.append(jnp.concatenate(row, axis=1))
    return jnp.concatenate(rows, axis=0)


def pack_params(params):
    """Build block-diagonal, pre-transposed, scale-folded packed parameters."""
    L, P, D = NUM_LAYERS, NUM_PARTITIONS, DIM_INPUT
    scale = 1.0 / math.sqrt(HD)
    w_layers, v_layers = [], []
    for l in range(L):
        # QKV: per component (q/k/v) block-diag over partitions, (in, out).
        # Attention scale folded into the q component (weights + bias).
        comps = []
        for c in range(3):
            blk = _block_diag(
                [params["wqkv"][p, l][c * DP:(c + 1) * DP, :].T for p in range(P)])
            if c == 0:
                blk = blk * scale
            comps.append(blk)
        wqkv_bd = jnp.concatenate(comps, axis=1)                            # (D, 3D)
        wo_bd = _block_diag([params["wo"][p, l].T for p in range(P)])       # (D, D)
        w1_bd = _block_diag([params["w1"][p, l].T for p in range(P)])
        w2_bd = _block_diag([params["w2"][p, l].T for p in range(P)])
        w_layers.append(jnp.concatenate([wqkv_bd, wo_bd, w1_bd, w2_bd], axis=1))

        def cat(name, sl=slice(None)):
            return jnp.concatenate([params[name][p, l][sl] for p in range(P)])

        v_layers.append(jnp.stack([
            cat("bqkv", slice(0, DP)) * scale,            # bq (scale folded)
            cat("bqkv", slice(DP, 2 * DP)),               # bk
            cat("bqkv", slice(2 * DP, 3 * DP)),           # bv
            cat("bo"), cat("b1"), cat("b2"),
            cat("g1"), cat("bt1"), cat("g2"), cat("bt2"),
        ]))                                                                 # (10, D)

    weights = jnp.stack(w_layers)                                           # (L, D, 6D)
    vectors = jnp.stack(v_layers)                                           # (L, 10, D)
    wc_full = jnp.concatenate([params["wc"][p] for p in range(P)], axis=1)  # (O, D)
    cls = jnp.concatenate([wc_full.T, params["bc"]], axis=0)                # (D+1, O)
    return weights, vectors, cls


def partitioned_transformer_encoder(x, weights, vectors, cls):
    # Single kernel step: every operand is tiny, so whole arrays live in VMEM
    # and the kernel runs once (no grid, no per-step pipeline overhead).
    return pl.pallas_call(
        encoder_kernel,
        out_shape=jax.ShapeDtypeStruct((SEQ_LEN, DIM_OUTPUT), jnp.float32),
    )(x, weights, vectors, cls)


# --------------------------- parameter init ----------------------------------
def init_params(key):
    ks = jax.random.split(key, 14)
    P, L = NUM_PARTITIONS, NUM_LAYERS

    def rnd(k, shape, scale=0.1):
        return jax.random.normal(k, shape, dtype=jnp.float32) * scale

    return dict(
        wqkv=rnd(ks[0], (P, L, 3 * DP, DP)),
        bqkv=rnd(ks[1], (P, L, 3 * DP)),
        wo=rnd(ks[2], (P, L, DP, DP)),
        bo=rnd(ks[3], (P, L, DP)),
        w1=rnd(ks[4], (P, L, DP, DP)),
        b1=rnd(ks[5], (P, L, DP)),
        w2=rnd(ks[6], (P, L, DP, DP)),
        b2=rnd(ks[7], (P, L, DP)),
        g1=1.0 + rnd(ks[8], (P, L, DP), 0.05),
        bt1=rnd(ks[9], (P, L, DP), 0.05),
        g2=1.0 + rnd(ks[10], (P, L, DP), 0.05),
        bt2=rnd(ks[11], (P, L, DP), 0.05),
        wc=rnd(ks[12], (P, DIM_OUTPUT, DP)),
        bc=rnd(ks[13], (1, DIM_OUTPUT)),
    )


# -------------------------- pure-JAX reference -------------------------------
def _layer_norm(x, gamma, beta):
    mean = jnp.mean(x, axis=-1, keepdims=True)
    var = jnp.mean((x - mean) ** 2, axis=-1, keepdims=True)
    return (x - mean) * jax.lax.rsqrt(var + EPS) * gamma[None, :] + beta[None, :]


def _ref_encoder_layer(x, wqkv, bqkv, wo, bo, w1, b1, w2, b2, g1, bt1, g2, bt2):
    """Per-partition post-norm encoder layer (torch-orientation weights)."""
    t = x.shape[0]
    scale = 1.0 / math.sqrt(HD)
    qkv = jnp.dot(x, wqkv.T) + bqkv[None, :]
    q = qkv[:, 0 * DP:1 * DP]
    k = qkv[:, 1 * DP:2 * DP]
    v = qkv[:, 2 * DP:3 * DP]
    sa = jnp.broadcast_to(bo[None, :], (t, DP))
    for h in range(NUM_HEADS):
        qh = q[:, h * HD:(h + 1) * HD] * scale
        kh = k[:, h * HD:(h + 1) * HD]
        vh = v[:, h * HD:(h + 1) * HD]
        scores = jnp.dot(qh, kh.T)
        scores = scores - jnp.max(scores, axis=-1, keepdims=True)
        e = jnp.exp(scores)
        attn = e / jnp.sum(e, axis=-1, keepdims=True)
        ctx = jnp.dot(attn, vh)
        sa = sa + jnp.dot(ctx, wo[:, h * HD:(h + 1) * HD].T)
    x = _layer_norm(x + sa, g1, bt1)
    h1 = jnp.maximum(jnp.dot(x, w1.T) + b1[None, :], 0.0)
    ff = jnp.dot(h1, w2.T) + b2[None, :]
    x = _layer_norm(x + ff, g2, bt2)
    return x


def reference(x, params):
    outs = []
    for p in range(NUM_PARTITIONS):
        xp = x[:, p * DP:(p + 1) * DP]
        for l in range(NUM_LAYERS):
            xp = _ref_encoder_layer(
                xp,
                params["wqkv"][p, l], params["bqkv"][p, l],
                params["wo"][p, l], params["bo"][p, l],
                params["w1"][p, l], params["b1"][p, l],
                params["w2"][p, l], params["b2"][p, l],
                params["g1"][p, l], params["bt1"][p, l],
                params["g2"][p, l], params["bt2"][p, l],
            )
        outs.append(xp)
    enc = jnp.concatenate(outs, axis=-1)
    act = jnp.maximum(enc, 0.0)
    wc_full = jnp.concatenate([params["wc"][p] for p in range(NUM_PARTITIONS)],
                              axis=-1)
    return jnp.dot(act, wc_full.T) + params["bc"][0]


# --------------------------------- main ---------------------------------------
if __name__ == "__main__":
    key = jax.random.PRNGKey(0)
    kx, kp = jax.random.split(key)
    x = jax.random.normal(kx, (SEQ_LEN, DIM_INPUT), dtype=jnp.float32)
    params = init_params(kp)

    weights, vectors, cls = pack_params(params)
    out = partitioned_transformer_encoder(x, weights, vectors, cls)
    out = jax.block_until_ready(out)

    ref = reference(x, params)
    assert out.shape == (SEQ_LEN, DIM_OUTPUT), out.shape
    if not jnp.allclose(out, ref, rtol=2e-2, atol=2e-2):
        raise AssertionError("Pallas output does not match JAX reference")
    print("KERNEL_OK")
</pallas_src>

<mosaic_0001>
module attributes {stable_mosaic.version = 11 : i64} {
  func.func @encoder_kernel(%arg0: memref<8x32xf32, #tpu.memory_space<vmem>>, %arg1: memref<2x32x192xf32, #tpu.memory_space<vmem>>, %arg2: memref<2x10x32xf32, #tpu.memory_space<vmem>>, %arg3: memref<33x16xf32, #tpu.memory_space<vmem>>, %arg4: memref<8x16xf32, #tpu.memory_space<vmem>>) attributes {dimension_semantics = [], scalar_prefetch = 0 : i64, scratch_operands = 0 : i64, tpu.core_type = #tpu.core_type<tc>} {
    %c0 = arith.constant 0 : index
    %c0_0 = arith.constant 0 : index
    %0 = vector.load %arg0[%c0, %c0_0] : memref<8x32xf32, #tpu.memory_space<vmem>>, vector<8x32xf32>
    %c0_1 = arith.constant 0 : index
    %c0_2 = arith.constant 0 : index
    %c0_3 = arith.constant 0 : index
    %1 = vector.load %arg1[%c0_1, %c0_2, %c0_3] : memref<2x32x192xf32, #tpu.memory_space<vmem>>, vector<1x32x192xf32>
    %2 = vector.shape_cast %1 : vector<1x32x192xf32> to vector<32x192xf32>
    %c0_4 = arith.constant 0 : index
    %c0_5 = arith.constant 0 : index
    %c0_6 = arith.constant 0 : index
    %3 = vector.load %arg2[%c0_4, %c0_5, %c0_6] : memref<2x10x32xf32, #tpu.memory_space<vmem>>, vector<1x10x32xf32>
    %4 = vector.shape_cast %3 : vector<1x10x32xf32> to vector<10x32xf32>
    %5 = vector.extract_strided_slice %2 {offsets = [0, 0], sizes = [32, 96], strides = [1, 1]} : vector<32x192xf32> to vector<32x96xf32>
    %6 = vector.extract_strided_slice %2 {offsets = [0, 96], sizes = [32, 32], strides = [1, 1]} : vector<32x192xf32> to vector<32x32xf32>
    %7 = vector.extract_strided_slice %2 {offsets = [0, 128], sizes = [32, 32], strides = [1, 1]} : vector<32x192xf32> to vector<32x32xf32>
    %8 = vector.extract_strided_slice %2 {offsets = [0, 160], sizes = [32, 32], strides = [1, 1]} : vector<32x192xf32> to vector<32x32xf32>
    %9 = vector.extract_strided_slice %4 {offsets = [0, 0], sizes = [1, 32], strides = [1, 1]} : vector<10x32xf32> to vector<1x32xf32>
    %10 = vector.shape_cast %9 : vector<1x32xf32> to vector<32xf32>
    %11 = vector.extract_strided_slice %4 {offsets = [1, 0], sizes = [1, 32], strides = [1, 1]} : vector<10x32xf32> to vector<1x32xf32>
    %12 = vector.shape_cast %11 : vector<1x32xf32> to vector<32xf32>
    %13 = vector.extract_strided_slice %4 {offsets = [2, 0], sizes = [1, 32], strides = [1, 1]} : vector<10x32xf32> to vector<1x32xf32>
    %14 = vector.shape_cast %13 : vector<1x32xf32> to vector<32xf32>
    %15 = vector.extract_strided_slice %4 {offsets = [3, 0], sizes = [1, 32], strides = [1, 1]} : vector<10x32xf32> to vector<1x32xf32>
    %16 = vector.shape_cast %15 : vector<1x32xf32> to vector<32xf32>
    %17 = vector.extract_strided_slice %4 {offsets = [4, 0], sizes = [1, 32], strides = [1, 1]} : vector<10x32xf32> to vector<1x32xf32>
    %18 = vector.shape_cast %17 : vector<1x32xf32> to vector<32xf32>
    %19 = vector.extract_strided_slice %4 {offsets = [5, 0], sizes = [1, 32], strides = [1, 1]} : vector<10x32xf32> to vector<1x32xf32>
    %20 = vector.shape_cast %19 : vector<1x32xf32> to vector<32xf32>
    %21 = vector.extract_strided_slice %4 {offsets = [6, 0], sizes = [1, 32], strides = [1, 1]} : vector<10x32xf32> to vector<1x32xf32>
    %22 = vector.shape_cast %21 : vector<1x32xf32> to vector<32xf32>
    %23 = vector.extract_strided_slice %4 {offsets = [7, 0], sizes = [1, 32], strides = [1, 1]} : vector<10x32xf32> to vector<1x32xf32>
    %24 = vector.shape_cast %23 : vector<1x32xf32> to vector<32xf32>
    %25 = vector.extract_strided_slice %4 {offsets = [8, 0], sizes = [1, 32], strides = [1, 1]} : vector<10x32xf32> to vector<1x32xf32>
    %26 = vector.shape_cast %25 : vector<1x32xf32> to vector<32xf32>
    %27 = vector.extract_strided_slice %4 {offsets = [9, 0], sizes = [1, 32], strides = [1, 1]} : vector<10x32xf32> to vector<1x32xf32>
    %28 = vector.shape_cast %27 : vector<1x32xf32> to vector<32xf32>
    %cst = arith.constant dense<0.000000e+00> : vector<8x96xf32>
    %29 = tpu.matmul %0, %5, %cst {dimension_numbers = #tpu.dot_dimension_numbers<[1], [0], [0], [1], [0, 0, 1, 1], [], []>} : vector<8x32xf32>, vector<32x96xf32>, vector<8x96xf32> -> vector<8x96xf32>
    %30 = vector.extract_strided_slice %29 {offsets = [0, 0], sizes = [8, 32], strides = [1, 1]} : vector<8x96xf32> to vector<8x32xf32>
    %31 = vector.shape_cast %10 : vector<32xf32> to vector<1x32xf32>
    %32 = vector.broadcast %31 : vector<1x32xf32> to vector<8x32xf32>
    %33 = arith.addf %30, %32 : vector<8x32xf32>
    %34 = vector.extract_strided_slice %29 {offsets = [0, 32], sizes = [8, 32], strides = [1, 1]} : vector<8x96xf32> to vector<8x32xf32>
    %35 = vector.shape_cast %12 : vector<32xf32> to vector<1x32xf32>
    %36 = vector.broadcast %35 : vector<1x32xf32> to vector<8x32xf32>
    %37 = arith.addf %34, %36 : vector<8x32xf32>
    %38 = vector.extract_strided_slice %29 {offsets = [0, 64], sizes = [8, 32], strides = [1, 1]} : vector<8x96xf32> to vector<8x32xf32>
    %39 = vector.shape_cast %14 : vector<32xf32> to vector<1x32xf32>
    %40 = vector.broadcast %39 : vector<1x32xf32> to vector<8x32xf32>
    %41 = arith.addf %38, %40 : vector<8x32xf32>
    %42 = vector.shape_cast %33 : vector<8x32xf32> to vector<8x8x4xf32>
    %43 = tpu.transpose %42, [1, 0, 2] : vector<8x8x4xf32> -> vector<8x8x4xf32>
    %44 = vector.shape_cast %37 : vector<8x32xf32> to vector<8x8x4xf32>
    %45 = tpu.transpose %44, [1, 0, 2] : vector<8x8x4xf32> -> vector<8x8x4xf32>
    %46 = vector.shape_cast %41 : vector<8x32xf32> to vector<8x8x4xf32>
    %47 = tpu.transpose %46, [1, 0, 2] : vector<8x8x4xf32> -> vector<8x8x4xf32>
    "tpu.trace_start"() <{level = 10 : i32, message = "htd,hsd->hts"}> : () -> ()
    %cst_7 = arith.constant dense<0.000000e+00> : vector<8x8x8xf32>
    %48 = tpu.matmul %43, %45, %cst_7 {dimension_numbers = #tpu.dot_dimension_numbers<[2], [2], [1], [1], [0, 0, 0, 1, 1, 1], [0], [0]>} : vector<8x8x4xf32>, vector<8x8x4xf32>, vector<8x8x8xf32> -> vector<8x8x8xf32>
    "tpu.trace_stop"() : () -> ()
    %cst_8 = arith.constant dense<0xFF800000> : vector<8x8xf32>
    %49 = vector.multi_reduction <maximumf>, %48, %cst_8 [2] : vector<8x8x8xf32> to vector<8x8xf32>
    %50 = vector.shape_cast %49 : vector<8x8xf32> to vector<8x8x1xf32>
    %51 = vector.broadcast %50 : vector<8x8x1xf32> to vector<8x8x8xf32>
    %52 = arith.subf %48, %51 : vector<8x8x8xf32>
    %53 = math.exp %52 : vector<8x8x8xf32>
    %cst_9 = arith.constant dense<0.000000e+00> : vector<8x8xf32>
    %54 = vector.multi_reduction <add>, %53, %cst_9 [2] : vector<8x8x8xf32> to vector<8x8xf32>
    %55 = vector.shape_cast %54 : vector<8x8xf32> to vector<8x8x1xf32>
    %56 = tpu.reciprocal %55 {approx = true} : vector<8x8x1xf32> -> vector<8x8x1xf32>
    %57 = vector.broadcast %56 : vector<8x8x1xf32> to vector<8x8x8xf32>
    %58 = arith.mulf %53, %57 : vector<8x8x8xf32>
    "tpu.trace_start"() <{level = 10 : i32, message = "hts,hsd->htd"}> : () -> ()
    %cst_10 = arith.constant dense<0.000000e+00> : vector<8x8x4xf32>
    %59 = tpu.matmul %58, %47, %cst_10 {dimension_numbers = #tpu.dot_dimension_numbers<[2], [1], [1], [2], [0, 0, 0, 1, 1, 2], [0], [0]>} : vector<8x8x8xf32>, vector<8x8x4xf32>, vector<8x8x4xf32> -> vector<8x8x4xf32>
    "tpu.trace_stop"() : () -> ()
    %60 = tpu.transpose %59, [1, 0, 2] : vector<8x8x4xf32> -> vector<8x8x4xf32>
    %61 = vector.shape_cast %60 : vector<8x8x4xf32> to vector<8x32xf32>
    %cst_11 = arith.constant dense<0.000000e+00> : vector<8x32xf32>
    %62 = tpu.matmul %61, %6, %cst_11 {dimension_numbers = #tpu.dot_dimension_numbers<[1], [0], [0], [1], [0, 0, 1, 1], [], []>} : vector<8x32xf32>, vector<32x32xf32>, vector<8x32xf32> -> vector<8x32xf32>
    %63 = vector.shape_cast %16 : vector<32xf32> to vector<1x32xf32>
    %64 = vector.broadcast %63 : vector<1x32xf32> to vector<8x32xf32>
    %65 = arith.addf %62, %64 : vector<8x32xf32>
    %66 = arith.addf %0, %65 : vector<8x32xf32>
    %67 = vector.shape_cast %66 : vector<8x32xf32> to vector<8x2x16xf32>
    %cst_12 = arith.constant dense<0.000000e+00> : vector<8x2xf32>
    %68 = vector.multi_reduction <add>, %67, %cst_12 [2] : vector<8x2x16xf32> to vector<8x2xf32>
    %69 = vector.shape_cast %68 : vector<8x2xf32> to vector<8x2x1xf32>
    %cst_13 = arith.constant 1.600000e+01 : f32
    %70 = vector.broadcast %cst_13 : f32 to vector<8x2x1xf32>
    %71 = arith.divf %69, %70 : vector<8x2x1xf32>
    %72 = vector.broadcast %71 : vector<8x2x1xf32> to vector<8x2x16xf32>
    %73 = arith.subf %67, %72 : vector<8x2x16xf32>
    %74 = arith.mulf %73, %73 : vector<8x2x16xf32>
    %cst_14 = arith.constant dense<0.000000e+00> : vector<8x2xf32>
    %75 = vector.multi_reduction <add>, %74, %cst_14 [2] : vector<8x2x16xf32> to vector<8x2xf32>
    %76 = vector.shape_cast %75 : vector<8x2xf32> to vector<8x2x1xf32>
    %cst_15 = arith.constant 1.600000e+01 : f32
    %77 = vector.broadcast %cst_15 : f32 to vector<8x2x1xf32>
    %78 = arith.divf %76, %77 : vector<8x2x1xf32>
    %79 = vector.broadcast %71 : vector<8x2x1xf32> to vector<8x2x16xf32>
    %80 = arith.subf %67, %79 : vector<8x2x16xf32>
    %cst_16 = arith.constant 9.99999974E-6 : f32
    %81 = vector.broadcast %cst_16 : f32 to vector<8x2x1xf32>
    %82 = arith.addf %78, %81 : vector<8x2x1xf32>
    %83 = math.rsqrt %82 : vector<8x2x1xf32>
    %84 = vector.broadcast %83 : vector<8x2x1xf32> to vector<8x2x16xf32>
    %85 = arith.mulf %80, %84 : vector<8x2x16xf32>
    %86 = vector.shape_cast %85 : vector<8x2x16xf32> to vector<8x32xf32>
    %87 = vector.shape_cast %22 : vector<32xf32> to vector<1x32xf32>
    %88 = vector.broadcast %87 : vector<1x32xf32> to vector<8x32xf32>
    %89 = arith.mulf %86, %88 : vector<8x32xf32>
    %90 = vector.shape_cast %24 : vector<32xf32> to vector<1x32xf32>
    %91 = vector.broadcast %90 : vector<1x32xf32> to vector<8x32xf32>
    %92 = arith.addf %89, %91 : vector<8x32xf32>
    %cst_17 = arith.constant dense<0.000000e+00> : vector<8x32xf32>
    %93 = tpu.matmul %92, %7, %cst_17 {dimension_numbers = #tpu.dot_dimension_numbers<[1], [0], [0], [1], [0, 0, 1, 1], [], []>} : vector<8x32xf32>, vector<32x32xf32>, vector<8x32xf32> -> vector<8x32xf32>
    %94 = vector.shape_cast %18 : vector<32xf32> to vector<1x32xf32>
    %95 = vector.broadcast %94 : vector<1x32xf32> to vector<8x32xf32>
    %96 = arith.addf %93, %95 : vector<8x32xf32>
    %cst_18 = arith.constant 0.000000e+00 : f32
    %97 = vector.broadcast %cst_18 : f32 to vector<8x32xf32>
    %98 = arith.maximumf %96, %97 : vector<8x32xf32>
    %cst_19 = arith.constant dense<0.000000e+00> : vector<8x32xf32>
    %99 = tpu.matmul %98, %8, %cst_19 {dimension_numbers = #tpu.dot_dimension_numbers<[1], [0], [0], [1], [0, 0, 1, 1], [], []>} : vector<8x32xf32>, vector<32x32xf32>, vector<8x32xf32> -> vector<8x32xf32>
    %100 = vector.shape_cast %20 : vector<32xf32> to vector<1x32xf32>
    %101 = vector.broadcast %100 : vector<1x32xf32> to vector<8x32xf32>
    %102 = arith.addf %99, %101 : vector<8x32xf32>
    %103 = arith.addf %92, %102 : vector<8x32xf32>
    %104 = vector.shape_cast %103 : vector<8x32xf32> to vector<8x2x16xf32>
    %cst_20 = arith.constant dense<0.000000e+00> : vector<8x2xf32>
    %105 = vector.multi_reduction <add>, %104, %cst_20 [2] : vector<8x2x16xf32> to vector<8x2xf32>
    %106 = vector.shape_cast %105 : vector<8x2xf32> to vector<8x2x1xf32>
    %cst_21 = arith.constant 1.600000e+01 : f32
    %107 = vector.broadcast %cst_21 : f32 to vector<8x2x1xf32>
    %108 = arith.divf %106, %107 : vector<8x2x1xf32>
    %109 = vector.broadcast %108 : vector<8x2x1xf32> to vector<8x2x16xf32>
    %110 = arith.subf %104, %109 : vector<8x2x16xf32>
    %111 = arith.mulf %110, %110 : vector<8x2x16xf32>
    %cst_22 = arith.constant dense<0.000000e+00> : vector<8x2xf32>
    %112 = vector.multi_reduction <add>, %111, %cst_22 [2] : vector<8x2x16xf32> to vector<8x2xf32>
    %113 = vector.shape_cast %112 : vector<8x2xf32> to vector<8x2x1xf32>
    %cst_23 = arith.constant 1.600000e+01 : f32
    %114 = vector.broadcast %cst_23 : f32 to vector<8x2x1xf32>
    %115 = arith.divf %113, %114 : vector<8x2x1xf32>
    %116 = vector.broadcast %108 : vector<8x2x1xf32> to vector<8x2x16xf32>
    %117 = arith.subf %104, %116 : vector<8x2x16xf32>
    %cst_24 = arith.constant 9.99999974E-6 : f32
    %118 = vector.broadcast %cst_24 : f32 to vector<8x2x1xf32>
    %119 = arith.addf %115, %118 : vector<8x2x1xf32>
    %120 = math.rsqrt %119 : vector<8x2x1xf32>
    %121 = vector.broadcast %120 : vector<8x2x1xf32> to vector<8x2x16xf32>
    %122 = arith.mulf %117, %121 : vector<8x2x16xf32>
    %123 = vector.shape_cast %122 : vector<8x2x16xf32> to vector<8x32xf32>
    %124 = vector.shape_cast %26 : vector<32xf32> to vector<1x32xf32>
    %125 = vector.broadcast %124 : vector<1x32xf32> to vector<8x32xf32>
    %126 = arith.mulf %123, %125 : vector<8x32xf32>
    %127 = vector.shape_cast %28 : vector<32xf32> to vector<1x32xf32>
    %128 = vector.broadcast %127 : vector<1x32xf32> to vector<8x32xf32>
    %129 = arith.addf %126, %128 : vector<8x32xf32>
    %c1 = arith.constant 1 : index
    %c0_25 = arith.constant 0 : index
    %c0_26 = arith.constant 0 : index
    %130 = vector.load %arg1[%c1, %c0_25, %c0_26] : memref<2x32x192xf32, #tpu.memory_space<vmem>>, vector<1x32x192xf32>
    %131 = vector.shape_cast %130 : vector<1x32x192xf32> to vector<32x192xf32>
    %c1_27 = arith.constant 1 : index
    %c0_28 = arith.constant 0 : index
    %c0_29 = arith.constant 0 : index
    %132 = vector.load %arg2[%c1_27, %c0_28, %c0_29] : memref<2x10x32xf32, #tpu.memory_space<vmem>>, vector<1x10x32xf32>
    %133 = vector.shape_cast %132 : vector<1x10x32xf32> to vector<10x32xf32>
    %134 = vector.extract_strided_slice %131 {offsets = [0, 0], sizes = [32, 96], strides = [1, 1]} : vector<32x192xf32> to vector<32x96xf32>
    %135 = vector.extract_strided_slice %131 {offsets = [0, 96], sizes = [32, 32], strides = [1, 1]} : vector<32x192xf32> to vector<32x32xf32>
    %136 = vector.extract_strided_slice %131 {offsets = [0, 128], sizes = [32, 32], strides = [1, 1]} : vector<32x192xf32> to vector<32x32xf32>
    %137 = vector.extract_strided_slice %131 {offsets = [0, 160], sizes = [32, 32], strides = [1, 1]} : vector<32x192xf32> to vector<32x32xf32>
    %138 = vector.extract_strided_slice %133 {offsets = [0, 0], sizes = [1, 32], strides = [1, 1]} : vector<10x32xf32> to vector<1x32xf32>
    %139 = vector.shape_cast %138 : vector<1x32xf32> to vector<32xf32>
    %140 = vector.extract_strided_slice %133 {offsets = [1, 0], sizes = [1, 32], strides = [1, 1]} : vector<10x32xf32> to vector<1x32xf32>
    %141 = vector.shape_cast %140 : vector<1x32xf32> to vector<32xf32>
    %142 = vector.extract_strided_slice %133 {offsets = [2, 0], sizes = [1, 32], strides = [1, 1]} : vector<10x32xf32> to vector<1x32xf32>
    %143 = vector.shape_cast %142 : vector<1x32xf32> to vector<32xf32>
    %144 = vector.extract_strided_slice %133 {offsets = [3, 0], sizes = [1, 32], strides = [1, 1]} : vector<10x32xf32> to vector<1x32xf32>
    %145 = vector.shape_cast %144 : vector<1x32xf32> to vector<32xf32>
    %146 = vector.extract_strided_slice %133 {offsets = [4, 0], sizes = [1, 32], strides = [1, 1]} : vector<10x32xf32> to vector<1x32xf32>
    %147 = vector.shape_cast %146 : vector<1x32xf32> to vector<32xf32>
    %148 = vector.extract_strided_slice %133 {offsets = [5, 0], sizes = [1, 32], strides = [1, 1]} : vector<10x32xf32> to vector<1x32xf32>
    %149 = vector.shape_cast %148 : vector<1x32xf32> to vector<32xf32>
    %150 = vector.extract_strided_slice %133 {offsets = [6, 0], sizes = [1, 32], strides = [1, 1]} : vector<10x32xf32> to vector<1x32xf32>
    %151 = vector.shape_cast %150 : vector<1x32xf32> to vector<32xf32>
    %152 = vector.extract_strided_slice %133 {offsets = [7, 0], sizes = [1, 32], strides = [1, 1]} : vector<10x32xf32> to vector<1x32xf32>
    %153 = vector.shape_cast %152 : vector<1x32xf32> to vector<32xf32>
    %154 = vector.extract_strided_slice %133 {offsets = [8, 0], sizes = [1, 32], strides = [1, 1]} : vector<10x32xf32> to vector<1x32xf32>
    %155 = vector.shape_cast %154 : vector<1x32xf32> to vector<32xf32>
    %156 = vector.extract_strided_slice %133 {offsets = [9, 0], sizes = [1, 32], strides = [1, 1]} : vector<10x32xf32> to vector<1x32xf32>
    %157 = vector.shape_cast %156 : vector<1x32xf32> to vector<32xf32>
    %cst_30 = arith.constant dense<0.000000e+00> : vector<8x96xf32>
    %158 = tpu.matmul %129, %134, %cst_30 {dimension_numbers = #tpu.dot_dimension_numbers<[1], [0], [0], [1], [0, 0, 1, 1], [], []>} : vector<8x32xf32>, vector<32x96xf32>, vector<8x96xf32> -> vector<8x96xf32>
    %159 = vector.extract_strided_slice %158 {offsets = [0, 0], sizes = [8, 32], strides = [1, 1]} : vector<8x96xf32> to vector<8x32xf32>
    %160 = vector.shape_cast %139 : vector<32xf32> to vector<1x32xf32>
    %161 = vector.broadcast %160 : vector<1x32xf32> to vector<8x32xf32>
    %162 = arith.addf %159, %161 : vector<8x32xf32>
    %163 = vector.extract_strided_slice %158 {offsets = [0, 32], sizes = [8, 32], strides = [1, 1]} : vector<8x96xf32> to vector<8x32xf32>
    %164 = vector.shape_cast %141 : vector<32xf32> to vector<1x32xf32>
    %165 = vector.broadcast %164 : vector<1x32xf32> to vector<8x32xf32>
    %166 = arith.addf %163, %165 : vector<8x32xf32>
    %167 = vector.extract_strided_slice %158 {offsets = [0, 64], sizes = [8, 32], strides = [1, 1]} : vector<8x96xf32> to vector<8x32xf32>
    %168 = vector.shape_cast %143 : vector<32xf32> to vector<1x32xf32>
    %169 = vector.broadcast %168 : vector<1x32xf32> to vector<8x32xf32>
    %170 = arith.addf %167, %169 : vector<8x32xf32>
    %171 = vector.shape_cast %162 : vector<8x32xf32> to vector<8x8x4xf32>
    %172 = tpu.transpose %171, [1, 0, 2] : vector<8x8x4xf32> -> vector<8x8x4xf32>
    %173 = vector.shape_cast %166 : vector<8x32xf32> to vector<8x8x4xf32>
    %174 = tpu.transpose %173, [1, 0, 2] : vector<8x8x4xf32> -> vector<8x8x4xf32>
    %175 = vector.shape_cast %170 : vector<8x32xf32> to vector<8x8x4xf32>
    %176 = tpu.transpose %175, [1, 0, 2] : vector<8x8x4xf32> -> vector<8x8x4xf32>
    "tpu.trace_start"() <{level = 10 : i32, message = "htd,hsd->hts"}> : () -> ()
    %cst_31 = arith.constant dense<0.000000e+00> : vector<8x8x8xf32>
    %177 = tpu.matmul %172, %174, %cst_31 {dimension_numbers = #tpu.dot_dimension_numbers<[2], [2], [1], [1], [0, 0, 0, 1, 1, 1], [0], [0]>} : vector<8x8x4xf32>, vector<8x8x4xf32>, vector<8x8x8xf32> -> vector<8x8x8xf32>
    "tpu.trace_stop"() : () -> ()
    %cst_32 = arith.constant dense<0xFF800000> : vector<8x8xf32>
    %178 = vector.multi_reduction <maximumf>, %177, %cst_32 [2] : vector<8x8x8xf32> to vector<8x8xf32>
    %179 = vector.shape_cast %178 : vector<8x8xf32> to vector<8x8x1xf32>
    %180 = vector.broadcast %179 : vector<8x8x1xf32> to vector<8x8x8xf32>
    %181 = arith.subf %177, %180 : vector<8x8x8xf32>
    %182 = math.exp %181 : vector<8x8x8xf32>
    %cst_33 = arith.constant dense<0.000000e+00> : vector<8x8xf32>
    %183 = vector.multi_reduction <add>, %182, %cst_33 [2] : vector<8x8x8xf32> to vector<8x8xf32>
    %184 = vector.shape_cast %183 : vector<8x8xf32> to vector<8x8x1xf32>
    %185 = tpu.reciprocal %184 {approx = true} : vector<8x8x1xf32> -> vector<8x8x1xf32>
    %186 = vector.broadcast %185 : vector<8x8x1xf32> to vector<8x8x8xf32>
    %187 = arith.mulf %182, %186 : vector<8x8x8xf32>
    "tpu.trace_start"() <{level = 10 : i32, message = "hts,hsd->htd"}> : () -> ()
    %cst_34 = arith.constant dense<0.000000e+00> : vector<8x8x4xf32>
    %188 = tpu.matmul %187, %176, %cst_34 {dimension_numbers = #tpu.dot_dimension_numbers<[2], [1], [1], [2], [0, 0, 0, 1, 1, 2], [0], [0]>} : vector<8x8x8xf32>, vector<8x8x4xf32>, vector<8x8x4xf32> -> vector<8x8x4xf32>
    "tpu.trace_stop"() : () -> ()
    %189 = tpu.transpose %188, [1, 0, 2] : vector<8x8x4xf32> -> vector<8x8x4xf32>
    %190 = vector.shape_cast %189 : vector<8x8x4xf32> to vector<8x32xf32>
    %cst_35 = arith.constant dense<0.000000e+00> : vector<8x32xf32>
    %191 = tpu.matmul %190, %135, %cst_35 {dimension_numbers = #tpu.dot_dimension_numbers<[1], [0], [0], [1], [0, 0, 1, 1], [], []>} : vector<8x32xf32>, vector<32x32xf32>, vector<8x32xf32> -> vector<8x32xf32>
    %192 = vector.shape_cast %145 : vector<32xf32> to vector<1x32xf32>
    %193 = vector.broadcast %192 : vector<1x32xf32> to vector<8x32xf32>
    %194 = arith.addf %191, %193 : vector<8x32xf32>
    %195 = arith.addf %129, %194 : vector<8x32xf32>
    %196 = vector.shape_cast %195 : vector<8x32xf32> to vector<8x2x16xf32>
    %cst_36 = arith.constant dense<0.000000e+00> : vector<8x2xf32>
    %197 = vector.multi_reduction <add>, %196, %cst_36 [2] : vector<8x2x16xf32> to vector<8x2xf32>
    %198 = vector.shape_cast %197 : vector<8x2xf32> to vector<8x2x1xf32>
    %cst_37 = arith.constant 1.600000e+01 : f32
    %199 = vector.broadcast %cst_37 : f32 to vector<8x2x1xf32>
    %200 = arith.divf %198, %199 : vector<8x2x1xf32>
    %201 = vector.broadcast %200 : vector<8x2x1xf32> to vector<8x2x16xf32>
    %202 = arith.subf %196, %201 : vector<8x2x16xf32>
    %203 = arith.mulf %202, %202 : vector<8x2x16xf32>
    %cst_38 = arith.constant dense<0.000000e+00> : vector<8x2xf32>
    %204 = vector.multi_reduction <add>, %203, %cst_38 [2] : vector<8x2x16xf32> to vector<8x2xf32>
    %205 = vector.shape_cast %204 : vector<8x2xf32> to vector<8x2x1xf32>
    %cst_39 = arith.constant 1.600000e+01 : f32
    %206 = vector.broadcast %cst_39 : f32 to vector<8x2x1xf32>
    %207 = arith.divf %205, %206 : vector<8x2x1xf32>
    %208 = vector.broadcast %200 : vector<8x2x1xf32> to vector<8x2x16xf32>
    %209 = arith.subf %196, %208 : vector<8x2x16xf32>
    %cst_40 = arith.constant 9.99999974E-6 : f32
    %210 = vector.broadcast %cst_40 : f32 to vector<8x2x1xf32>
    %211 = arith.addf %207, %210 : vector<8x2x1xf32>
    %212 = math.rsqrt %211 : vector<8x2x1xf32>
    %213 = vector.broadcast %212 : vector<8x2x1xf32> to vector<8x2x16xf32>
    %214 = arith.mulf %209, %213 : vector<8x2x16xf32>
    %215 = vector.shape_cast %214 : vector<8x2x16xf32> to vector<8x32xf32>
    %216 = vector.shape_cast %151 : vector<32xf32> to vector<1x32xf32>
    %217 = vector.broadcast %216 : vector<1x32xf32> to vector<8x32xf32>
    %218 = arith.mulf %215, %217 : vector<8x32xf32>
    %219 = vector.shape_cast %153 : vector<32xf32> to vector<1x32xf32>
    %220 = vector.broadcast %219 : vector<1x32xf32> to vector<8x32xf32>
    %221 = arith.addf %218, %220 : vector<8x32xf32>
    %cst_41 = arith.constant dense<0.000000e+00> : vector<8x32xf32>
    %222 = tpu.matmul %221, %136, %cst_41 {dimension_numbers = #tpu.dot_dimension_numbers<[1], [0], [0], [1], [0, 0, 1, 1], [], []>} : vector<8x32xf32>, vector<32x32xf32>, vector<8x32xf32> -> vector<8x32xf32>
    %223 = vector.shape_cast %147 : vector<32xf32> to vector<1x32xf32>
    %224 = vector.broadcast %223 : vector<1x32xf32> to vector<8x32xf32>
    %225 = arith.addf %222, %224 : vector<8x32xf32>
    %cst_42 = arith.constant 0.000000e+00 : f32
    %226 = vector.broadcast %cst_42 : f32 to vector<8x32xf32>
    %227 = arith.maximumf %225, %226 : vector<8x32xf32>
    %cst_43 = arith.constant dense<0.000000e+00> : vector<8x32xf32>
    %228 = tpu.matmul %227, %137, %cst_43 {dimension_numbers = #tpu.dot_dimension_numbers<[1], [0], [0], [1], [0, 0, 1, 1], [], []>} : vector<8x32xf32>, vector<32x32xf32>, vector<8x32xf32> -> vector<8x32xf32>
    %229 = vector.shape_cast %149 : vector<32xf32> to vector<1x32xf32>
    %230 = vector.broadcast %229 : vector<1x32xf32> to vector<8x32xf32>
    %231 = arith.addf %228, %230 : vector<8x32xf32>
    %232 = arith.addf %221, %231 : vector<8x32xf32>
    %233 = vector.shape_cast %232 : vector<8x32xf32> to vector<8x2x16xf32>
    %cst_44 = arith.constant dense<0.000000e+00> : vector<8x2xf32>
    %234 = vector.multi_reduction <add>, %233, %cst_44 [2] : vector<8x2x16xf32> to vector<8x2xf32>
    %235 = vector.shape_cast %234 : vector<8x2xf32> to vector<8x2x1xf32>
    %cst_45 = arith.constant 1.600000e+01 : f32
    %236 = vector.broadcast %cst_45 : f32 to vector<8x2x1xf32>
    %237 = arith.divf %235, %236 : vector<8x2x1xf32>
    %238 = vector.broadcast %237 : vector<8x2x1xf32> to vector<8x2x16xf32>
    %239 = arith.subf %233, %238 : vector<8x2x16xf32>
    %240 = arith.mulf %239, %239 : vector<8x2x16xf32>
    %cst_46 = arith.constant dense<0.000000e+00> : vector<8x2xf32>
    %241 = vector.multi_reduction <add>, %240, %cst_46 [2] : vector<8x2x16xf32> to vector<8x2xf32>
    %242 = vector.shape_cast %241 : vector<8x2xf32> to vector<8x2x1xf32>
    %cst_47 = arith.constant 1.600000e+01 : f32
    %243 = vector.broadcast %cst_47 : f32 to vector<8x2x1xf32>
    %244 = arith.divf %242, %243 : vector<8x2x1xf32>
    %245 = vector.broadcast %237 : vector<8x2x1xf32> to vector<8x2x16xf32>
    %246 = arith.subf %233, %245 : vector<8x2x16xf32>
    %cst_48 = arith.constant 9.99999974E-6 : f32
    %247 = vector.broadcast %cst_48 : f32 to vector<8x2x1xf32>
    %248 = arith.addf %244, %247 : vector<8x2x1xf32>
    %249 = math.rsqrt %248 : vector<8x2x1xf32>
    %250 = vector.broadcast %249 : vector<8x2x1xf32> to vector<8x2x16xf32>
    %251 = arith.mulf %246, %250 : vector<8x2x16xf32>
    %252 = vector.shape_cast %251 : vector<8x2x16xf32> to vector<8x32xf32>
    %253 = vector.shape_cast %155 : vector<32xf32> to vector<1x32xf32>
    %254 = vector.broadcast %253 : vector<1x32xf32> to vector<8x32xf32>
    %255 = arith.mulf %252, %254 : vector<8x32xf32>
    %256 = vector.shape_cast %157 : vector<32xf32> to vector<1x32xf32>
    %257 = vector.broadcast %256 : vector<1x32xf32> to vector<8x32xf32>
    %258 = arith.addf %255, %257 : vector<8x32xf32>
    %c0_49 = arith.constant 0 : index
    %c0_50 = arith.constant 0 : index
    %259 = vector.load %arg3[%c0_49, %c0_50] : memref<33x16xf32, #tpu.memory_space<vmem>>, vector<33x16xf32>
    %260 = vector.extract_strided_slice %259 {offsets = [0, 0], sizes = [32, 16], strides = [1, 1]} : vector<33x16xf32> to vector<32x16xf32>
    %261 = vector.extract_strided_slice %259 {offsets = [32, 0], sizes = [1, 16], strides = [1, 1]} : vector<33x16xf32> to vector<1x16xf32>
    %262 = vector.shape_cast %261 : vector<1x16xf32> to vector<16xf32>
    %cst_51 = arith.constant 0.000000e+00 : f32
    %263 = vector.broadcast %cst_51 : f32 to vector<8x32xf32>
    %264 = arith.maximumf %258, %263 : vector<8x32xf32>
    %cst_52 = arith.constant dense<0.000000e+00> : vector<8x16xf32>
    %265 = tpu.matmul %264, %260, %cst_52 {dimension_numbers = #tpu.dot_dimension_numbers<[1], [0], [0], [1], [0, 0, 1, 1], [], []>} : vector<8x32xf32>, vector<32x16xf32>, vector<8x16xf32> -> vector<8x16xf32>
    %266 = vector.shape_cast %262 : vector<16xf32> to vector<1x16xf32>
    %267 = vector.broadcast %266 : vector<1x16xf32> to vector<8x16xf32>
    %268 = arith.addf %265, %267 : vector<8x16xf32>
    %c0_53 = arith.constant 0 : index
    %c0_54 = arith.constant 0 : index
    %269 = vector.load %arg4[%c0_53, %c0_54] : memref<8x16xf32, #tpu.memory_space<vmem>>, vector<8x16xf32>
    tpu.vector_store %arg4[%c0_53, %c0_54], %268 {strides = array<i32>} : memref<8x16xf32, #tpu.memory_space<vmem>>, vector<8x16xf32>,
    return
  }
}

</mosaic_0001>

<llo_original>
// kernel: tpu_custom_call.1
$region0: #{tpu_custom_call.1}
  #allocation0 [shape = 'u32[]', space=smem, size = 0x4, offset = 0x4, fixed_abs, tag = 'smem constant byte address 0x4 - core index']
  #allocation1 [shape = 'u32[72,128]{1,0:T(1,128)}', space=vmem, size = 0x9000, scoped, tag = 'internal scratch']
  %s0 = inlined_call_operand.vmem [shape: f32[8,32], index: 0, kind: input, shape index: {}]
  %s1 = inlined_call_operand.hbm [shape: f32[2,32,192], index: 1, kind: input, shape index: {}]
  %s2 = inlined_call_operand.vmem [shape: f32[2,10,32], index: 2, kind: input, shape index: {}]
  %s3 = inlined_call_operand.vmem [shape: f32[33,16], index: 3, kind: input, shape index: {}]
  %s4 = inlined_call_operand.hbm [shape: f32[8,16], index: 4, kind: output, shape index: {}]
  %s5 = sld [smem:[#allocation0]]
  $region30: #{tpu_custom_call.1} parent=0
    _
  %s7 = ssub.s32 1, %s5
  %s8 = scalar_select 0, %s7, %s5
  $region1: #{tpu_custom_call.1} parent=0
    #allocation2 [shape = 'u8[65536]{0}', space=vmem, size = 0x10000, scoped, tag = 'input window, operand 1, single buffered']
    #allocation3 [shape = 's32[1]{0}', space=sflag, size = 0x4, scoped, tag = 'scoped memory for tpu_custom_call.1']
    #allocation4 [shape = 's32[1]{0}', space=sflag, size = 0x4, scoped, tag = 'scoped memory for tpu_custom_call.1']
    #allocation5 [shape = 'u8[4096]{0}', space=vmem, size = 0x1000, scoped, tag = 'output window, operand 0, single buffered']
    %9 = vsyncpa [#allocation3], 0
    %10 = vsyncpa [#allocation4], 0
    // Predicated region
    $region2: #{tpu_custom_call.1} parent=1 // pred_check
      _
    $region3: #{tpu_custom_call.1} parent=1 // pred_check_branch
      %12 = sbr.rel (0) target = $region5
    $region4: #{tpu_custom_call.1} parent=1 // pred_region
      _
    $region5: #{tpu_custom_call.1} parent=1 // pred_fallthru
      _
    // Predicated region
    $region6: #{tpu_custom_call.1} parent=1 // pred_check
      _
    $region7: #{tpu_custom_call.1} parent=1 // pred_check_branch
      %14 = sbr.rel (0) target = $region9
    $region8: #{tpu_custom_call.1} parent=1 // pred_region
      %16 = vsyncadd [#allocation3], 0
      %s17 = sshll.u32 %s1, 4
      %s18 = int_to_ptr.hbm [resolvable:$true] %s17
      %s19 = sshll.u32 [#allocation2], 4
      %s20 = int_to_ptr.vmem [resolvable:$true] %s19
      %25 = dma.hbm_to_vmem [thread:$0]  %s18, 2048, %s20, [#allocation3], 256, 256, 16
    $region9: #{tpu_custom_call.1} parent=1 // pred_fallthru
      _
    // Predicated region
    $region10: #{tpu_custom_call.1} parent=1 // pred_check
      _
    $region11: #{tpu_custom_call.1} parent=1 // pred_check_branch
      %27 = sbr.rel (0) target = $region13
    $region12: #{tpu_custom_call.1} parent=1 // pred_region
      _
    $region13: #{tpu_custom_call.1} parent=1 // pred_fallthru
      _
    // Predicated region
    $region14: #{tpu_custom_call.1} parent=1 // pred_check
      _
    $region15: #{tpu_custom_call.1} parent=1 // pred_check_branch
      %29 = sbr.rel (0) target = $region17
    $region16: #{tpu_custom_call.1} parent=1 // pred_region
      _
    $region17: #{tpu_custom_call.1} parent=1 // pred_fallthru
      _
    // Predicated region
    $region18: #{tpu_custom_call.1} parent=1 // pred_check
      _
    $region19: #{tpu_custom_call.1} parent=1 // pred_check_branch
      %31 = sbr.rel (0) target = $region21
    $region20: #{tpu_custom_call.1} parent=1 // pred_region
      %33 = dma.done [#allocation3], 2048
    $region21: #{tpu_custom_call.1} parent=1 // pred_fallthru
      _
    %v34 = vld [vmem:[%s0] sm:$0xff]
    %v35 = vld [vmem:[#allocation2] sm:$0xff]
    %v36 = vld [vmem:[#allocation2 + $0x8] sm:$0xff]
    %v37 = vld [vmem:[#allocation2 + $0x10] sm:$0xff]
    %v38 = vld [vmem:[#allocation2 + $0x18] sm:$0xff]
    %v39 = vld [vmem:[#allocation2 + $0x20] sm:$0xff]
    %v40 = vld [vmem:[#allocation2 + $0x28] sm:$0xff]
    %v41 = vld [vmem:[#allocation2 + $0x30] sm:$0xff]
    %v42 = vld [vmem:[#allocation2 + $0x38] sm:$0xff]
    %v43 = vld [vmem:[%s2] sm:$0xff]
    %v44 = vld [vmem:[%s2 + $0x8] sm:$0x3]
    %vm45 = vcmask 261120
    %v47 = vsel %vm45, %v34, 0
    %49 = vmatpush.msra.mxu0 0.0
    %50 = vmatpush.msra.mxu0 0.0
    %51 = vmatpush.msra.mxu0 0.0
    %52 = vmatpush.msra.mxu0 0.0
    %53 = vmatpush.msra.mxu0 0.0
    %54 = vmatpush.msra.mxu0 0.0
    %55 = vmatpush.msra.mxu0 0.0
    %56 = vmatpush.msra.mxu0 0.0
    %57 = vmatpush.msra.mxu0 0.0
    %58 = vmatpush.msra.mxu0 0.0
    %59 = vmatpush.msra.mxu0 0.0
    %60 = vmatpush.msra.mxu0 0.0
    %61 = vmatpush.msra.mxu0 %v41
    %62 = vmatpush.msra.mxu0 %v39
    %63 = vmatpush.msra.mxu0 %v37
    %64 = vmatpush.msra.mxu0 %v35
    %65 = vmatmul.f32.gmra.mxu0 %v47
    %v66 = vpop.f32.mrf.mxu0
    %v67 = vadd.f32 0.0, %v66
    %68 = vdwg.mxu0
    %v69 = vperm.slane %v43, 0
    %v70 = vadd.f32 %v67, %v69
    %v71 = vperm.slane %v43, 1
    %73 = vrot.lane.b32.xlu0 %v71, 32
    %v74 = vpop.permute.xlu0 %73
    %v76 = vadd.f32 %v67, %v74
    %v77 = vperm.slane %v43, 2
    %79 = vrot.lane.b32.xlu0 %v77, 64
    %v80 = vpop.permute.xlu0 %79
    %v82 = vadd.f32 %v67, %v80
    %84 = vrot.lane.b32.xlu0 %v70, 124
    %v85 = vpop.permute.xlu0 %84
    %87 = vrot.lane.b32.xlu0 %v70, 120
    %v88 = vpop.permute.xlu0 %87
    %90 = vrot.lane.b32.xlu0 %v70, 116
    %v91 = vpop.permute.xlu0 %90
    %93 = vrot.lane.b32.xlu0 %v70, 112
    %v94 = vpop.permute.xlu0 %93
    %96 = vrot.lane.b32.xlu0 %v70, 108
    %v97 = vpop.permute.xlu0 %96
    %99 = vrot.lane.b32.xlu0 %v70, 104
    %v100 = vpop.permute.xlu0 %99
    %102 = vrot.lane.b32.xlu0 %v70, 100
    %v103 = vpop.permute.xlu0 %102
    %v105 = vrot.slane %v88, 4
    %vm106 = vcmask 1047556
    %v107 = vsel %vm106, %v105, %v70
    %v108 = vrot.slane %v70, 4
    %v109 = vsel %vm106, %v88, %v108
    %v111 = vunpack.c.l.s4 1983009808
    %v112 = vunpack.c.0.s8 %v111
    %v113 = vperm.slane %v107, %v112
    %v115 = vunpack.c.l.s4 1983009808
    %v116 = vunpack.c.0.s8 %v115
    %v117 = vperm.slane %v109, %v116
    %v118 = vrot.slane %v91, 4
    %v119 = vsel %vm106, %v118, %v85
    %v120 = vrot.slane %v85, 4
    %v121 = vsel %vm106, %v91, %v120
    %v123 = vunpack.c.l.s4 1983009808
    %v124 = vunpack.c.0.s8 %v123
    %v125 = vperm.slane %v119, %v124
    %v127 = vunpack.c.l.s4 1983009808
    %v128 = vunpack.c.0.s8 %v127
    %v129 = vperm.slane %v121, %v128
    %v130 = vrot.slane %v100, 4
    %v131 = vsel %vm106, %v130, %v94
    %v132 = vrot.slane %v94, 4
    %v133 = vsel %vm106, %v100, %v132
    %v135 = vunpack.c.l.s4 1983009808
    %v136 = vunpack.c.0.s8 %v135
    %v137 = vperm.slane %v131, %v136
    %v139 = vunpack.c.l.s4 1983009808
    %v140 = vunpack.c.0.s8 %v139
    %v141 = vperm.slane %v133, %v140
    %v142 = vrot.slane %v103, 4
    %v143 = vsel %vm106, %v142, %v97
    %v144 = vrot.slane %v97, 4
    %v145 = vsel %vm106, %v103, %v144
    %v147 = vunpack.c.l.s4 1983009808
    %v148 = vunpack.c.0.s8 %v147
    %v149 = vperm.slane %v143, %v148
    %v151 = vunpack.c.l.s4 1983009808
    %v152 = vunpack.c.0.s8 %v151
    %v153 = vperm.slane %v145, %v152
    %v154 = vrot.slane %v125, 4
    %v155 = vsel %vm106, %v154, %v113
    %v156 = vrot.slane %v113, 4
    %v157 = vsel %vm106, %v125, %v156
    %v159 = vunpack.c.l.s4 1934713408
    %v160 = vunpack.c.0.s8 %v159
    %v161 = vperm.slane %v155, %v160
    %v163 = vunpack.c.l.s4 1934713408
    %v164 = vunpack.c.0.s8 %v163
    %v165 = vperm.slane %v157, %v164
    %v166 = vrot.slane %v129, 4
    %v167 = vsel %vm106, %v166, %v117
    %v168 = vrot.slane %v117, 4
    %v169 = vsel %vm106, %v129, %v168
    %v171 = vunpack.c.l.s4 1934713408
    %v172 = vunpack.c.0.s8 %v171
    %v173 = vperm.slane %v167, %v172
    %v175 = vunpack.c.l.s4 1934713408
    %v176 = vunpack.c.0.s8 %v175
    %v177 = vperm.slane %v169, %v176
    %v178 = vrot.slane %v149, 4
    %v179 = vsel %vm106, %v178, %v137
    %v180 = vrot.slane %v137, 4
    %v181 = vsel %vm106, %v149, %v180
    %v183 = vunpack.c.l.s4 1934713408
    %v184 = vunpack.c.0.s8 %v183
    %v185 = vperm.slane %v179, %v184
    %v187 = vunpack.c.l.s4 1934713408
    %v188 = vunpack.c.0.s8 %v187
    %v189 = vperm.slane %v181, %v188
    %v190 = vrot.slane %v153, 4
    %v191 = vsel %vm106, %v190, %v141
    %v192 = vrot.slane %v141, 4
    %v193 = vsel %vm106, %v153, %v192
    %v195 = vunpack.c.l.s4 1934713408
    %v196 = vunpack.c.0.s8 %v195
    %v197 = vperm.slane %v191, %v196
    %v199 = vunpack.c.l.s4 1934713408
    %v200 = vunpack.c.0.s8 %v199
    %v201 = vperm.slane %v193, %v200
    %v202 = vrot.slane %v185, 4
    %v203 = vsel %vm106, %v202, %v161
    %v204 = vrot.slane %v161, 4
    %v205 = vsel %vm106, %v185, %v204
    %v206 = vrot.slane %v189, 4
    %v207 = vsel %vm106, %v206, %v165
    %v208 = vrot.slane %v165, 4
    %v209 = vsel %vm106, %v189, %v208
    %v210 = vrot.slane %v197, 4
    %v211 = vsel %vm106, %v210, %v173
    %v212 = vrot.slane %v173, 4
    %v213 = vsel %vm106, %v197, %v212
    %v214 = vrot.slane %v201, 4
    %v215 = vsel %vm106, %v214, %v177
    %v216 = vrot.slane %v177, 4
    %v217 = vsel %vm106, %v201, %v216
    %v218 = vrot.slane %v207, 4
    %v219 = vsel %vm106, %v218, %v203
    %v220 = vrot.slane %v203, 4
    %v221 = vsel %vm106, %v207, %v220
    %v223 = vunpack.c.l.s4 1983009808
    %v224 = vunpack.c.0.s8 %v223
    %v225 = vperm.slane %v219, %v224
    %v227 = vunpack.c.l.s4 1983009808
    %v228 = vunpack.c.0.s8 %v227
    %v229 = vperm.slane %v221, %v228
    %v230 = vrot.slane %v209, 4
    %v231 = vsel %vm106, %v230, %v205
    %v232 = vrot.slane %v205, 4
    %v233 = vsel %vm106, %v209, %v232
    %v235 = vunpack.c.l.s4 1983009808
    %v236 = vunpack.c.0.s8 %v235
    %v237 = vperm.slane %v231, %v236
    %v239 = vunpack.c.l.s4 1983009808
    %v240 = vunpack.c.0.s8 %v239
    %v241 = vperm.slane %v233, %v240
    %v242 = vrot.slane %v215, 4
    %v243 = vsel %vm106, %v242, %v211
    %v244 = vrot.slane %v211, 4
    %v245 = vsel %vm106, %v215, %v244
    %v247 = vunpack.c.l.s4 1983009808
    %v248 = vunpack.c.0.s8 %v247
    %v249 = vperm.slane %v243, %v248
    %v251 = vunpack.c.l.s4 1983009808
    %v252 = vunpack.c.0.s8 %v251
    %v253 = vperm.slane %v245, %v252
    %v254 = vrot.slane %v217, 4
    %v255 = vsel %vm106, %v254, %v213
    %v256 = vrot.slane %v213, 4
    %v257 = vsel %vm106, %v217, %v256
    %v259 = vunpack.c.l.s4 1983009808
    %v260 = vunpack.c.0.s8 %v259
    %v261 = vperm.slane %v255, %v260
    %v263 = vunpack.c.l.s4 1983009808
    %v264 = vunpack.c.0.s8 %v263
    %v265 = vperm.slane %v257, %v264
    %v266 = vrot.slane %v237, 4
    %v267 = vsel %vm106, %v266, %v225
    %v268 = vrot.slane %v225, 4
    %v269 = vsel %vm106, %v237, %v268
    %v271 = vunpack.c.l.s4 1934713408
    %v272 = vunpack.c.0.s8 %v271
    %v273 = vperm.slane %v267, %v272
    %v275 = vunpack.c.l.s4 1934713408
    %v276 = vunpack.c.0.s8 %v275
    %v277 = vperm.slane %v269, %v276
    %v278 = vrot.slane %v241, 4
    %v279 = vsel %vm106, %v278, %v229
    %v280 = vrot.slane %v229, 4
    %v281 = vsel %vm106, %v241, %v280
    %v283 = vunpack.c.l.s4 1934713408
    %v284 = vunpack.c.0.s8 %v283
    %v285 = vperm.slane %v279, %v284
    %v287 = vunpack.c.l.s4 1934713408
    %v288 = vunpack.c.0.s8 %v287
    %v289 = vperm.slane %v281, %v288
    %v290 = vrot.slane %v261, 4
    %v291 = vsel %vm106, %v290, %v249
    %v292 = vrot.slane %v249, 4
    %v293 = vsel %vm106, %v261, %v292
    %v295 = vunpack.c.l.s4 1934713408
    %v296 = vunpack.c.0.s8 %v295
    %v297 = vperm.slane %v291, %v296
    %v299 = vunpack.c.l.s4 1934713408
    %v300 = vunpack.c.0.s8 %v299
    %v301 = vperm.slane %v293, %v300
    %v302 = vrot.slane %v265, 4
    %v303 = vsel %vm106, %v302, %v253
    %v304 = vrot.slane %v253, 4
    %v305 = vsel %vm106, %v265, %v304
    %v307 = vunpack.c.l.s4 1934713408
    %v308 = vunpack.c.0.s8 %v307
    %v309 = vperm.slane %v303, %v308
    %v311 = vunpack.c.l.s4 1934713408
    %v312 = vunpack.c.0.s8 %v311
    %v313 = vperm.slane %v305, %v312
    %v314 = vrot.slane %v297, 4
    %v315 = vsel %vm106, %v314, %v273
    %v316 = vrot.slane %v273, 4
    %v317 = vsel %vm106, %v297, %v316
    %v318 = vrot.slane %v301, 4
    %v319 = vsel %vm106, %v318, %v277
    %v320 = vrot.slane %v277, 4
    %v321 = vsel %vm106, %v301, %v320
    %v322 = vrot.slane %v309, 4
    %v323 = vsel %vm106, %v322, %v285
    %v324 = vrot.slane %v285, 4
    %v325 = vsel %vm106, %v309, %v324
    %v326 = vrot.slane %v313, 4
    %v327 = vsel %vm106, %v326, %v289
    %v328 = vrot.slane %v289, 4
    %v329 = vsel %vm106, %v313, %v328
    %331 = vrot.lane.b32.xlu0 %v76, 124
    %v332 = vpop.permute.xlu0 %331
    %333 = vrot.lane.b32.xlu0 %v76, 120
    %v334 = vpop.permute.xlu0 %333
    %335 = vrot.lane.b32.xlu0 %v76, 116
    %v336 = vpop.permute.xlu0 %335
    %337 = vrot.lane.b32.xlu0 %v76, 112
    %v338 = vpop.permute.xlu0 %337
    %339 = vrot.lane.b32.xlu0 %v76, 108
    %v340 = vpop.permute.xlu0 %339
    %341 = vrot.lane.b32.xlu0 %v76, 104
    %v342 = vpop.permute.xlu0 %341
    %343 = vrot.lane.b32.xlu0 %v76, 100
    %v344 = vpop.permute.xlu0 %343
    %345 = vrot.lane.b32.xlu0 %v76, 96
    %v346 = vpop.permute.xlu0 %345
    %347 = vrot.lane.b32.xlu0 %v332, 96
    %v348 = vpop.permute.xlu0 %347
    %349 = vrot.lane.b32.xlu0 %v334, 96
    %v350 = vpop.permute.xlu0 %349
    %351 = vrot.lane.b32.xlu0 %v336, 96
    %v352 = vpop.permute.xlu0 %351
    %353 = vrot.lane.b32.xlu0 %v338, 96
    %v354 = vpop.permute.xlu0 %353
    %355 = vrot.lane.b32.xlu0 %v340, 96
    %v356 = vpop.permute.xlu0 %355
    %357 = vrot.lane.b32.xlu0 %v342, 96
    %v358 = vpop.permute.xlu0 %357
    %359 = vrot.lane.b32.xlu0 %v344, 96
    %v360 = vpop.permute.xlu0 %359
    %v369 = vrot.slane %v350, 4
    %v370 = vsel %vm106, %v369, %v346
    %v371 = vrot.slane %v346, 4
    %v372 = vsel %vm106, %v350, %v371
    %v374 = vunpack.c.l.s4 1983009808
    %v375 = vunpack.c.0.s8 %v374
    %v376 = vperm.slane %v370, %v375
    %v378 = vunpack.c.l.s4 1983009808
    %v379 = vunpack.c.0.s8 %v378
    %v380 = vperm.slane %v372, %v379
    %v381 = vrot.slane %v352, 4
    %v382 = vsel %vm106, %v381, %v348
    %v383 = vrot.slane %v348, 4
    %v384 = vsel %vm106, %v352, %v383
    %v386 = vunpack.c.l.s4 1983009808
    %v387 = vunpack.c.0.s8 %v386
    %v388 = vperm.slane %v382, %v387
    %v390 = vunpack.c.l.s4 1983009808
    %v391 = vunpack.c.0.s8 %v390
    %v392 = vperm.slane %v384, %v391
    %v393 = vrot.slane %v358, 4
    %v394 = vsel %vm106, %v393, %v354
    %v395 = vrot.slane %v354, 4
    %v396 = vsel %vm106, %v358, %v395
    %v398 = vunpack.c.l.s4 1983009808
    %v399 = vunpack.c.0.s8 %v398
    %v400 = vperm.slane %v394, %v399
    %v402 = vunpack.c.l.s4 1983009808
    %v403 = vunpack.c.0.s8 %v402
    %v404 = vperm.slane %v396, %v403
    %v405 = vrot.slane %v360, 4
    %v406 = vsel %vm106, %v405, %v356
    %v407 = vrot.slane %v356, 4
    %v408 = vsel %vm106, %v360, %v407
    %v410 = vunpack.c.l.s4 1983009808
    %v411 = vunpack.c.0.s8 %v410
    %v412 = vperm.slane %v406, %v411
    %v414 = vunpack.c.l.s4 1983009808
    %v415 = vunpack.c.0.s8 %v414
    %v416 = vperm.slane %v408, %v415
    %v417 = vrot.slane %v388, 4
    %v418 = vsel %vm106, %v417, %v376
    %v419 = vrot.slane %v376, 4
    %v420 = vsel %vm106, %v388, %v419
    %v422 = vunpack.c.l.s4 1934713408
    %v423 = vunpack.c.0.s8 %v422
    %v424 = vperm.slane %v418, %v423
    %v426 = vunpack.c.l.s4 1934713408
    %v427 = vunpack.c.0.s8 %v426
    %v428 = vperm.slane %v420, %v427
    %v429 = vrot.slane %v392, 4
    %v430 = vsel %vm106, %v429, %v380
    %v431 = vrot.slane %v380, 4
    %v432 = vsel %vm106, %v392, %v431
    %v434 = vunpack.c.l.s4 1934713408
    %v435 = vunpack.c.0.s8 %v434
    %v436 = vperm.slane %v430, %v435
    %v438 = vunpack.c.l.s4 1934713408
    %v439 = vunpack.c.0.s8 %v438
    %v440 = vperm.slane %v432, %v439
    %v441 = vrot.slane %v412, 4
    %v442 = vsel %vm106, %v441, %v400
    %v443 = vrot.slane %v400, 4
    %v444 = vsel %vm106, %v412, %v443
    %v446 = vunpack.c.l.s4 1934713408
    %v447 = vunpack.c.0.s8 %v446
    %v448 = vperm.slane %v442, %v447
    %v450 = vunpack.c.l.s4 1934713408
    %v451 = vunpack.c.0.s8 %v450
    %v452 = vperm.slane %v444, %v451
    %v453 = vrot.slane %v416, 4
    %v454 = vsel %vm106, %v453, %v404
    %v455 = vrot.slane %v404, 4
    %v456 = vsel %vm106, %v416, %v455
    %v458 = vunpack.c.l.s4 1934713408
    %v459 = vunpack.c.0.s8 %v458
    %v460 = vperm.slane %v454, %v459
    %v462 = vunpack.c.l.s4 1934713408
    %v463 = vunpack.c.0.s8 %v462
    %v464 = vperm.slane %v456, %v463
    %v465 = vrot.slane %v448, 4
    %v466 = vsel %vm106, %v465, %v424
    %v467 = vrot.slane %v424, 4
    %v468 = vsel %vm106, %v448, %v467
    %v469 = vrot.slane %v452, 4
    %v470 = vsel %vm106, %v469, %v428
    %v471 = vrot.slane %v428, 4
    %v472 = vsel %vm106, %v452, %v471
    %v473 = vrot.slane %v460, 4
    %v474 = vsel %vm106, %v473, %v436
    %v475 = vrot.slane %v436, 4
    %v476 = vsel %vm106, %v460, %v475
    %v477 = vrot.slane %v464, 4
    %v478 = vsel %vm106, %v477, %v440
    %v479 = vrot.slane %v440, 4
    %v480 = vsel %vm106, %v464, %v479
    %v481 = vrot.slane %v470, 4
    %v482 = vsel %vm106, %v481, %v466
    %v483 = vrot.slane %v466, 4
    %v484 = vsel %vm106, %v470, %v483
    %v486 = vunpack.c.l.s4 1983009808
    %v487 = vunpack.c.0.s8 %v486
    %v488 = vperm.slane %v482, %v487
    %v490 = vunpack.c.l.s4 1983009808
    %v491 = vunpack.c.0.s8 %v490
    %v492 = vperm.slane %v484, %v491
    %v493 = vrot.slane %v472, 4
    %v494 = vsel %vm106, %v493, %v468
    %v495 = vrot.slane %v468, 4
    %v496 = vsel %vm106, %v472, %v495
    %v498 = vunpack.c.l.s4 1983009808
    %v499 = vunpack.c.0.s8 %v498
    %v500 = vperm.slane %v494, %v499
    %v502 = vunpack.c.l.s4 1983009808
    %v503 = vunpack.c.0.s8 %v502
    %v504 = vperm.slane %v496, %v503
    %v505 = vrot.slane %v478, 4
    %v506 = vsel %vm106, %v505, %v474
    %v507 = vrot.slane %v474, 4
    %v508 = vsel %vm106, %v478, %v507
    %v510 = vunpack.c.l.s4 1983009808
    %v511 = vunpack.c.0.s8 %v510
    %v512 = vperm.slane %v506, %v511
    %v514 = vunpack.c.l.s4 1983009808
    %v515 = vunpack.c.0.s8 %v514
    %v516 = vperm.slane %v508, %v515
    %v517 = vrot.slane %v480, 4
    %v518 = vsel %vm106, %v517, %v476
    %v519 = vrot.slane %v476, 4
    %v520 = vsel %vm106, %v480, %v519
    %v522 = vunpack.c.l.s4 1983009808
    %v523 = vunpack.c.0.s8 %v522
    %v524 = vperm.slane %v518, %v523
    %v526 = vunpack.c.l.s4 1983009808
    %v527 = vunpack.c.0.s8 %v526
    %v528 = vperm.slane %v520, %v527
    %v529 = vrot.slane %v500, 4
    %v530 = vsel %vm106, %v529, %v488
    %v531 = vrot.slane %v488, 4
    %v532 = vsel %vm106, %v500, %v531
    %v534 = vunpack.c.l.s4 1934713408
    %v535 = vunpack.c.0.s8 %v534
    %v536 = vperm.slane %v530, %v535
    %v538 = vunpack.c.l.s4 1934713408
    %v539 = vunpack.c.0.s8 %v538
    %v540 = vperm.slane %v532, %v539
    %v541 = vrot.slane %v504, 4
    %v542 = vsel %vm106, %v541, %v492
    %v543 = vrot.slane %v492, 4
    %v544 = vsel %vm106, %v504, %v543
    %v546 = vunpack.c.l.s4 1934713408
    %v547 = vunpack.c.0.s8 %v546
    %v548 = vperm.slane %v542, %v547
    %v550 = vunpack.c.l.s4 1934713408
    %v551 = vunpack.c.0.s8 %v550
    %v552 = vperm.slane %v544, %v551
    %v553 = vrot.slane %v524, 4
    %v554 = vsel %vm106, %v553, %v512
    %v555 = vrot.slane %v512, 4
    %v556 = vsel %vm106, %v524, %v555
    %v558 = vunpack.c.l.s4 1934713408
    %v559 = vunpack.c.0.s8 %v558
    %v560 = vperm.slane %v554, %v559
    %v562 = vunpack.c.l.s4 1934713408
    %v563 = vunpack.c.0.s8 %v562
    %v564 = vperm.slane %v556, %v563
    %v565 = vrot.slane %v528, 4
    %v566 = vsel %vm106, %v565, %v516
    %v567 = vrot.slane %v516, 4
    %v568 = vsel %vm106, %v528, %v567
    %v570 = vunpack.c.l.s4 1934713408
    %v571 = vunpack.c.0.s8 %v570
    %v572 = vperm.slane %v566, %v571
    %v574 = vunpack.c.l.s4 1934713408
    %v575 = vunpack.c.0.s8 %v574
    %v576 = vperm.slane %v568, %v575
    %v577 = vrot.slane %v560, 4
    %v578 = vsel %vm106, %v577, %v536
    %v579 = vrot.slane %v536, 4
    %v580 = vsel %vm106, %v560, %v579
    %v581 = vrot.slane %v564, 4
    %v582 = vsel %vm106, %v581, %v540
    %v583 = vrot.slane %v540, 4
    %v584 = vsel %vm106, %v564, %v583
    %v585 = vrot.slane %v572, 4
    %v586 = vsel %vm106, %v585, %v548
    %v587 = vrot.slane %v548, 4
    %v588 = vsel %vm106, %v572, %v587
    %v589 = vrot.slane %v576, 4
    %v590 = vsel %vm106, %v589, %v552
    %v591 = vrot.slane %v552, 4
    %v592 = vsel %vm106, %v576, %v591
    %594 = vrot.lane.b32.xlu0 %v82, 124
    %v595 = vpop.permute.xlu0 %594
    %596 = vrot.lane.b32.xlu0 %v82, 120
    %v597 = vpop.permute.xlu0 %596
    %598 = vrot.lane.b32.xlu0 %v82, 116
    %v599 = vpop.permute.xlu0 %598
    %600 = vrot.lane.b32.xlu0 %v82, 112
    %v601 = vpop.permute.xlu0 %600
    %602 = vrot.lane.b32.xlu0 %v82, 108
    %v603 = vpop.permute.xlu0 %602
    %604 = vrot.lane.b32.xlu0 %v82, 104
    %v605 = vpop.permute.xlu0 %604
    %606 = vrot.lane.b32.xlu0 %v82, 100
    %v607 = vpop.permute.xlu0 %606
    %608 = vrot.lane.b32.xlu0 %v82, 64
    %v609 = vpop.permute.xlu0 %608
    %610 = vrot.lane.b32.xlu0 %v595, 64
    %v611 = vpop.permute.xlu0 %610
    %612 = vrot.lane.b32.xlu0 %v597, 64
    %v613 = vpop.permute.xlu0 %612
    %614 = vrot.lane.b32.xlu0 %v599, 64
    %v615 = vpop.permute.xlu0 %614
    %616 = vrot.lane.b32.xlu0 %v601, 64
    %v617 = vpop.permute.xlu0 %616
    %618 = vrot.lane.b32.xlu0 %v603, 64
    %v619 = vpop.permute.xlu0 %618
    %620 = vrot.lane.b32.xlu0 %v605, 64
    %v621 = vpop.permute.xlu0 %620
    %622 = vrot.lane.b32.xlu0 %v607, 64
    %v623 = vpop.permute.xlu0 %622
    %v632 = vrot.slane %v613, 4
    %v633 = vsel %vm106, %v632, %v609
    %v634 = vrot.slane %v609, 4
    %v635 = vsel %vm106, %v613, %v634
    %v637 = vunpack.c.l.s4 1983009808
    %v638 = vunpack.c.0.s8 %v637
    %v639 = vperm.slane %v633, %v638
    %v641 = vunpack.c.l.s4 1983009808
    %v642 = vunpack.c.0.s8 %v641
    %v643 = vperm.slane %v635, %v642
    %v644 = vrot.slane %v615, 4
    %v645 = vsel %vm106, %v644, %v611
    %v646 = vrot.slane %v611, 4
    %v647 = vsel %vm106, %v615, %v646
    %v649 = vunpack.c.l.s4 1983009808
    %v650 = vunpack.c.0.s8 %v649
    %v651 = vperm.slane %v645, %v650
    %v653 = vunpack.c.l.s4 1983009808
    %v654 = vunpack.c.0.s8 %v653
    %v655 = vperm.slane %v647, %v654
    %v656 = vrot.slane %v621, 4
    %v657 = vsel %vm106, %v656, %v617
    %v658 = vrot.slane %v617, 4
    %v659 = vsel %vm106, %v621, %v658
    %v661 = vunpack.c.l.s4 1983009808
    %v662 = vunpack.c.0.s8 %v661
    %v663 = vperm.slane %v657, %v662
    %v665 = vunpack.c.l.s4 1983009808
    %v666 = vunpack.c.0.s8 %v665
    %v667 = vperm.slane %v659, %v666
    %v668 = vrot.slane %v623, 4
    %v669 = vsel %vm106, %v668, %v619
    %v670 = vrot.slane %v619, 4
    %v671 = vsel %vm106, %v623, %v670
    %v673 = vunpack.c.l.s4 1983009808
    %v674 = vunpack.c.0.s8 %v673
    %v675 = vperm.slane %v669, %v674
    %v677 = vunpack.c.l.s4 1983009808
    %v678 = vunpack.c.0.s8 %v677
    %v679 = vperm.slane %v671, %v678
    %v680 = vrot.slane %v651, 4
    %v681 = vsel %vm106, %v680, %v639
    %v682 = vrot.slane %v639, 4
    %v683 = vsel %vm106, %v651, %v682
    %v685 = vunpack.c.l.s4 1934713408
    %v686 = vunpack.c.0.s8 %v685
    %v687 = vperm.slane %v681, %v686
    %v689 = vunpack.c.l.s4 1934713408
    %v690 = vunpack.c.0.s8 %v689
    %v691 = vperm.slane %v683, %v690
    %v692 = vrot.slane %v655, 4
    %v693 = vsel %vm106, %v692, %v643
    %v694 = vrot.slane %v643, 4
    %v695 = vsel %vm106, %v655, %v694
    %v697 = vunpack.c.l.s4 1934713408
    %v698 = vunpack.c.0.s8 %v697
    %v699 = vperm.slane %v693, %v698
    %v701 = vunpack.c.l.s4 1934713408
    %v702 = vunpack.c.0.s8 %v701
    %v703 = vperm.slane %v695, %v702
    %v704 = vrot.slane %v675, 4
    %v705 = vsel %vm106, %v704, %v663
    %v706 = vrot.slane %v663, 4
    %v707 = vsel %vm106, %v675, %v706
    %v709 = vunpack.c.l.s4 1934713408
    %v710 = vunpack.c.0.s8 %v709
    %v711 = vperm.slane %v705, %v710
    %v713 = vunpack.c.l.s4 1934713408
    %v714 = vunpack.c.0.s8 %v713
    %v715 = vperm.slane %v707, %v714
    %v716 = vrot.slane %v679, 4
    %v717 = vsel %vm106, %v716, %v667
    %v718 = vrot.slane %v667, 4
    %v719 = vsel %vm106, %v679, %v718
    %v721 = vunpack.c.l.s4 1934713408
    %v722 = vunpack.c.0.s8 %v721
    %v723 = vperm.slane %v717, %v722
    %v725 = vunpack.c.l.s4 1934713408
    %v726 = vunpack.c.0.s8 %v725
    %v727 = vperm.slane %v719, %v726
    %v728 = vrot.slane %v711, 4
    %v729 = vsel %vm106, %v728, %v687
    %v730 = vrot.slane %v687, 4
    %v731 = vsel %vm106, %v711, %v730
    %v732 = vrot.slane %v715, 4
    %v733 = vsel %vm106, %v732, %v691
    %v734 = vrot.slane %v691, 4
    %v735 = vsel %vm106, %v715, %v734
    %v736 = vrot.slane %v723, 4
    %v737 = vsel %vm106, %v736, %v699
    %v738 = vrot.slane %v699, 4
    %v739 = vsel %vm106, %v723, %v738
    %v740 = vrot.slane %v727, 4
    %v741 = vsel %vm106, %v740, %v703
    %v742 = vrot.slane %v703, 4
    %v743 = vsel %vm106, %v727, %v742
    %v744 = vrot.slane %v733, 4
    %v745 = vsel %vm106, %v744, %v729
    %v746 = vrot.slane %v729, 4
    %v747 = vsel %vm106, %v733, %v746
    %v749 = vunpack.c.l.s4 1983009808
    %v750 = vunpack.c.0.s8 %v749
    %v751 = vperm.slane %v745, %v750
    %v753 = vunpack.c.l.s4 1983009808
    %v754 = vunpack.c.0.s8 %v753
    %v755 = vperm.slane %v747, %v754
    %v756 = vrot.slane %v735, 4
    %v757 = vsel %vm106, %v756, %v731
    %v758 = vrot.slane %v731, 4
    %v759 = vsel %vm106, %v735, %v758
    %v761 = vunpack.c.l.s4 1983009808
    %v762 = vunpack.c.0.s8 %v761
    %v763 = vperm.slane %v757, %v762
    %v765 = vunpack.c.l.s4 1983009808
    %v766 = vunpack.c.0.s8 %v765
    %v767 = vperm.slane %v759, %v766
    %v768 = vrot.slane %v741, 4
    %v769 = vsel %vm106, %v768, %v737
    %v770 = vrot.slane %v737, 4
    %v771 = vsel %vm106, %v741, %v770
    %v773 = vunpack.c.l.s4 1983009808
    %v774 = vunpack.c.0.s8 %v773
    %v775 = vperm.slane %v769, %v774
    %v777 = vunpack.c.l.s4 1983009808
    %v778 = vunpack.c.0.s8 %v777
    %v779 = vperm.slane %v771, %v778
    %v780 = vrot.slane %v743, 4
    %v781 = vsel %vm106, %v780, %v739
    %v782 = vrot.slane %v739, 4
    %v783 = vsel %vm106, %v743, %v782
    %v785 = vunpack.c.l.s4 1983009808
    %v786 = vunpack.c.0.s8 %v785
    %v787 = vperm.slane %v781, %v786
    %v789 = vunpack.c.l.s4 1983009808
    %v790 = vunpack.c.0.s8 %v789
    %v791 = vperm.slane %v783, %v790
    %v792 = vrot.slane %v763, 4
    %v793 = vsel %vm106, %v792, %v751
    %v794 = vrot.slane %v751, 4
    %v795 = vsel %vm106, %v763, %v794
    %v797 = vunpack.c.l.s4 1934713408
    %v798 = vunpack.c.0.s8 %v797
    %v799 = vperm.slane %v793, %v798
    %v801 = vunpack.c.l.s4 1934713408
    %v802 = vunpack.c.0.s8 %v801
    %v803 = vperm.slane %v795, %v802
    %v804 = vrot.slane %v767, 4
    %v805 = vsel %vm106, %v804, %v755
    %v806 = vrot.slane %v755, 4
    %v807 = vsel %vm106, %v767, %v806
    %v809 = vunpack.c.l.s4 1934713408
    %v810 = vunpack.c.0.s8 %v809
    %v811 = vperm.slane %v805, %v810
    %v813 = vunpack.c.l.s4 1934713408
    %v814 = vunpack.c.0.s8 %v813
    %v815 = vperm.slane %v807, %v814
    %v816 = vrot.slane %v787, 4
    %v817 = vsel %vm106, %v816, %v775
    %v818 = vrot.slane %v775, 4
    %v819 = vsel %vm106, %v787, %v818
    %v821 = vunpack.c.l.s4 1934713408
    %v822 = vunpack.c.0.s8 %v821
    %v823 = vperm.slane %v817, %v822
    %v825 = vunpack.c.l.s4 1934713408
    %v826 = vunpack.c.0.s8 %v825
    %v827 = vperm.slane %v819, %v826
    %v828 = vrot.slane %v791, 4
    %v829 = vsel %vm106, %v828, %v779
    %v830 = vrot.slane %v779, 4
    %v831 = vsel %vm106, %v791, %v830
    %v833 = vunpack.c.l.s4 1934713408
    %v834 = vunpack.c.0.s8 %v833
    %v835 = vperm.slane %v829, %v834
    %v837 = vunpack.c.l.s4 1934713408
    %v838 = vunpack.c.0.s8 %v837
    %v839 = vperm.slane %v831, %v838
    %v840 = vrot.slane %v823, 4
    %v841 = vsel %vm106, %v840, %v799
    %v842 = vrot.slane %v799, 4
    %v843 = vsel %vm106, %v823, %v842
    %v844 = vrot.slane %v827, 4
    %v845 = vsel %vm106, %v844, %v803
    %v846 = vrot.slane %v803, 4
    %v847 = vsel %vm106, %v827, %v846
    %v848 = vrot.slane %v835, 4
    %v849 = vsel %vm106, %v848, %v811
    %v850 = vrot.slane %v811, 4
    %v851 = vsel %vm106, %v835, %v850
    %v852 = vrot.slane %v839, 4
    %v853 = vsel %vm106, %v852, %v815
    %v854 = vrot.slane %v815, 4
    %v855 = vsel %vm106, %v839, %v854
    %vm856 = vcmask 31744
    %v858 = vsel %vm856, %v315, 0
    %v861 = vsel %vm856, %v578, 0
    %863 = vmatpush.xpose.msra.mxu0 0.0
    %864 = vmatpush.xpose.msra.mxu0 0.0
    %865 = vmatpush.xpose.msra.mxu0 0.0
    %866 = vmatpush.xpose.msra.mxu0 0.0
    %867 = vmatpush.xpose.msra.mxu0 0.0
    %868 = vmatpush.xpose.msra.mxu0 0.0
    %869 = vmatpush.xpose.msra.mxu0 0.0
    %870 = vmatpush.xpose.msra.mxu0 0.0
    %871 = vmatpush.xpose.msra.mxu0 0.0
    %872 = vmatpush.xpose.msra.mxu0 0.0
    %873 = vmatpush.xpose.msra.mxu0 0.0
    %874 = vmatpush.xpose.msra.mxu0 0.0
    %875 = vmatpush.xpose.msra.mxu0 0.0
    %876 = vmatpush.xpose.msra.mxu0 0.0
    %877 = vmatpush.xpose.msra.mxu0 0.0
    %878 = vmatpush.xpose.msra.mxu0 %v861
    %879 = vmatmul.f32.gmra.mxu0 %v858
    %v880 = vpop.f32.mrf.mxu0
    %v881 = vadd.f32 0.0, %v880
    %882 = vdwg.mxu0
    %v884 = vsel %vm856, %v317, 0
    %v887 = vsel %vm856, %v580, 0
    %889 = vmatpush.xpose.msra.mxu0 0.0
    %890 = vmatpush.xpose.msra.mxu0 0.0
    %891 = vmatpush.xpose.msra.mxu0 0.0
    %892 = vmatpush.xpose.msra.mxu0 0.0
    %893 = vmatpush.xpose.msra.mxu0 0.0
    %894 = vmatpush.xpose.msra.mxu0 0.0
    %895 = vmatpush.xpose.msra.mxu0 0.0
    %896 = vmatpush.xpose.msra.mxu0 0.0
    %897 = vmatpush.xpose.msra.mxu0 0.0
    %898 = vmatpush.xpose.msra.mxu0 0.0
    %899 = vmatpush.xpose.msra.mxu0 0.0
    %900 = vmatpush.xpose.msra.mxu0 0.0
    %901 = vmatpush.xpose.msra.mxu0 0.0
    %902 = vmatpush.xpose.msra.mxu0 0.0
    %903 = vmatpush.xpose.msra.mxu0 0.0
    %904 = vmatpush.xpose.msra.mxu0 %v887
    %905 = vmatmul.f32.gmra.mxu0 %v884
    %v906 = vpop.f32.mrf.mxu0
    %v907 = vadd.f32 0.0, %v906
    %908 = vdwg.mxu0
    %v910 = vsel %vm856, %v319, 0
    %v913 = vsel %vm856, %v582, 0
    %915 = vmatpush.xpose.msra.mxu0 0.0
    %916 = vmatpush.xpose.msra.mxu0 0.0
    %917 = vmatpush.xpose.msra.mxu0 0.0
    %918 = vmatpush.xpose.msra.mxu0 0.0
    %919 = vmatpush.xpose.msra.mxu0 0.0
    %920 = vmatpush.xpose.msra.mxu0 0.0
    %921 = vmatpush.xpose.msra.mxu0 0.0
    %922 = vmatpush.xpose.msra.mxu0 0.0
    %923 = vmatpush.xpose.msra.mxu0 0.0
    %924 = vmatpush.xpose.msra.mxu0 0.0
    %925 = vmatpush.xpose.msra.mxu0 0.0
    %926 = vmatpush.xpose.msra.mxu0 0.0
    %927 = vmatpush.xpose.msra.mxu0 0.0
    %928 = vmatpush.xpose.msra.mxu0 0.0
    %929 = vmatpush.xpose.msra.mxu0 0.0
    %930 = vmatpush.xpose.msra.mxu0 %v913
    %931 = vmatmul.f32.gmra.mxu0 %v910
    %v932 = vpop.f32.mrf.mxu0
    %v933 = vadd.f32 0.0, %v932
    %934 = vdwg.mxu0
    %v936 = vsel %vm856, %v321, 0
    %v939 = vsel %vm856, %v584, 0
    %941 = vmatpush.xpose.msra.mxu0 0.0
    %942 = vmatpush.xpose.msra.mxu0 0.0
    %943 = vmatpush.xpose.msra.mxu0 0.0
    %944 = vmatpush.xpose.msra.mxu0 0.0
    %945 = vmatpush.xpose.msra.mxu0 0.0
    %946 = vmatpush.xpose.msra.mxu0 0.0
    %947 = vmatpush.xpose.msra.mxu0 0.0
    %948 = vmatpush.xpose.msra.mxu0 0.0
    %949 = vmatpush.xpose.msra.mxu0 0.0
    %950 = vmatpush.xpose.msra.mxu0 0.0
    %951 = vmatpush.xpose.msra.mxu0 0.0
    %952 = vmatpush.xpose.msra.mxu0 0.0
    %953 = vmatpush.xpose.msra.mxu0 0.0
    %954 = vmatpush.xpose.msra.mxu0 0.0
    %955 = vmatpush.xpose.msra.mxu0 0.0
    %956 = vmatpush.xpose.msra.mxu0 %v939
    %957 = vmatmul.f32.gmra.mxu0 %v936
    %v958 = vpop.f32.mrf.mxu0
    %v959 = vadd.f32 0.0, %v958
    %960 = vdwg.mxu0
    %v962 = vsel %vm856, %v323, 0
    %v965 = vsel %vm856, %v586, 0
    %967 = vmatpush.xpose.msra.mxu0 0.0
    %968 = vmatpush.xpose.msra.mxu0 0.0
    %969 = vmatpush.xpose.msra.mxu0 0.0
    %970 = vmatpush.xpose.msra.mxu0 0.0
    %971 = vmatpush.xpose.msra.mxu0 0.0
    %972 = vmatpush.xpose.msra.mxu0 0.0
    %973 = vmatpush.xpose.msra.mxu0 0.0
    %974 = vmatpush.xpose.msra.mxu0 0.0
    %975 = vmatpush.xpose.msra.mxu0 0.0
    %976 = vmatpush.xpose.msra.mxu0 0.0
    %977 = vmatpush.xpose.msra.mxu0 0.0
    %978 = vmatpush.xpose.msra.mxu0 0.0
    %979 = vmatpush.xpose.msra.mxu0 0.0
    %980 = vmatpush.xpose.msra.mxu0 0.0
    %981 = vmatpush.xpose.msra.mxu0 0.0
    %982 = vmatpush.xpose.msra.mxu0 %v965
    %983 = vmatmul.f32.gmra.mxu0 %v962
    %v984 = vpop.f32.mrf.mxu0
    %v985 = vadd.f32 0.0, %v984
    %986 = vdwg.mxu0
    %v988 = vsel %vm856, %v325, 0
    %v991 = vsel %vm856, %v588, 0
    %993 = vmatpush.xpose.msra.mxu0 0.0
    %994 = vmatpush.xpose.msra.mxu0 0.0
    %995 = vmatpush.xpose.msra.mxu0 0.0
    %996 = vmatpush.xpose.msra.mxu0 0.0
    %997 = vmatpush.xpose.msra.mxu0 0.0
    %998 = vmatpush.xpose.msra.mxu0 0.0
    %999 = vmatpush.xpose.msra.mxu0 0.0
    %1000 = vmatpush.xpose.msra.mxu0 0.0
    %1001 = vmatpush.xpose.msra.mxu0 0.0
    %1002 = vmatpush.xpose.msra.mxu0 0.0
    %1003 = vmatpush.xpose.msra.mxu0 0.0
    %1004 = vmatpush.xpose.msra.mxu0 0.0
    %1005 = vmatpush.xpose.msra.mxu0 0.0
    %1006 = vmatpush.xpose.msra.mxu0 0.0
    %1007 = vmatpush.xpose.msra.mxu0 0.0
    %1008 = vmatpush.xpose.msra.mxu0 %v991
    %1009 = vmatmul.f32.gmra.mxu0 %v988
    %v1010 = vpop.f32.mrf.mxu0
    %v1011 = vadd.f32 0.0, %v1010
    %1012 = vdwg.mxu0
    %v1014 = vsel %vm856, %v327, 0
    %v1017 = vsel %vm856, %v590, 0
    %1019 = vmatpush.xpose.msra.mxu0 0.0
    %1020 = vmatpush.xpose.msra.mxu0 0.0
    %1021 = vmatpush.xpose.msra.mxu0 0.0
    %1022 = vmatpush.xpose.msra.mxu0 0.0
    %1023 = vmatpush.xpose.msra.mxu0 0.0
    %1024 = vmatpush.xpose.msra.mxu0 0.0
    %1025 = vmatpush.xpose.msra.mxu0 0.0
    %1026 = vmatpush.xpose.msra.mxu0 0.0
    %1027 = vmatpush.xpose.msra.mxu0 0.0
    %1028 = vmatpush.xpose.msra.mxu0 0.0
    %1029 = vmatpush.xpose.msra.mxu0 0.0
    %1030 = vmatpush.xpose.msra.mxu0 0.0
    %1031 = vmatpush.xpose.msra.mxu0 0.0
    %1032 = vmatpush.xpose.msra.mxu0 0.0
    %1033 = vmatpush.xpose.msra.mxu0 0.0
    %1034 = vmatpush.xpose.msra.mxu0 %v1017
    %1035 = vmatmul.f32.gmra.mxu0 %v1014
    %v1036 = vpop.f32.mrf.mxu0
    %v1037 = vadd.f32 0.0, %v1036
    %1038 = vdwg.mxu0
    %v1040 = vsel %vm856, %v329, 0
    %v1043 = vsel %vm856, %v592, 0
    %1045 = vmatpush.xpose.msra.mxu0 0.0
    %1046 = vmatpush.xpose.msra.mxu0 0.0
    %1047 = vmatpush.xpose.msra.mxu0 0.0
    %1048 = vmatpush.xpose.msra.mxu0 0.0
    %1049 = vmatpush.xpose.msra.mxu0 0.0
    %1050 = vmatpush.xpose.msra.mxu0 0.0
    %1051 = vmatpush.xpose.msra.mxu0 0.0
    %1052 = vmatpush.xpose.msra.mxu0 0.0
    %1053 = vmatpush.xpose.msra.mxu0 0.0
    %1054 = vmatpush.xpose.msra.mxu0 0.0
    %1055 = vmatpush.xpose.msra.mxu0 0.0
    %1056 = vmatpush.xpose.msra.mxu0 0.0
    %1057 = vmatpush.xpose.msra.mxu0 0.0
    %1058 = vmatpush.xpose.msra.mxu0 0.0
    %1059 = vmatpush.xpose.msra.mxu0 0.0
    %1060 = vmatpush.xpose.msra.mxu0 %v1043
    %1061 = vmatmul.f32.gmra.mxu0 %v1040
    %v1062 = vpop.f32.mrf.mxu0
    %v1063 = vadd.f32 0.0, %v1062
    %1064 = vdwg.mxu0
    %vm1065 = vcmask 64512
    %v1066 = vsel %vm1065, %v881, -inf
    %1067 = vmax.xlane.f32.xlu0 %v1066
    %v1068 = vpop.xlane.xlu0 %1067
    %v1069 = vsel %vm1065, %v907, -inf
    %1070 = vmax.xlane.f32.xlu0 %v1069
    %v1071 = vpop.xlane.xlu0 %1070
    %v1072 = vsel %vm1065, %v933, -inf
    %1073 = vmax.xlane.f32.xlu0 %v1072
    %v1074 = vpop.xlane.xlu0 %1073
    %v1075 = vsel %vm1065, %v959, -inf
    %1076 = vmax.xlane.f32.xlu0 %v1075
    %v1077 = vpop.xlane.xlu0 %1076
    %v1078 = vsel %vm1065, %v985, -inf
    %1079 = vmax.xlane.f32.xlu0 %v1078
    %v1080 = vpop.xlane.xlu0 %1079
    %v1081 = vsel %vm1065, %v1011, -inf
    %1082 = vmax.xlane.f32.xlu0 %v1081
    %v1083 = vpop.xlane.xlu0 %1082
    %v1084 = vsel %vm1065, %v1037, -inf
    %1085 = vmax.xlane.f32.xlu0 %v1084
    %v1086 = vpop.xlane.xlu0 %1085
    %v1087 = vsel %vm1065, %v1063, -inf
    %1088 = vmax.xlane.f32.xlu0 %v1087
    %v1089 = vpop.xlane.xlu0 %1088
    %v1090 = vsub.f32 %v881, %v1068
    %v1091 = vsub.f32 %v907, %v1071
    %v1092 = vsub.f32 %v933, %v1074
    %v1093 = vsub.f32 %v959, %v1077
    %v1094 = vsub.f32 %v985, %v1080
    %v1095 = vsub.f32 %v1011, %v1083
    %v1096 = vsub.f32 %v1037, %v1086
    %v1097 = vsub.f32 %v1063, %v1089
    %v1098 = vmul.f32 %v1090, 1.442695
    %v1099 = vpow.pop %v1098
    %v1100 = vmul.f32 %v1091, 1.442695
    %v1101 = vpow.pop %v1100
    %v1102 = vmul.f32 %v1092, 1.442695
    %v1103 = vpow.pop %v1102
    %v1104 = vmul.f32 %v1093, 1.442695
    %v1105 = vpow.pop %v1104
    %v1106 = vmul.f32 %v1094, 1.442695
    %v1107 = vpow.pop %v1106
    %v1108 = vmul.f32 %v1095, 1.442695
    %v1109 = vpow.pop %v1108
    %v1110 = vmul.f32 %v1096, 1.442695
    %v1111 = vpow.pop %v1110
    %v1112 = vmul.f32 %v1097, 1.442695
    %v1113 = vpow.pop %v1112
    %v1114 = vsel %vm1065, %v1099, 0.0
    %1115 = vadd.xlane.f32.xlu0 %v1114
    %v1116 = vpop.xlane.xlu0 %1115
    %v1117 = vsel %vm1065, %v1101, 0.0
    %1118 = vadd.xlane.f32.xlu0 %v1117
    %v1119 = vpop.xlane.xlu0 %1118
    %v1120 = vsel %vm1065, %v1103, 0.0
    %1121 = vadd.xlane.f32.xlu0 %v1120
    %v1122 = vpop.xlane.xlu0 %1121
    %v1123 = vsel %vm1065, %v1105, 0.0
    %1124 = vadd.xlane.f32.xlu0 %v1123
    %v1125 = vpop.xlane.xlu0 %1124
    %v1126 = vsel %vm1065, %v1107, 0.0
    %1127 = vadd.xlane.f32.xlu0 %v1126
    %v1128 = vpop.xlane.xlu0 %1127
    %v1129 = vsel %vm1065, %v1109, 0.0
    %1130 = vadd.xlane.f32.xlu0 %v1129
    %v1131 = vpop.xlane.xlu0 %1130
    %v1132 = vsel %vm1065, %v1111, 0.0
    %1133 = vadd.xlane.f32.xlu0 %v1132
    %v1134 = vpop.xlane.xlu0 %1133
    %v1135 = vsel %vm1065, %v1113, 0.0
    %1136 = vadd.xlane.f32.xlu0 %v1135
    %v1137 = vpop.xlane.xlu0 %1136
    %v1138 = vrcp.pop %v1116
    %v1139 = vrcp.pop %v1119
    %v1140 = vrcp.pop %v1122
    %v1141 = vrcp.pop %v1125
    %v1142 = vrcp.pop %v1128
    %v1143 = vrcp.pop %v1131
    %v1144 = vrcp.pop %v1134
    %v1145 = vrcp.pop %v1137
    %v1146 = vmul.f32 %v1099, %v1138
    %v1147 = vmul.f32 %v1101, %v1139
    %v1148 = vmul.f32 %v1103, %v1140
    %v1149 = vmul.f32 %v1105, %v1141
    %v1150 = vmul.f32 %v1107, %v1142
    %v1151 = vmul.f32 %v1109, %v1143
    %v1152 = vmul.f32 %v1111, %v1144
    %v1153 = vmul.f32 %v1113, %v1145
    %v1155 = vsel %vm1065, %v1146, 0
    %1157 = vmatpush.msra.mxu0 0.0
    %1158 = vmatpush.msra.mxu0 0.0
    %1159 = vmatpush.msra.mxu0 0.0
    %1160 = vmatpush.msra.mxu0 0.0
    %1161 = vmatpush.msra.mxu0 0.0
    %1162 = vmatpush.msra.mxu0 0.0
    %1163 = vmatpush.msra.mxu0 0.0
    %1164 = vmatpush.msra.mxu0 0.0
    %1165 = vmatpush.msra.mxu0 0.0
    %1166 = vmatpush.msra.mxu0 0.0
    %1167 = vmatpush.msra.mxu0 0.0
    %1168 = vmatpush.msra.mxu0 0.0
    %1169 = vmatpush.msra.mxu0 0.0
    %1170 = vmatpush.msra.mxu0 0.0
    %1171 = vmatpush.msra.mxu0 0.0
    %1172 = vmatpush.msra.mxu0 %v841
    %1173 = vmatmul.f32.gmra.mxu0 %v1155
    %v1174 = vpop.f32.mrf.mxu0
    %v1175 = vadd.f32 0.0, %v1174
    %1176 = vdwg.mxu0
    %v1178 = vsel %vm1065, %v1147, 0
    %1180 = vmatpush.msra.mxu0 0.0
    %1181 = vmatpush.msra.mxu0 0.0
    %1182 = vmatpush.msra.mxu0 0.0
    %1183 = vmatpush.msra.mxu0 0.0
    %1184 = vmatpush.msra.mxu0 0.0
    %1185 = vmatpush.msra.mxu0 0.0
    %1186 = vmatpush.msra.mxu0 0.0
    %1187 = vmatpush.msra.mxu0 0.0
    %1188 = vmatpush.msra.mxu0 0.0
    %1189 = vmatpush.msra.mxu0 0.0
    %1190 = vmatpush.msra.mxu0 0.0
    %1191 = vmatpush.msra.mxu0 0.0
    %1192 = vmatpush.msra.mxu0 0.0
    %1193 = vmatpush.msra.mxu0 0.0
    %1194 = vmatpush.msra.mxu0 0.0
    %1195 = vmatpush.msra.mxu0 %v843
    %1196 = vmatmul.f32.gmra.mxu0 %v1178
    %v1197 = vpop.f32.mrf.mxu0
    %v1198 = vadd.f32 0.0, %v1197
    %1199 = vdwg.mxu0
    %v1201 = vsel %vm1065, %v1148, 0
    %1203 = vmatpush.msra.mxu0 0.0
    %1204 = vmatpush.msra.mxu0 0.0
    %1205 = vmatpush.msra.mxu0 0.0
    %1206 = vmatpush.msra.mxu0 0.0
    %1207 = vmatpush.msra.mxu0 0.0
    %1208 = vmatpush.msra.mxu0 0.0
    %1209 = vmatpush.msra.mxu0 0.0
    %1210 = vmatpush.msra.mxu0 0.0
    %1211 = vmatpush.msra.mxu0 0.0
    %1212 = vmatpush.msra.mxu0 0.0
    %1213 = vmatpush.msra.mxu0 0.0
    %1214 = vmatpush.msra.mxu0 0.0
    %1215 = vmatpush.msra.mxu0 0.0
    %1216 = vmatpush.msra.mxu0 0.0
    %1217 = vmatpush.msra.mxu0 0.0
    %1218 = vmatpush.msra.mxu0 %v845
    %1219 = vmatmul.f32.gmra.mxu0 %v1201
    %v1220 = vpop.f32.mrf.mxu0
    %v1221 = vadd.f32 0.0, %v1220
    %1222 = vdwg.mxu0
    %v1224 = vsel %vm1065, %v1149, 0
    %1226 = vmatpush.msra.mxu0 0.0
    %1227 = vmatpush.msra.mxu0 0.0
    %1228 = vmatpush.msra.mxu0 0.0
    %1229 = vmatpush.msra.mxu0 0.0
    %1230 = vmatpush.msra.mxu0 0.0
    %1231 = vmatpush.msra.mxu0 0.0
    %1232 = vmatpush.msra.mxu0 0.0
    %1233 = vmatpush.msra.mxu0 0.0
    %1234 = vmatpush.msra.mxu0 0.0
    %1235 = vmatpush.msra.mxu0 0.0
    %1236 = vmatpush.msra.mxu0 0.0
    %1237 = vmatpush.msra.mxu0 0.0
    %1238 = vmatpush.msra.mxu0 0.0
    %1239 = vmatpush.msra.mxu0 0.0
    %1240 = vmatpush.msra.mxu0 0.0
    %1241 = vmatpush.msra.mxu0 %v847
    %1242 = vmatmul.f32.gmra.mxu0 %v1224
    %v1243 = vpop.f32.mrf.mxu0
    %v1244 = vadd.f32 0.0, %v1243
    %1245 = vdwg.mxu0
    %v1247 = vsel %vm1065, %v1150, 0
    %1249 = vmatpush.msra.mxu0 0.0
    %1250 = vmatpush.msra.mxu0 0.0
    %1251 = vmatpush.msra.mxu0 0.0
    %1252 = vmatpush.msra.mxu0 0.0
    %1253 = vmatpush.msra.mxu0 0.0
    %1254 = vmatpush.msra.mxu0 0.0
    %1255 = vmatpush.msra.mxu0 0.0
    %1256 = vmatpush.msra.mxu0 0.0
    %1257 = vmatpush.msra.mxu0 0.0
    %1258 = vmatpush.msra.mxu0 0.0
    %1259 = vmatpush.msra.mxu0 0.0
    %1260 = vmatpush.msra.mxu0 0.0
    %1261 = vmatpush.msra.mxu0 0.0
    %1262 = vmatpush.msra.mxu0 0.0
    %1263 = vmatpush.msra.mxu0 0.0
    %1264 = vmatpush.msra.mxu0 %v849
    %1265 = vmatmul.f32.gmra.mxu0 %v1247
    %v1266 = vpop.f32.mrf.mxu0
    %v1267 = vadd.f32 0.0, %v1266
    %1268 = vdwg.mxu0
    %v1270 = vsel %vm1065, %v1151, 0
    %1272 = vmatpush.msra.mxu0 0.0
    %1273 = vmatpush.msra.mxu0 0.0
    %1274 = vmatpush.msra.mxu0 0.0
    %1275 = vmatpush.msra.mxu0 0.0
    %1276 = vmatpush.msra.mxu0 0.0
    %1277 = vmatpush.msra.mxu0 0.0
    %1278 = vmatpush.msra.mxu0 0.0
    %1279 = vmatpush.msra.mxu0 0.0
    %1280 = vmatpush.msra.mxu0 0.0
    %1281 = vmatpush.msra.mxu0 0.0
    %1282 = vmatpush.msra.mxu0 0.0
    %1283 = vmatpush.msra.mxu0 0.0
    %1284 = vmatpush.msra.mxu0 0.0
    %1285 = vmatpush.msra.mxu0 0.0
    %1286 = vmatpush.msra.mxu0 0.0
    %1287 = vmatpush.msra.mxu0 %v851
    %1288 = vmatmul.f32.gmra.mxu0 %v1270
    %v1289 = vpop.f32.mrf.mxu0
    %v1290 = vadd.f32 0.0, %v1289
    %1291 = vdwg.mxu0
    %v1293 = vsel %vm1065, %v1152, 0
    %1295 = vmatpush.msra.mxu0 0.0
    %1296 = vmatpush.msra.mxu0 0.0
    %1297 = vmatpush.msra.mxu0 0.0
    %1298 = vmatpush.msra.mxu0 0.0
    %1299 = vmatpush.msra.mxu0 0.0
    %1300 = vmatpush.msra.mxu0 0.0
    %1301 = vmatpush.msra.mxu0 0.0
    %1302 = vmatpush.msra.mxu0 0.0
    %1303 = vmatpush.msra.mxu0 0.0
    %1304 = vmatpush.msra.mxu0 0.0
    %1305 = vmatpush.msra.mxu0 0.0
    %1306 = vmatpush.msra.mxu0 0.0
    %1307 = vmatpush.msra.mxu0 0.0
    %1308 = vmatpush.msra.mxu0 0.0
    %1309 = vmatpush.msra.mxu0 0.0
    %1310 = vmatpush.msra.mxu0 %v853
    %1311 = vmatmul.f32.gmra.mxu0 %v1293
    %v1312 = vpop.f32.mrf.mxu0
    %v1313 = vadd.f32 0.0, %v1312
    %1314 = vdwg.mxu0
    %v1316 = vsel %vm1065, %v1153, 0
    %1318 = vmatpush.msra.mxu0 0.0
    %1319 = vmatpush.msra.mxu0 0.0
    %1320 = vmatpush.msra.mxu0 0.0
    %1321 = vmatpush.msra.mxu0 0.0
    %1322 = vmatpush.msra.mxu0 0.0
    %1323 = vmatpush.msra.mxu0 0.0
    %1324 = vmatpush.msra.mxu0 0.0
    %1325 = vmatpush.msra.mxu0 0.0
    %1326 = vmatpush.msra.mxu0 0.0
    %1327 = vmatpush.msra.mxu0 0.0
    %1328 = vmatpush.msra.mxu0 0.0
    %1329 = vmatpush.msra.mxu0 0.0
    %1330 = vmatpush.msra.mxu0 0.0
    %1331 = vmatpush.msra.mxu0 0.0
    %1332 = vmatpush.msra.mxu0 0.0
    %1333 = vmatpush.msra.mxu0 %v855
    %1334 = vmatmul.f32.gmra.mxu0 %v1316
    %v1335 = vpop.f32.mrf.mxu0
    %v1336 = vadd.f32 0.0, %v1335
    %1337 = vdwg.mxu0
    %v1338 = vrot.slane %v1221, 4
    %v1339 = vsel %vm106, %v1338, %v1175
    %v1340 = vrot.slane %v1175, 4
    %v1341 = vsel %vm106, %v1221, %v1340
    %v1343 = vunpack.c.l.s4 1983009808
    %v1344 = vunpack.c.0.s8 %v1343
    %v1345 = vperm.slane %v1339, %v1344
    %v1347 = vunpack.c.l.s4 1983009808
    %v1348 = vunpack.c.0.s8 %v1347
    %v1349 = vperm.slane %v1341, %v1348
    %v1350 = vrot.slane %v1244, 4
    %v1351 = vsel %vm106, %v1350, %v1198
    %v1352 = vrot.slane %v1198, 4
    %v1353 = vsel %vm106, %v1244, %v1352
    %v1355 = vunpack.c.l.s4 1983009808
    %v1356 = vunpack.c.0.s8 %v1355
    %v1357 = vperm.slane %v1351, %v1356
    %v1359 = vunpack.c.l.s4 1983009808
    %v1360 = vunpack.c.0.s8 %v1359
    %v1361 = vperm.slane %v1353, %v1360
    %v1362 = vrot.slane %v1313, 4
    %v1363 = vsel %vm106, %v1362, %v1267
    %v1364 = vrot.slane %v1267, 4
    %v1365 = vsel %vm106, %v1313, %v1364
    %v1367 = vunpack.c.l.s4 1983009808
    %v1368 = vunpack.c.0.s8 %v1367
    %v1369 = vperm.slane %v1363, %v1368
    %v1371 = vunpack.c.l.s4 1983009808
    %v1372 = vunpack.c.0.s8 %v1371
    %v1373 = vperm.slane %v1365, %v1372
    %v1374 = vrot.slane %v1336, 4
    %v1375 = vsel %vm106, %v1374, %v1290
    %v1376 = vrot.slane %v1290, 4
    %v1377 = vsel %vm106, %v1336, %v1376
    %v1379 = vunpack.c.l.s4 1983009808
    %v1380 = vunpack.c.0.s8 %v1379
    %v1381 = vperm.slane %v1375, %v1380
    %v1383 = vunpack.c.l.s4 1983009808
    %v1384 = vunpack.c.0.s8 %v1383
    %v1385 = vperm.slane %v1377, %v1384
    %v1386 = vrot.slane %v1357, 4
    %v1387 = vsel %vm106, %v1386, %v1345
    %v1388 = vrot.slane %v1345, 4
    %v1389 = vsel %vm106, %v1357, %v1388
    %v1391 = vunpack.c.l.s4 1934713408
    %v1392 = vunpack.c.0.s8 %v1391
    %v1393 = vperm.slane %v1387, %v1392
    %v1395 = vunpack.c.l.s4 1934713408
    %v1396 = vunpack.c.0.s8 %v1395
    %v1397 = vperm.slane %v1389, %v1396
    %v1398 = vrot.slane %v1361, 4
    %v1399 = vsel %vm106, %v1398, %v1349
    %v1400 = vrot.slane %v1349, 4
    %v1401 = vsel %vm106, %v1361, %v1400
    %v1403 = vunpack.c.l.s4 1934713408
    %v1404 = vunpack.c.0.s8 %v1403
    %v1405 = vperm.slane %v1399, %v1404
    %v1407 = vunpack.c.l.s4 1934713408
    %v1408 = vunpack.c.0.s8 %v1407
    %v1409 = vperm.slane %v1401, %v1408
    %v1410 = vrot.slane %v1381, 4
    %v1411 = vsel %vm106, %v1410, %v1369
    %v1412 = vrot.slane %v1369, 4
    %v1413 = vsel %vm106, %v1381, %v1412
    %v1415 = vunpack.c.l.s4 1934713408
    %v1416 = vunpack.c.0.s8 %v1415
    %v1417 = vperm.slane %v1411, %v1416
    %v1419 = vunpack.c.l.s4 1934713408
    %v1420 = vunpack.c.0.s8 %v1419
    %v1421 = vperm.slane %v1413, %v1420
    %v1422 = vrot.slane %v1385, 4
    %v1423 = vsel %vm106, %v1422, %v1373
    %v1424 = vrot.slane %v1373, 4
    %v1425 = vsel %vm106, %v1385, %v1424
    %v1427 = vunpack.c.l.s4 1934713408
    %v1428 = vunpack.c.0.s8 %v1427
    %v1429 = vperm.slane %v1423, %v1428
    %v1431 = vunpack.c.l.s4 1934713408
    %v1432 = vunpack.c.0.s8 %v1431
    %v1433 = vperm.slane %v1425, %v1432
    %v1434 = vrot.slane %v1417, 4
    %v1435 = vsel %vm106, %v1434, %v1393
    %v1436 = vrot.slane %v1393, 4
    %v1437 = vsel %vm106, %v1417, %v1436
    %v1438 = vrot.slane %v1421, 4
    %v1439 = vsel %vm106, %v1438, %v1397
    %v1440 = vrot.slane %v1397, 4
    %v1441 = vsel %vm106, %v1421, %v1440
    %v1442 = vrot.slane %v1429, 4
    %v1443 = vsel %vm106, %v1442, %v1405
    %v1444 = vrot.slane %v1405, 4
    %v1445 = vsel %vm106, %v1429, %v1444
    %v1446 = vrot.slane %v1433, 4
    %v1447 = vsel %vm106, %v1446, %v1409
    %v1448 = vrot.slane %v1409, 4
    %v1449 = vsel %vm106, %v1433, %v1448
    %v1450 = vrot.slane %v1439, 4
    %v1451 = vsel %vm106, %v1450, %v1435
    %v1452 = vrot.slane %v1435, 4
    %v1453 = vsel %vm106, %v1439, %v1452
    %v1455 = vunpack.c.l.s4 1983009808
    %v1456 = vunpack.c.0.s8 %v1455
    %v1457 = vperm.slane %v1451, %v1456
    %v1459 = vunpack.c.l.s4 1983009808
    %v1460 = vunpack.c.0.s8 %v1459
    %v1461 = vperm.slane %v1453, %v1460
    %v1462 = vrot.slane %v1441, 4
    %v1463 = vsel %vm106, %v1462, %v1437
    %v1464 = vrot.slane %v1437, 4
    %v1465 = vsel %vm106, %v1441, %v1464
    %v1467 = vunpack.c.l.s4 1983009808
    %v1468 = vunpack.c.0.s8 %v1467
    %v1469 = vperm.slane %v1463, %v1468
    %v1471 = vunpack.c.l.s4 1983009808
    %v1472 = vunpack.c.0.s8 %v1471
    %v1473 = vperm.slane %v1465, %v1472
    %v1474 = vrot.slane %v1447, 4
    %v1475 = vsel %vm106, %v1474, %v1443
    %v1476 = vrot.slane %v1443, 4
    %v1477 = vsel %vm106, %v1447, %v1476
    %v1479 = vunpack.c.l.s4 1983009808
    %v1480 = vunpack.c.0.s8 %v1479
    %v1481 = vperm.slane %v1475, %v1480
    %v1483 = vunpack.c.l.s4 1983009808
    %v1484 = vunpack.c.0.s8 %v1483
    %v1485 = vperm.slane %v1477, %v1484
    %v1486 = vrot.slane %v1449, 4
    %v1487 = vsel %vm106, %v1486, %v1445
    %v1488 = vrot.slane %v1445, 4
    %v1489 = vsel %vm106, %v1449, %v1488
    %v1491 = vunpack.c.l.s4 1983009808
    %v1492 = vunpack.c.0.s8 %v1491
    %v1493 = vperm.slane %v1487, %v1492
    %v1495 = vunpack.c.l.s4 1983009808
    %v1496 = vunpack.c.0.s8 %v1495
    %v1497 = vperm.slane %v1489, %v1496
    %v1498 = vrot.slane %v1469, 4
    %v1499 = vsel %vm106, %v1498, %v1457
    %v1500 = vrot.slane %v1457, 4
    %v1501 = vsel %vm106, %v1469, %v1500
    %v1503 = vunpack.c.l.s4 1934713408
    %v1504 = vunpack.c.0.s8 %v1503
    %v1505 = vperm.slane %v1499, %v1504
    %v1507 = vunpack.c.l.s4 1934713408
    %v1508 = vunpack.c.0.s8 %v1507
    %v1509 = vperm.slane %v1501, %v1508
    %v1510 = vrot.slane %v1473, 4
    %v1511 = vsel %vm106, %v1510, %v1461
    %v1512 = vrot.slane %v1461, 4
    %v1513 = vsel %vm106, %v1473, %v1512
    %v1515 = vunpack.c.l.s4 1934713408
    %v1516 = vunpack.c.0.s8 %v1515
    %v1517 = vperm.slane %v1511, %v1516
    %v1519 = vunpack.c.l.s4 1934713408
    %v1520 = vunpack.c.0.s8 %v1519
    %v1521 = vperm.slane %v1513, %v1520
    %v1522 = vrot.slane %v1493, 4
    %v1523 = vsel %vm106, %v1522, %v1481
    %v1524 = vrot.slane %v1481, 4
    %v1525 = vsel %vm106, %v1493, %v1524
    %v1527 = vunpack.c.l.s4 1934713408
    %v1528 = vunpack.c.0.s8 %v1527
    %v1529 = vperm.slane %v1523, %v1528
    %v1531 = vunpack.c.l.s4 1934713408
    %v1532 = vunpack.c.0.s8 %v1531
    %v1533 = vperm.slane %v1525, %v1532
    %v1534 = vrot.slane %v1497, 4
    %v1535 = vsel %vm106, %v1534, %v1485
    %v1536 = vrot.slane %v1485, 4
    %v1537 = vsel %vm106, %v1497, %v1536
    %v1539 = vunpack.c.l.s4 1934713408
    %v1540 = vunpack.c.0.s8 %v1539
    %v1541 = vperm.slane %v1535, %v1540
    %v1543 = vunpack.c.l.s4 1934713408
    %v1544 = vunpack.c.0.s8 %v1543
    %v1545 = vperm.slane %v1537, %v1544
    %v1546 = vrot.slane %v1529, 4
    %v1547 = vsel %vm106, %v1546, %v1505
    %v1548 = vrot.slane %v1505, 4
    %v1549 = vsel %vm106, %v1529, %v1548
    %v1550 = vrot.slane %v1533, 4
    %v1551 = vsel %vm106, %v1550, %v1509
    %v1552 = vrot.slane %v1509, 4
    %v1553 = vsel %vm106, %v1533, %v1552
    %v1554 = vrot.slane %v1541, 4
    %v1555 = vsel %vm106, %v1554, %v1517
    %v1556 = vrot.slane %v1517, 4
    %v1557 = vsel %vm106, %v1541, %v1556
    %v1558 = vrot.slane %v1545, 4
    %v1559 = vsel %vm106, %v1558, %v1521
    %v1560 = vrot.slane %v1521, 4
    %v1561 = vsel %vm106, %v1545, %v1560
    %1563 = vrot.lane.b32.xlu0 %v1549, 4
    %v1564 = vpop.permute.xlu0 %1563
    %1567 = vrot.lane.b32.xlu0 %v1551, 8
    %v1568 = vpop.permute.xlu0 %1567
    %1571 = vrot.lane.b32.xlu0 %v1553, 12
    %v1572 = vpop.permute.xlu0 %1571
    %1575 = vrot.lane.b32.xlu0 %v1555, 16
    %v1576 = vpop.permute.xlu0 %1575
    %1579 = vrot.lane.b32.xlu0 %v1557, 20
    %v1580 = vpop.permute.xlu0 %1579
    %1583 = vrot.lane.b32.xlu0 %v1559, 24
    %v1584 = vpop.permute.xlu0 %1583
    %1587 = vrot.lane.b32.xlu0 %v1561, 28
    %v1588 = vpop.permute.xlu0 %1587
    %v1590 = vsel %vm856, %v1547, %v1564
    %v1591 = vsel %vm1065, %v1590, %v1568
    %vm1592 = vcmask 97280
    %v1593 = vsel %vm1592, %v1591, %v1572
    %vm1594 = vcmask 130048
    %v1595 = vsel %vm1594, %v1593, %v1576
    %vm1596 = vcmask 162816
    %v1597 = vsel %vm1596, %v1595, %v1580
    %vm1598 = vcmask 195584
    %v1599 = vsel %vm1598, %v1597, %v1584
    %vm1600 = vcmask 228352
    %v1601 = vsel %vm1600, %v1599, %v1588
    %v1602 = vperm.slane %v43, 3
    %1607 = vrot.lane.b32.xlu0 %v35, 32
    %v1608 = vpop.permute.xlu0 %1607
    %1609 = vrot.lane.b32.xlu0 %v37, 32
    %v1610 = vpop.permute.xlu0 %1609
    %1611 = vrot.lane.b32.xlu0 %v39, 32
    %v1612 = vpop.permute.xlu0 %1611
    %1613 = vrot.lane.b32.xlu0 %v41, 32
    %v1614 = vpop.permute.xlu0 %1613
    %v1620 = vsel %vm45, %v1601, 0
    %1622 = vmatpush.msra.mxu0 0.0
    %1623 = vmatpush.msra.mxu0 0.0
    %1624 = vmatpush.msra.mxu0 0.0
    %1625 = vmatpush.msra.mxu0 0.0
    %1626 = vmatpush.msra.mxu0 0.0
    %1627 = vmatpush.msra.mxu0 0.0
    %1628 = vmatpush.msra.mxu0 0.0
    %1629 = vmatpush.msra.mxu0 0.0
    %1630 = vmatpush.msra.mxu0 0.0
    %1631 = vmatpush.msra.mxu0 0.0
    %1632 = vmatpush.msra.mxu0 0.0
    %1633 = vmatpush.msra.mxu0 0.0
    %1634 = vmatpush.msra.mxu0 %v1614
    %1635 = vmatpush.msra.mxu0 %v1612
    %1636 = vmatpush.msra.mxu0 %v1610
    %1637 = vmatpush.msra.mxu0 %v1608
    %1638 = vmatmul.f32.gmra.mxu0 %v1620
    %v1639 = vpop.f32.mrf.mxu0
    %v1640 = vadd.f32 %v1602, %v1639
    %1641 = vdwg.mxu0
    %v1642 = vadd.f32 %v34, %v1640
    %1644 = vrot.lane.b32.xlu0 %v1642, 112
    %v1645 = vpop.permute.xlu0 %1644
    %v1647 = vrot.slane %v1642, 4
    %v1648 = vsel %vm106, 0.0, %v1647
    %v1650 = vunpack.c.l.s4 1983009808
    %v1651 = vunpack.c.0.s8 %v1650
    %v1652 = vperm.slane %v1642, %v1651
    %v1654 = vunpack.c.l.s4 1983009808
    %v1655 = vunpack.c.0.s8 %v1654
    %v1656 = vperm.slane %v1648, %v1655
    %v1657 = vrot.slane %v1645, 4
    %v1658 = vsel %vm106, 0.0, %v1657
    %v1660 = vunpack.c.l.s4 1983009808
    %v1661 = vunpack.c.0.s8 %v1660
    %v1662 = vperm.slane %v1645, %v1661
    %v1664 = vunpack.c.l.s4 1983009808
    %v1665 = vunpack.c.0.s8 %v1664
    %v1666 = vperm.slane %v1658, %v1665
    %v1667 = vrot.slane %v1662, 4
    %v1668 = vsel %vm106, %v1667, %v1652
    %v1669 = vrot.slane %v1652, 4
    %v1670 = vsel %vm106, %v1662, %v1669
    %v1672 = vunpack.c.l.s4 1934713408
    %v1673 = vunpack.c.0.s8 %v1672
    %v1674 = vperm.slane %v1668, %v1673
    %v1676 = vunpack.c.l.s4 1934713408
    %v1677 = vunpack.c.0.s8 %v1676
    %v1678 = vperm.slane %v1670, %v1677
    %v1679 = vrot.slane %v1666, 4
    %v1680 = vsel %vm106, %v1679, %v1656
    %v1681 = vrot.slane %v1656, 4
    %v1682 = vsel %vm106, %v1666, %v1681
    %v1684 = vunpack.c.l.s4 1934713408
    %v1685 = vunpack.c.0.s8 %v1684
    %v1686 = vperm.slane %v1680, %v1685
    %v1688 = vunpack.c.l.s4 1934713408
    %v1689 = vunpack.c.0.s8 %v1688
    %v1690 = vperm.slane %v1682, %v1689
    %v1691 = vrot.slane %v1674, 4
    %v1692 = vsel %vm106, 0.0, %v1691
    %v1693 = vrot.slane %v1678, 4
    %v1694 = vsel %vm106, 0.0, %v1693
    %v1695 = vrot.slane %v1686, 4
    %v1696 = vsel %vm106, 0.0, %v1695
    %v1697 = vrot.slane %v1690, 4
    %v1698 = vsel %vm106, 0.0, %v1697
    %vm1699 = vcmask 123904
    %v1700 = vsel %vm1699, %v1674, 0.0
    %1701 = vadd.xlane.f32.xlu0 %v1700
    %v1702 = vpop.xlane.xlu0 %1701
    %v1703 = vsel %vm1699, %v1692, 0.0
    %1704 = vadd.xlane.f32.xlu0 %v1703
    %v1705 = vpop.xlane.xlu0 %1704
    %v1706 = vsel %vm1699, %v1678, 0.0
    %1707 = vadd.xlane.f32.xlu0 %v1706
    %v1708 = vpop.xlane.xlu0 %1707
    %v1709 = vsel %vm1699, %v1694, 0.0
    %1710 = vadd.xlane.f32.xlu0 %v1709
    %v1711 = vpop.xlane.xlu0 %1710
    %v1712 = vsel %vm1699, %v1686, 0.0
    %1713 = vadd.xlane.f32.xlu0 %v1712
    %v1714 = vpop.xlane.xlu0 %1713
    %v1715 = vsel %vm1699, %v1696, 0.0
    %1716 = vadd.xlane.f32.xlu0 %v1715
    %v1717 = vpop.xlane.xlu0 %1716
    %v1718 = vsel %vm1699, %v1690, 0.0
    %1719 = vadd.xlane.f32.xlu0 %v1718
    %v1720 = vpop.xlane.xlu0 %1719
    %v1721 = vsel %vm1699, %v1698, 0.0
    %1722 = vadd.xlane.f32.xlu0 %v1721
    %v1723 = vpop.xlane.xlu0 %1722
    %v1724 = vrcp.pop 16.0
    %v1725 = vmul.f32 16.0, %v1724
    %v1726 = vsub.f32 1.0, %v1725
    %v1727 = vmul.f32 %v1724, %v1726
    %v1728 = vadd.f32 %v1724, %v1727
    %vm1729 = vweird.f32 %v1724
    %v1730 = vsel %vm1729, %v1724, %v1728
    %v1731 = vmul.f32 %v1702, %v1730
    %v1732 = vmul.f32 %v1705, %v1730
    %v1733 = vmul.f32 %v1708, %v1730
    %v1734 = vmul.f32 %v1711, %v1730
    %v1735 = vmul.f32 %v1714, %v1730
    %v1736 = vmul.f32 %v1717, %v1730
    %v1737 = vmul.f32 %v1720, %v1730
    %v1738 = vmul.f32 %v1723, %v1730
    %v1739 = vsub.f32 %v1674, %v1731
    %v1740 = vsub.f32 %v1692, %v1732
    %v1741 = vsub.f32 %v1678, %v1733
    %v1742 = vsub.f32 %v1694, %v1734
    %v1743 = vsub.f32 %v1686, %v1735
    %v1744 = vsub.f32 %v1696, %v1736
    %v1745 = vsub.f32 %v1690, %v1737
    %v1746 = vsub.f32 %v1698, %v1738
    %v1747 = vmul.f32 %v1739, %v1739
    %v1748 = vmul.f32 %v1740, %v1740
    %v1749 = vmul.f32 %v1741, %v1741
    %v1750 = vmul.f32 %v1742, %v1742
    %v1751 = vmul.f32 %v1743, %v1743
    %v1752 = vmul.f32 %v1744, %v1744
    %v1753 = vmul.f32 %v1745, %v1745
    %v1754 = vmul.f32 %v1746, %v1746
    %v1755 = vsel %vm1699, %v1747, 0.0
    %1756 = vadd.xlane.f32.xlu0 %v1755
    %v1757 = vpop.xlane.xlu0 %1756
    %v1758 = vsel %vm1699, %v1748, 0.0
    %1759 = vadd.xlane.f32.xlu0 %v1758
    %v1760 = vpop.xlane.xlu0 %1759
    %v1761 = vsel %vm1699, %v1749, 0.0
    %1762 = vadd.xlane.f32.xlu0 %v1761
    %v1763 = vpop.xlane.xlu0 %1762
    %v1764 = vsel %vm1699, %v1750, 0.0
    %1765 = vadd.xlane.f32.xlu0 %v1764
    %v1766 = vpop.xlane.xlu0 %1765
    %v1767 = vsel %vm1699, %v1751, 0.0
    %1768 = vadd.xlane.f32.xlu0 %v1767
    %v1769 = vpop.xlane.xlu0 %1768
    %v1770 = vsel %vm1699, %v1752, 0.0
    %1771 = vadd.xlane.f32.xlu0 %v1770
    %v1772 = vpop.xlane.xlu0 %1771
    %v1773 = vsel %vm1699, %v1753, 0.0
    %1774 = vadd.xlane.f32.xlu0 %v1773
    %v1775 = vpop.xlane.xlu0 %1774
    %v1776 = vsel %vm1699, %v1754, 0.0
    %1777 = vadd.xlane.f32.xlu0 %v1776
    %v1778 = vpop.xlane.xlu0 %1777
    %v1779 = vmul.f32 %v1757, %v1730
    %v1780 = vmul.f32 %v1760, %v1730
    %v1781 = vmul.f32 %v1763, %v1730
    %v1782 = vmul.f32 %v1766, %v1730
    %v1783 = vmul.f32 %v1769, %v1730
    %v1784 = vmul.f32 %v1772, %v1730
    %v1785 = vmul.f32 %v1775, %v1730
    %v1786 = vmul.f32 %v1778, %v1730
    %v1787 = vadd.f32 %v1779, 1e-05
    %v1788 = vadd.f32 %v1780, 1e-05
    %v1789 = vadd.f32 %v1781, 1e-05
    %v1790 = vadd.f32 %v1782, 1e-05
    %v1791 = vadd.f32 %v1783, 1e-05
    %v1792 = vadd.f32 %v1784, 1e-05
    %v1793 = vadd.f32 %v1785, 1e-05
    %v1794 = vadd.f32 %v1786, 1e-05
    %v1795 = vrsqrt.pop %v1787
    %v1796 = vmul.f32 %v1795, %v1787
    %v1797 = vmul.f32 %v1796, %v1795
    %v1798 = vmul.f32 0.5, %v1797
    %v1799 = vsub.f32 1.5, %v1798
    %v1800 = vmul.f32 %v1795, %v1799
    %vm1801 = vweird.f32 %v1787
    %vm1802 = vweird.f32 %v1795
    %vm1803 = vmor %vm1801, %vm1802
    %v1804 = vsel %vm1803, %v1795, %v1800
    %v1805 = vrsqrt.pop %v1788
    %v1806 = vmul.f32 %v1805, %v1788
    %v1807 = vmul.f32 %v1806, %v1805
    %v1808 = vmul.f32 0.5, %v1807
    %v1809 = vsub.f32 1.5, %v1808
    %v1810 = vmul.f32 %v1805, %v1809
    %vm1811 = vweird.f32 %v1788
    %vm1812 = vweird.f32 %v1805
    %vm1813 = vmor %vm1811, %vm1812
    %v1814 = vsel %vm1813, %v1805, %v1810
    %v1815 = vrsqrt.pop %v1789
    %v1816 = vmul.f32 %v1815, %v1789
    %v1817 = vmul.f32 %v1816, %v1815
    %v1818 = vmul.f32 0.5, %v1817
    %v1819 = vsub.f32 1.5, %v1818
    %v1820 = vmul.f32 %v1815, %v1819
    %vm1821 = vweird.f32 %v1789
    %vm1822 = vweird.f32 %v1815
    %vm1823 = vmor %vm1821, %vm1822
    %v1824 = vsel %vm1823, %v1815, %v1820
    %v1825 = vrsqrt.pop %v1790
    %v1826 = vmul.f32 %v1825, %v1790
    %v1827 = vmul.f32 %v1826, %v1825
    %v1828 = vmul.f32 0.5, %v1827
    %v1829 = vsub.f32 1.5, %v1828
    %v1830 = vmul.f32 %v1825, %v1829
    %vm1831 = vweird.f32 %v1790
    %vm1832 = vweird.f32 %v1825
    %vm1833 = vmor %vm1831, %vm1832
    %v1834 = vsel %vm1833, %v1825, %v1830
    %v1835 = vrsqrt.pop %v1791
    %v1836 = vmul.f32 %v1835, %v1791
    %v1837 = vmul.f32 %v1836, %v1835
    %v1838 = vmul.f32 0.5, %v1837
    %v1839 = vsub.f32 1.5, %v1838
    %v1840 = vmul.f32 %v1835, %v1839
    %vm1841 = vweird.f32 %v1791
    %vm1842 = vweird.f32 %v1835
    %vm1843 = vmor %vm1841, %vm1842
    %v1844 = vsel %vm1843, %v1835, %v1840
    %v1845 = vrsqrt.pop %v1792
    %v1846 = vmul.f32 %v1845, %v1792
    %v1847 = vmul.f32 %v1846, %v1845
    %v1848 = vmul.f32 0.5, %v1847
    %v1849 = vsub.f32 1.5, %v1848
    %v1850 = vmul.f32 %v1845, %v1849
    %vm1851 = vweird.f32 %v1792
    %vm1852 = vweird.f32 %v1845
    %vm1853 = vmor %vm1851, %vm1852
    %v1854 = vsel %vm1853, %v1845, %v1850
    %v1855 = vrsqrt.pop %v1793
    %v1856 = vmul.f32 %v1855, %v1793
    %v1857 = vmul.f32 %v1856, %v1855
    %v1858 = vmul.f32 0.5, %v1857
    %v1859 = vsub.f32 1.5, %v1858
    %v1860 = vmul.f32 %v1855, %v1859
    %vm1861 = vweird.f32 %v1793
    %vm1862 = vweird.f32 %v1855
    %vm1863 = vmor %vm1861, %vm1862
    %v1864 = vsel %vm1863, %v1855, %v1860
    %v1865 = vrsqrt.pop %v1794
    %v1866 = vmul.f32 %v1865, %v1794
    %v1867 = vmul.f32 %v1866, %v1865
    %v1868 = vmul.f32 0.5, %v1867
    %v1869 = vsub.f32 1.5, %v1868
    %v1870 = vmul.f32 %v1865, %v1869
    %vm1871 = vweird.f32 %v1794
    %vm1872 = vweird.f32 %v1865
    %vm1873 = vmor %vm1871, %vm1872
    %v1874 = vsel %vm1873, %v1865, %v1870
    %v1875 = vmul.f32 %v1739, %v1804
    %v1876 = vmul.f32 %v1740, %v1814
    %v1877 = vmul.f32 %v1741, %v1824
    %v1878 = vmul.f32 %v1742, %v1834
    %v1879 = vmul.f32 %v1743, %v1844
    %v1880 = vmul.f32 %v1744, %v1854
    %v1881 = vmul.f32 %v1745, %v1864
    %v1882 = vmul.f32 %v1746, %v1874
    %v1883 = vrot.slane %v1877, 4
    %v1884 = vsel %vm106, %v1883, %v1875
    %v1886 = vunpack.c.l.s4 1983009808
    %v1887 = vunpack.c.0.s8 %v1886
    %v1888 = vperm.slane %v1884, %v1887
    %v1889 = vrot.slane %v1878, 4
    %v1890 = vsel %vm106, %v1889, %v1876
    %v1892 = vunpack.c.l.s4 1983009808
    %v1893 = vunpack.c.0.s8 %v1892
    %v1894 = vperm.slane %v1890, %v1893
    %v1895 = vrot.slane %v1881, 4
    %v1896 = vsel %vm106, %v1895, %v1879
    %v1898 = vunpack.c.l.s4 1983009808
    %v1899 = vunpack.c.0.s8 %v1898
    %v1900 = vperm.slane %v1896, %v1899
    %v1901 = vrot.slane %v1882, 4
    %v1902 = vsel %vm106, %v1901, %v1880
    %v1904 = vunpack.c.l.s4 1983009808
    %v1905 = vunpack.c.0.s8 %v1904
    %v1906 = vperm.slane %v1902, %v1905
    %v1907 = vrot.slane %v1894, 4
    %v1908 = vsel %vm106, %v1907, %v1888
    %v1910 = vunpack.c.l.s4 1934713408
    %v1911 = vunpack.c.0.s8 %v1910
    %v1912 = vperm.slane %v1908, %v1911
    %v1913 = vrot.slane %v1906, 4
    %v1914 = vsel %vm106, %v1913, %v1900
    %v1916 = vunpack.c.l.s4 1934713408
    %v1917 = vunpack.c.0.s8 %v1916
    %v1918 = vperm.slane %v1914, %v1917
    %v1919 = vrot.slane %v1918, 4
    %v1920 = vsel %vm106, %v1919, %v1912
    %v1921 = vrot.slane %v1912, 4
    %v1922 = vsel %vm106, %v1918, %v1921
    %1924 = vrot.lane.b32.xlu0 %v1922, 16
    %v1925 = vpop.permute.xlu0 %1924
    %v1927 = vsel %vm1594, %v1920, %v1925
    %v1928 = vperm.slane %v43, 6
    %v1929 = vmul.f32 %v1927, %v1928
    %v1930 = vperm.slane %v43, 7
    %v1931 = vadd.f32 %v1929, %v1930
    %v1932 = vperm.slane %v43, 4
    %v1934 = vsel %vm45, %v1931, 0
    %1936 = vmatpush.msra.mxu0 0.0
    %1937 = vmatpush.msra.mxu0 0.0
    %1938 = vmatpush.msra.mxu0 0.0
    %1939 = vmatpush.msra.mxu0 0.0
    %1940 = vmatpush.msra.mxu0 0.0
    %1941 = vmatpush.msra.mxu0 0.0
    %1942 = vmatpush.msra.mxu0 0.0
    %1943 = vmatpush.msra.mxu0 0.0
    %1944 = vmatpush.msra.mxu0 0.0
    %1945 = vmatpush.msra.mxu0 0.0
    %1946 = vmatpush.msra.mxu0 0.0
    %1947 = vmatpush.msra.mxu0 0.0
    %1948 = vmatpush.msra.mxu0 %v42
    %1949 = vmatpush.msra.mxu0 %v40
    %1950 = vmatpush.msra.mxu0 %v38
    %1951 = vmatpush.msra.mxu0 %v36
    %1952 = vmatmul.f32.gmra.mxu0 %v1934
    %v1953 = vpop.f32.mrf.mxu0
    %v1954 = vadd.f32 %v1932, %v1953
    %1955 = vdwg.mxu0
    %v1956 = vmax.f32 %v1954, 0.0
    %v1957 = vperm.slane %v43, 5
    %1962 = vrot.lane.b32.xlu0 %v36, 96
    %v1963 = vpop.permute.xlu0 %1962
    %1964 = vrot.lane.b32.xlu0 %v38, 96
    %v1965 = vpop.permute.xlu0 %1964
    %1966 = vrot.lane.b32.xlu0 %v40, 96
    %v1967 = vpop.permute.xlu0 %1966
    %1968 = vrot.lane.b32.xlu0 %v42, 96
    %v1969 = vpop.permute.xlu0 %1968
    %v1975 = vsel %vm45, %v1956, 0
    %1977 = vmatpush.msra.mxu0 0.0
    %1978 = vmatpush.msra.mxu0 0.0
    %1979 = vmatpush.msra.mxu0 0.0
    %1980 = vmatpush.msra.mxu0 0.0
    %1981 = vmatpush.msra.mxu0 0.0
    %1982 = vmatpush.msra.mxu0 0.0
    %1983 = vmatpush.msra.mxu0 0.0
    %1984 = vmatpush.msra.mxu0 0.0
    %1985 = vmatpush.msra.mxu0 0.0
    %1986 = vmatpush.msra.mxu0 0.0
    %1987 = vmatpush.msra.mxu0 0.0
    %1988 = vmatpush.msra.mxu0 0.0
    %1989 = vmatpush.msra.mxu0 %v1969
    %1990 = vmatpush.msra.mxu0 %v1967
    %1991 = vmatpush.msra.mxu0 %v1965
    %1992 = vmatpush.msra.mxu0 %v1963
    %1993 = vmatmul.f32.gmra.mxu0 %v1975
    %v1994 = vpop.f32.mrf.mxu0
    %v1995 = vadd.f32 %v1957, %v1994
    %1996 = vdwg.mxu0
    %v1997 = vadd.f32 %v1931, %v1995
    %1999 = vrot.lane.b32.xlu0 %v1997, 112
    %v2000 = vpop.permute.xlu0 %1999
    %v2002 = vrot.slane %v1997, 4
    %v2003 = vsel %vm106, 0.0, %v2002
    %v2005 = vunpack.c.l.s4 1983009808
    %v2006 = vunpack.c.0.s8 %v2005
    %v2007 = vperm.slane %v1997, %v2006
    %v2009 = vunpack.c.l.s4 1983009808
    %v2010 = vunpack.c.0.s8 %v2009
    %v2011 = vperm.slane %v2003, %v2010
    %v2012 = vrot.slane %v2000, 4
    %v2013 = vsel %vm106, 0.0, %v2012
    %v2015 = vunpack.c.l.s4 1983009808
    %v2016 = vunpack.c.0.s8 %v2015
    %v2017 = vperm.slane %v2000, %v2016
    %v2019 = vunpack.c.l.s4 1983009808
    %v2020 = vunpack.c.0.s8 %v2019
    %v2021 = vperm.slane %v2013, %v2020
    %v2022 = vrot.slane %v2017, 4
    %v2023 = vsel %vm106, %v2022, %v2007
    %v2024 = vrot.slane %v2007, 4
    %v2025 = vsel %vm106, %v2017, %v2024
    %v2027 = vunpack.c.l.s4 1934713408
    %v2028 = vunpack.c.0.s8 %v2027
    %v2029 = vperm.slane %v2023, %v2028
    %v2031 = vunpack.c.l.s4 1934713408
    %v2032 = vunpack.c.0.s8 %v2031
    %v2033 = vperm.slane %v2025, %v2032
    %v2034 = vrot.slane %v2021, 4
    %v2035 = vsel %vm106, %v2034, %v2011
    %v2036 = vrot.slane %v2011, 4
    %v2037 = vsel %vm106, %v2021, %v2036
    %v2039 = vunpack.c.l.s4 1934713408
    %v2040 = vunpack.c.0.s8 %v2039
    %v2041 = vperm.slane %v2035, %v2040
    %v2043 = vunpack.c.l.s4 1934713408
    %v2044 = vunpack.c.0.s8 %v2043
    %v2045 = vperm.slane %v2037, %v2044
    %v2046 = vrot.slane %v2029, 4
    %v2047 = vsel %vm106, 0.0, %v2046
    %v2048 = vrot.slane %v2033, 4
    %v2049 = vsel %vm106, 0.0, %v2048
    %v2050 = vrot.slane %v2041, 4
    %v2051 = vsel %vm106, 0.0, %v2050
    %v2052 = vrot.slane %v2045, 4
    %v2053 = vsel %vm106, 0.0, %v2052
    %v2054 = vsel %vm1699, %v2029, 0.0
    %2055 = vadd.xlane.f32.xlu0 %v2054
    %v2056 = vpop.xlane.xlu0 %2055
    %v2057 = vsel %vm1699, %v2047, 0.0
    %2058 = vadd.xlane.f32.xlu0 %v2057
    %v2059 = vpop.xlane.xlu0 %2058
    %v2060 = vsel %vm1699, %v2033, 0.0
    %2061 = vadd.xlane.f32.xlu0 %v2060
    %v2062 = vpop.xlane.xlu0 %2061
    %v2063 = vsel %vm1699, %v2049, 0.0
    %2064 = vadd.xlane.f32.xlu0 %v2063
    %v2065 = vpop.xlane.xlu0 %2064
    %v2066 = vsel %vm1699, %v2041, 0.0
    %2067 = vadd.xlane.f32.xlu0 %v2066
    %v2068 = vpop.xlane.xlu0 %2067
    %v2069 = vsel %vm1699, %v2051, 0.0
    %2070 = vadd.xlane.f32.xlu0 %v2069
    %v2071 = vpop.xlane.xlu0 %2070
    %v2072 = vsel %vm1699, %v2045, 0.0
    %2073 = vadd.xlane.f32.xlu0 %v2072
    %v2074 = vpop.xlane.xlu0 %2073
    %v2075 = vsel %vm1699, %v2053, 0.0
    %2076 = vadd.xlane.f32.xlu0 %v2075
    %v2077 = vpop.xlane.xlu0 %2076
    %v2078 = vmul.f32 %v2056, %v1730
    %v2079 = vmul.f32 %v2059, %v1730
    %v2080 = vmul.f32 %v2062, %v1730
    %v2081 = vmul.f32 %v2065, %v1730
    %v2082 = vmul.f32 %v2068, %v1730
    %v2083 = vmul.f32 %v2071, %v1730
    %v2084 = vmul.f32 %v2074, %v1730
    %v2085 = vmul.f32 %v2077, %v1730
    %v2086 = vsub.f32 %v2029, %v2078
    %v2087 = vsub.f32 %v2047, %v2079
    %v2088 = vsub.f32 %v2033, %v2080
    %v2089 = vsub.f32 %v2049, %v2081
    %v2090 = vsub.f32 %v2041, %v2082
    %v2091 = vsub.f32 %v2051, %v2083
    %v2092 = vsub.f32 %v2045, %v2084
    %v2093 = vsub.f32 %v2053, %v2085
    %v2094 = vmul.f32 %v2086, %v2086
    %v2095 = vmul.f32 %v2087, %v2087
    %v2096 = vmul.f32 %v2088, %v2088
    %v2097 = vmul.f32 %v2089, %v2089
    %v2098 = vmul.f32 %v2090, %v2090
    %v2099 = vmul.f32 %v2091, %v2091
    %v2100 = vmul.f32 %v2092, %v2092
    %v2101 = vmul.f32 %v2093, %v2093
    %v2102 = vsel %vm1699, %v2094, 0.0
    %2103 = vadd.xlane.f32.xlu0 %v2102
    %v2104 = vpop.xlane.xlu0 %2103
    %v2105 = vsel %vm1699, %v2095, 0.0
    %2106 = vadd.xlane.f32.xlu0 %v2105
    %v2107 = vpop.xlane.xlu0 %2106
    %v2108 = vsel %vm1699, %v2096, 0.0
    %2109 = vadd.xlane.f32.xlu0 %v2108
    %v2110 = vpop.xlane.xlu0 %2109
    %v2111 = vsel %vm1699, %v2097, 0.0
    %2112 = vadd.xlane.f32.xlu0 %v2111
    %v2113 = vpop.xlane.xlu0 %2112
    %v2114 = vsel %vm1699, %v2098, 0.0
    %2115 = vadd.xlane.f32.xlu0 %v2114
    %v2116 = vpop.xlane.xlu0 %2115
    %v2117 = vsel %vm1699, %v2099, 0.0
    %2118 = vadd.xlane.f32.xlu0 %v2117
    %v2119 = vpop.xlane.xlu0 %2118
    %v2120 = vsel %vm1699, %v2100, 0.0
    %2121 = vadd.xlane.f32.xlu0 %v2120
    %v2122 = vpop.xlane.xlu0 %2121
    %v2123 = vsel %vm1699, %v2101, 0.0
    %2124 = vadd.xlane.f32.xlu0 %v2123
    %v2125 = vpop.xlane.xlu0 %2124
    %v2126 = vmul.f32 %v2104, %v1730
    %v2127 = vmul.f32 %v2107, %v1730
    %v2128 = vmul.f32 %v2110, %v1730
    %v2129 = vmul.f32 %v2113, %v1730
    %v2130 = vmul.f32 %v2116, %v1730
    %v2131 = vmul.f32 %v2119, %v1730
    %v2132 = vmul.f32 %v2122, %v1730
    %v2133 = vmul.f32 %v2125, %v1730
    %v2134 = vadd.f32 %v2126, 1e-05
    %v2135 = vadd.f32 %v2127, 1e-05
    %v2136 = vadd.f32 %v2128, 1e-05
    %v2137 = vadd.f32 %v2129, 1e-05
    %v2138 = vadd.f32 %v2130, 1e-05
    %v2139 = vadd.f32 %v2131, 1e-05
    %v2140 = vadd.f32 %v2132, 1e-05
    %v2141 = vadd.f32 %v2133, 1e-05
    %v2142 = vrsqrt.pop %v2134
    %v2143 = vmul.f32 %v2142, %v2134
    %v2144 = vmul.f32 %v2143, %v2142
    %v2145 = vmul.f32 0.5, %v2144
    %v2146 = vsub.f32 1.5, %v2145
    %v2147 = vmul.f32 %v2142, %v2146
    %vm2148 = vweird.f32 %v2134
    %vm2149 = vweird.f32 %v2142
    %vm2150 = vmor %vm2148, %vm2149
    %v2151 = vsel %vm2150, %v2142, %v2147
    %v2152 = vrsqrt.pop %v2135
    %v2153 = vmul.f32 %v2152, %v2135
    %v2154 = vmul.f32 %v2153, %v2152
    %v2155 = vmul.f32 0.5, %v2154
    %v2156 = vsub.f32 1.5, %v2155
    %v2157 = vmul.f32 %v2152, %v2156
    %vm2158 = vweird.f32 %v2135
    %vm2159 = vweird.f32 %v2152
    %vm2160 = vmor %vm2158, %vm2159
    %v2161 = vsel %vm2160, %v2152, %v2157
    %v2162 = vrsqrt.pop %v2136
    %v2163 = vmul.f32 %v2162, %v2136
    %v2164 = vmul.f32 %v2163, %v2162
    %v2165 = vmul.f32 0.5, %v2164
    %v2166 = vsub.f32 1.5, %v2165
    %v2167 = vmul.f32 %v2162, %v2166
    %vm2168 = vweird.f32 %v2136
    %vm2169 = vweird.f32 %v2162
    %vm2170 = vmor %vm2168, %vm2169
    %v2171 = vsel %vm2170, %v2162, %v2167
    %v2172 = vrsqrt.pop %v2137
    %v2173 = vmul.f32 %v2172, %v2137
    %v2174 = vmul.f32 %v2173, %v2172
    %v2175 = vmul.f32 0.5, %v2174
    %v2176 = vsub.f32 1.5, %v2175
    %v2177 = vmul.f32 %v2172, %v2176
    %vm2178 = vweird.f32 %v2137
    %vm2179 = vweird.f32 %v2172
    %vm2180 = vmor %vm2178, %vm2179
    %v2181 = vsel %vm2180, %v2172, %v2177
    %v2182 = vrsqrt.pop %v2138
    %v2183 = vmul.f32 %v2182, %v2138
    %v2184 = vmul.f32 %v2183, %v2182
    %v2185 = vmul.f32 0.5, %v2184
    %v2186 = vsub.f32 1.5, %v2185
    %v2187 = vmul.f32 %v2182, %v2186
    %vm2188 = vweird.f32 %v2138
    %vm2189 = vweird.f32 %v2182
    %vm2190 = vmor %vm2188, %vm2189
    %v2191 = vsel %vm2190, %v2182, %v2187
    %v2192 = vrsqrt.pop %v2139
    %v2193 = vmul.f32 %v2192, %v2139
    %v2194 = vmul.f32 %v2193, %v2192
    %v2195 = vmul.f32 0.5, %v2194
    %v2196 = vsub.f32 1.5, %v2195
    %v2197 = vmul.f32 %v2192, %v2196
    %vm2198 = vweird.f32 %v2139
    %vm2199 = vweird.f32 %v2192
    %vm2200 = vmor %vm2198, %vm2199
    %v2201 = vsel %vm2200, %v2192, %v2197
    %v2202 = vrsqrt.pop %v2140
    %v2203 = vmul.f32 %v2202, %v2140
    %v2204 = vmul.f32 %v2203, %v2202
    %v2205 = vmul.f32 0.5, %v2204
    %v2206 = vsub.f32 1.5, %v2205
    %v2207 = vmul.f32 %v2202, %v2206
    %vm2208 = vweird.f32 %v2140
    %vm2209 = vweird.f32 %v2202
    %vm2210 = vmor %vm2208, %vm2209
    %v2211 = vsel %vm2210, %v2202, %v2207
    %v2212 = vrsqrt.pop %v2141
    %v2213 = vmul.f32 %v2212, %v2141
    %v2214 = vmul.f32 %v2213, %v2212
    %v2215 = vmul.f32 0.5, %v2214
    %v2216 = vsub.f32 1.5, %v2215
    %v2217 = vmul.f32 %v2212, %v2216
    %vm2218 = vweird.f32 %v2141
    %vm2219 = vweird.f32 %v2212
    %vm2220 = vmor %vm2218, %vm2219
    %v2221 = vsel %vm2220, %v2212, %v2217
    %v2222 = vmul.f32 %v2086, %v2151
    %v2223 = vmul.f32 %v2087, %v2161
    %v2224 = vmul.f32 %v2088, %v2171
    %v2225 = vmul.f32 %v2089, %v2181
    %v2226 = vmul.f32 %v2090, %v2191
    %v2227 = vmul.f32 %v2091, %v2201
    %v2228 = vmul.f32 %v2092, %v2211
    %v2229 = vmul.f32 %v2093, %v2221
    %v2230 = vrot.slane %v2224, 4
    %v2231 = vsel %vm106, %v2230, %v2222
    %v2233 = vunpack.c.l.s4 1983009808
    %v2234 = vunpack.c.0.s8 %v2233
    %v2235 = vperm.slane %v2231, %v2234
    %v2236 = vrot.slane %v2225, 4
    %v2237 = vsel %vm106, %v2236, %v2223
    %v2239 = vunpack.c.l.s4 1983009808
    %v2240 = vunpack.c.0.s8 %v2239
    %v2241 = vperm.slane %v2237, %v2240
    %v2242 = vrot.slane %v2228, 4
    %v2243 = vsel %vm106, %v2242, %v2226
    %v2245 = vunpack.c.l.s4 1983009808
    %v2246 = vunpack.c.0.s8 %v2245
    %v2247 = vperm.slane %v2243, %v2246
    %v2248 = vrot.slane %v2229, 4
    %v2249 = vsel %vm106, %v2248, %v2227
    %v2251 = vunpack.c.l.s4 1983009808
    %v2252 = vunpack.c.0.s8 %v2251
    %v2253 = vperm.slane %v2249, %v2252
    %v2254 = vrot.slane %v2241, 4
    %v2255 = vsel %vm106, %v2254, %v2235
    %v2257 = vunpack.c.l.s4 1934713408
    %v2258 = vunpack.c.0.s8 %v2257
    %v2259 = vperm.slane %v2255, %v2258
    %v2260 = vrot.slane %v2253, 4
    %v2261 = vsel %vm106, %v2260, %v2247
    %v2263 = vunpack.c.l.s4 1934713408
    %v2264 = vunpack.c.0.s8 %v2263
    %v2265 = vperm.slane %v2261, %v2264
    %v2266 = vrot.slane %v2265, 4
    %v2267 = vsel %vm106, %v2266, %v2259
    %v2268 = vrot.slane %v2259, 4
    %v2269 = vsel %vm106, %v2265, %v2268
    %2271 = vrot.lane.b32.xlu0 %v2269, 16
    %v2272 = vpop.permute.xlu0 %2271
    %v2274 = vsel %vm1594, %v2267, %v2272
    %v2275 = vperm.slane %v44, 0
    %v2276 = vmul.f32 %v2274, %v2275
    %v2277 = vperm.slane %v44, 1
    %v2278 = vadd.f32 %v2276, %v2277
    %s2279 = scalar_lea.vmem [#allocation2], 64
    %v2280 = vld [vmem:[%s2279] sm:$0xff]
    %v2281 = vld [vmem:[%s2279 + $0x8] sm:$0xff]
    %v2282 = vld [vmem:[%s2279 + $0x10] sm:$0xff]
    %v2283 = vld [vmem:[%s2279 + $0x18] sm:$0xff]
    %v2284 = vld [vmem:[%s2279 + $0x20] sm:$0xff]
    %v2285 = vld [vmem:[%s2279 + $0x28] sm:$0xff]
    %v2286 = vld [vmem:[%s2279 + $0x30] sm:$0xff]
    %v2287 = vld [vmem:[%s2279 + $0x38] sm:$0xff]
    %s2288 = scalar_lea.vmem %s2, 16
    %v2289 = vld [vmem:[%s2288] sm:$0xff]
    %v2290 = vld [vmem:[%s2288 + $0x8] sm:$0x3]
    %v2292 = vsel %vm45, %v2278, 0
    %2294 = vmatpush.msra.mxu0 0.0
    %2295 = vmatpush.msra.mxu0 0.0
    %2296 = vmatpush.msra.mxu0 0.0
    %2297 = vmatpush.msra.mxu0 0.0
    %2298 = vmatpush.msra.mxu0 0.0
    %2299 = vmatpush.msra.mxu0 0.0
    %2300 = vmatpush.msra.mxu0 0.0
    %2301 = vmatpush.msra.mxu0 0.0
    %2302 = vmatpush.msra.mxu0 0.0
    %2303 = vmatpush.msra.mxu0 0.0
    %2304 = vmatpush.msra.mxu0 0.0
    %2305 = vmatpush.msra.mxu0 0.0
    %2306 = vmatpush.msra.mxu0 %v2286
    %2307 = vmatpush.msra.mxu0 %v2284
    %2308 = vmatpush.msra.mxu0 %v2282
    %2309 = vmatpush.msra.mxu0 %v2280
    %2310 = vmatmul.f32.gmra.mxu0 %v2292
    %v2311 = vpop.f32.mrf.mxu0
    %v2312 = vadd.f32 0.0, %v2311
    %2313 = vdwg.mxu0
    %v2314 = vperm.slane %v2289, 0
    %v2315 = vadd.f32 %v2312, %v2314
    %v2316 = vperm.slane %v2289, 1
    %2318 = vrot.lane.b32.xlu0 %v2316, 32
    %v2319 = vpop.permute.xlu0 %2318
    %v2321 = vadd.f32 %v2312, %v2319
    %v2322 = vperm.slane %v2289, 2
    %2324 = vrot.lane.b32.xlu0 %v2322, 64
    %v2325 = vpop.permute.xlu0 %2324
    %v2327 = vadd.f32 %v2312, %v2325
    %2329 = vrot.lane.b32.xlu0 %v2315, 124
    %v2330 = vpop.permute.xlu0 %2329
    %2332 = vrot.lane.b32.xlu0 %v2315, 120
    %v2333 = vpop.permute.xlu0 %2332
    %2335 = vrot.lane.b32.xlu0 %v2315, 116
    %v2336 = vpop.permute.xlu0 %2335
    %2338 = vrot.lane.b32.xlu0 %v2315, 112
    %v2339 = vpop.permute.xlu0 %2338
    %2341 = vrot.lane.b32.xlu0 %v2315, 108
    %v2342 = vpop.permute.xlu0 %2341
    %2344 = vrot.lane.b32.xlu0 %v2315, 104
    %v2345 = vpop.permute.xlu0 %2344
    %2347 = vrot.lane.b32.xlu0 %v2315, 100
    %v2348 = vpop.permute.xlu0 %2347
    %v2350 = vrot.slane %v2333, 4
    %v2351 = vsel %vm106, %v2350, %v2315
    %v2352 = vrot.slane %v2315, 4
    %v2353 = vsel %vm106, %v2333, %v2352
    %v2355 = vunpack.c.l.s4 1983009808
    %v2356 = vunpack.c.0.s8 %v2355
    %v2357 = vperm.slane %v2351, %v2356
    %v2359 = vunpack.c.l.s4 1983009808
    %v2360 = vunpack.c.0.s8 %v2359
    %v2361 = vperm.slane %v2353, %v2360
    %v2362 = vrot.slane %v2336, 4
    %v2363 = vsel %vm106, %v2362, %v2330
    %v2364 = vrot.slane %v2330, 4
    %v2365 = vsel %vm106, %v2336, %v2364
    %v2367 = vunpack.c.l.s4 1983009808
    %v2368 = vunpack.c.0.s8 %v2367
    %v2369 = vperm.slane %v2363, %v2368
    %v2371 = vunpack.c.l.s4 1983009808
    %v2372 = vunpack.c.0.s8 %v2371
    %v2373 = vperm.slane %v2365, %v2372
    %v2374 = vrot.slane %v2345, 4
    %v2375 = vsel %vm106, %v2374, %v2339
    %v2376 = vrot.slane %v2339, 4
    %v2377 = vsel %vm106, %v2345, %v2376
    %v2379 = vunpack.c.l.s4 1983009808
    %v2380 = vunpack.c.0.s8 %v2379
    %v2381 = vperm.slane %v2375, %v2380
    %v2383 = vunpack.c.l.s4 1983009808
    %v2384 = vunpack.c.0.s8 %v2383
    %v2385 = vperm.slane %v2377, %v2384
    %v2386 = vrot.slane %v2348, 4
    %v2387 = vsel %vm106, %v2386, %v2342
    %v2388 = vrot.slane %v2342, 4
    %v2389 = vsel %vm106, %v2348, %v2388
    %v2391 = vunpack.c.l.s4 1983009808
    %v2392 = vunpack.c.0.s8 %v2391
    %v2393 = vperm.slane %v2387, %v2392
    %v2395 = vunpack.c.l.s4 1983009808
    %v2396 = vunpack.c.0.s8 %v2395
    %v2397 = vperm.slane %v2389, %v2396
    %v2398 = vrot.slane %v2369, 4
    %v2399 = vsel %vm106, %v2398, %v2357
    %v2400 = vrot.slane %v2357, 4
    %v2401 = vsel %vm106, %v2369, %v2400
    %v2403 = vunpack.c.l.s4 1934713408
    %v2404 = vunpack.c.0.s8 %v2403
    %v2405 = vperm.slane %v2399, %v2404
    %v2407 = vunpack.c.l.s4 1934713408
    %v2408 = vunpack.c.0.s8 %v2407
    %v2409 = vperm.slane %v2401, %v2408
    %v2410 = vrot.slane %v2373, 4
    %v2411 = vsel %vm106, %v2410, %v2361
    %v2412 = vrot.slane %v2361, 4
    %v2413 = vsel %vm106, %v2373, %v2412
    %v2415 = vunpack.c.l.s4 1934713408
    %v2416 = vunpack.c.0.s8 %v2415
    %v2417 = vperm.slane %v2411, %v2416
    %v2419 = vunpack.c.l.s4 1934713408
    %v2420 = vunpack.c.0.s8 %v2419
    %v2421 = vperm.slane %v2413, %v2420
    %v2422 = vrot.slane %v2393, 4
    %v2423 = vsel %vm106, %v2422, %v2381
    %v2424 = vrot.slane %v2381, 4
    %v2425 = vsel %vm106, %v2393, %v2424
    %v2427 = vunpack.c.l.s4 1934713408
    %v2428 = vunpack.c.0.s8 %v2427
    %v2429 = vperm.slane %v2423, %v2428
    %v2431 = vunpack.c.l.s4 1934713408
    %v2432 = vunpack.c.0.s8 %v2431
    %v2433 = vperm.slane %v2425, %v2432
    %v2434 = vrot.slane %v2397, 4
    %v2435 = vsel %vm106, %v2434, %v2385
    %v2436 = vrot.slane %v2385, 4
    %v2437 = vsel %vm106, %v2397, %v2436
    %v2439 = vunpack.c.l.s4 1934713408
    %v2440 = vunpack.c.0.s8 %v2439
    %v2441 = vperm.slane %v2435, %v2440
    %v2443 = vunpack.c.l.s4 1934713408
    %v2444 = vunpack.c.0.s8 %v2443
    %v2445 = vperm.slane %v2437, %v2444
    %v2446 = vrot.slane %v2429, 4
    %v2447 = vsel %vm106, %v2446, %v2405
    %v2448 = vrot.slane %v2405, 4
    %v2449 = vsel %vm106, %v2429, %v2448
    %v2450 = vrot.slane %v2433, 4
    %v2451 = vsel %vm106, %v2450, %v2409
    %v2452 = vrot.slane %v2409, 4
    %v2453 = vsel %vm106, %v2433, %v2452
    %v2454 = vrot.slane %v2441, 4
    %v2455 = vsel %vm106, %v2454, %v2417
    %v2456 = vrot.slane %v2417, 4
    %v2457 = vsel %vm106, %v2441, %v2456
    %v2458 = vrot.slane %v2445, 4
    %v2459 = vsel %vm106, %v2458, %v2421
    %v2460 = vrot.slane %v2421, 4
    %v2461 = vsel %vm106, %v2445, %v2460
    %v2462 = vrot.slane %v2451, 4
    %v2463 = vsel %vm106, %v2462, %v2447
    %v2464 = vrot.slane %v2447, 4
    %v2465 = vsel %vm106, %v2451, %v2464
    %v2467 = vunpack.c.l.s4 1983009808
    %v2468 = vunpack.c.0.s8 %v2467
    %v2469 = vperm.slane %v2463, %v2468
    %v2471 = vunpack.c.l.s4 1983009808
    %v2472 = vunpack.c.0.s8 %v2471
    %v2473 = vperm.slane %v2465, %v2472
    %v2474 = vrot.slane %v2453, 4
    %v2475 = vsel %vm106, %v2474, %v2449
    %v2476 = vrot.slane %v2449, 4
    %v2477 = vsel %vm106, %v2453, %v2476
    %v2479 = vunpack.c.l.s4 1983009808
    %v2480 = vunpack.c.0.s8 %v2479
    %v2481 = vperm.slane %v2475, %v2480
    %v2483 = vunpack.c.l.s4 1983009808
    %v2484 = vunpack.c.0.s8 %v2483
    %v2485 = vperm.slane %v2477, %v2484
    %v2486 = vrot.slane %v2459, 4
    %v2487 = vsel %vm106, %v2486, %v2455
    %v2488 = vrot.slane %v2455, 4
    %v2489 = vsel %vm106, %v2459, %v2488
    %v2491 = vunpack.c.l.s4 1983009808
    %v2492 = vunpack.c.0.s8 %v2491
    %v2493 = vperm.slane %v2487, %v2492
    %v2495 = vunpack.c.l.s4 1983009808
    %v2496 = vunpack.c.0.s8 %v2495
    %v2497 = vperm.slane %v2489, %v2496
    %v2498 = vrot.slane %v2461, 4
    %v2499 = vsel %vm106, %v2498, %v2457
    %v2500 = vrot.slane %v2457, 4
    %v2501 = vsel %vm106, %v2461, %v2500
    %v2503 = vunpack.c.l.s4 1983009808
    %v2504 = vunpack.c.0.s8 %v2503
    %v2505 = vperm.slane %v2499, %v2504
    %v2507 = vunpack.c.l.s4 1983009808
    %v2508 = vunpack.c.0.s8 %v2507
    %v2509 = vperm.slane %v2501, %v2508
    %v2510 = vrot.slane %v2481, 4
    %v2511 = vsel %vm106, %v2510, %v2469
    %v2512 = vrot.slane %v2469, 4
    %v2513 = vsel %vm106, %v2481, %v2512
    %v2515 = vunpack.c.l.s4 1934713408
    %v2516 = vunpack.c.0.s8 %v2515
    %v2517 = vperm.slane %v2511, %v2516
    %v2519 = vunpack.c.l.s4 1934713408
    %v2520 = vunpack.c.0.s8 %v2519
    %v2521 = vperm.slane %v2513, %v2520
    %v2522 = vrot.slane %v2485, 4
    %v2523 = vsel %vm106, %v2522, %v2473
    %v2524 = vrot.slane %v2473, 4
    %v2525 = vsel %vm106, %v2485, %v2524
    %v2527 = vunpack.c.l.s4 1934713408
    %v2528 = vunpack.c.0.s8 %v2527
    %v2529 = vperm.slane %v2523, %v2528
    %v2531 = vunpack.c.l.s4 1934713408
    %v2532 = vunpack.c.0.s8 %v2531
    %v2533 = vperm.slane %v2525, %v2532
    %v2534 = vrot.slane %v2505, 4
    %v2535 = vsel %vm106, %v2534, %v2493
    %v2536 = vrot.slane %v2493, 4
    %v2537 = vsel %vm106, %v2505, %v2536
    %v2539 = vunpack.c.l.s4 1934713408
    %v2540 = vunpack.c.0.s8 %v2539
    %v2541 = vperm.slane %v2535, %v2540
    %v2543 = vunpack.c.l.s4 1934713408
    %v2544 = vunpack.c.0.s8 %v2543
    %v2545 = vperm.slane %v2537, %v2544
    %v2546 = vrot.slane %v2509, 4
    %v2547 = vsel %vm106, %v2546, %v2497
    %v2548 = vrot.slane %v2497, 4
    %v2549 = vsel %vm106, %v2509, %v2548
    %v2551 = vunpack.c.l.s4 1934713408
    %v2552 = vunpack.c.0.s8 %v2551
    %v2553 = vperm.slane %v2547, %v2552
    %v2555 = vunpack.c.l.s4 1934713408
    %v2556 = vunpack.c.0.s8 %v2555
    %v2557 = vperm.slane %v2549, %v2556
    %v2558 = vrot.slane %v2541, 4
    %v2559 = vsel %vm106, %v2558, %v2517
    %v2560 = vrot.slane %v2517, 4
    %v2561 = vsel %vm106, %v2541, %v2560
    %v2562 = vrot.slane %v2545, 4
    %v2563 = vsel %vm106, %v2562, %v2521
    %v2564 = vrot.slane %v2521, 4
    %v2565 = vsel %vm106, %v2545, %v2564
    %v2566 = vrot.slane %v2553, 4
    %v2567 = vsel %vm106, %v2566, %v2529
    %v2568 = vrot.slane %v2529, 4
    %v2569 = vsel %vm106, %v2553, %v2568
    %v2570 = vrot.slane %v2557, 4
    %v2571 = vsel %vm106, %v2570, %v2533
    %v2572 = vrot.slane %v2533, 4
    %v2573 = vsel %vm106, %v2557, %v2572
    %2575 = vrot.lane.b32.xlu0 %v2321, 124
    %v2576 = vpop.permute.xlu0 %2575
    %2577 = vrot.lane.b32.xlu0 %v2321, 120
    %v2578 = vpop.permute.xlu0 %2577
    %2579 = vrot.lane.b32.xlu0 %v2321, 116
    %v2580 = vpop.permute.xlu0 %2579
    %2581 = vrot.lane.b32.xlu0 %v2321, 112
    %v2582 = vpop.permute.xlu0 %2581
    %2583 = vrot.lane.b32.xlu0 %v2321, 108
    %v2584 = vpop.permute.xlu0 %2583
    %2585 = vrot.lane.b32.xlu0 %v2321, 104
    %v2586 = vpop.permute.xlu0 %2585
    %2587 = vrot.lane.b32.xlu0 %v2321, 100
    %v2588 = vpop.permute.xlu0 %2587
    %2589 = vrot.lane.b32.xlu0 %v2321, 96
    %v2590 = vpop.permute.xlu0 %2589
    %2591 = vrot.lane.b32.xlu0 %v2576, 96
    %v2592 = vpop.permute.xlu0 %2591
    %2593 = vrot.lane.b32.xlu0 %v2578, 96
    %v2594 = vpop.permute.xlu0 %2593
    %2595 = vrot.lane.b32.xlu0 %v2580, 96
    %v2596 = vpop.permute.xlu0 %2595
    %2597 = vrot.lane.b32.xlu0 %v2582, 96
    %v2598 = vpop.permute.xlu0 %2597
    %2599 = vrot.lane.b32.xlu0 %v2584, 96
    %v2600 = vpop.permute.xlu0 %2599
    %2601 = vrot.lane.b32.xlu0 %v2586, 96
    %v2602 = vpop.permute.xlu0 %2601
    %2603 = vrot.lane.b32.xlu0 %v2588, 96
    %v2604 = vpop.permute.xlu0 %2603
    %v2613 = vrot.slane %v2594, 4
    %v2614 = vsel %vm106, %v2613, %v2590
    %v2615 = vrot.slane %v2590, 4
    %v2616 = vsel %vm106, %v2594, %v2615
    %v2618 = vunpack.c.l.s4 1983009808
    %v2619 = vunpack.c.0.s8 %v2618
    %v2620 = vperm.slane %v2614, %v2619
    %v2622 = vunpack.c.l.s4 1983009808
    %v2623 = vunpack.c.0.s8 %v2622
    %v2624 = vperm.slane %v2616, %v2623
    %v2625 = vrot.slane %v2596, 4
    %v2626 = vsel %vm106, %v2625, %v2592
    %v2627 = vrot.slane %v2592, 4
    %v2628 = vsel %vm106, %v2596, %v2627
    %v2630 = vunpack.c.l.s4 1983009808
    %v2631 = vunpack.c.0.s8 %v2630
    %v2632 = vperm.slane %v2626, %v2631
    %v2634 = vunpack.c.l.s4 1983009808
    %v2635 = vunpack.c.0.s8 %v2634
    %v2636 = vperm.slane %v2628, %v2635
    %v2637 = vrot.slane %v2602, 4
    %v2638 = vsel %vm106, %v2637, %v2598
    %v2639 = vrot.slane %v2598, 4
    %v2640 = vsel %vm106, %v2602, %v2639
    %v2642 = vunpack.c.l.s4 1983009808
    %v2643 = vunpack.c.0.s8 %v2642
    %v2644 = vperm.slane %v2638, %v2643
    %v2646 = vunpack.c.l.s4 1983009808
    %v2647 = vunpack.c.0.s8 %v2646
    %v2648 = vperm.slane %v2640, %v2647
    %v2649 = vrot.slane %v2604, 4
    %v2650 = vsel %vm106, %v2649, %v2600
    %v2651 = vrot.slane %v2600, 4
    %v2652 = vsel %vm106, %v2604, %v2651
    %v2654 = vunpack.c.l.s4 1983009808
    %v2655 = vunpack.c.0.s8 %v2654
    %v2656 = vperm.slane %v2650, %v2655
    %v2658 = vunpack.c.l.s4 1983009808
    %v2659 = vunpack.c.0.s8 %v2658
    %v2660 = vperm.slane %v2652, %v2659
    %v2661 = vrot.slane %v2632, 4
    %v2662 = vsel %vm106, %v2661, %v2620
    %v2663 = vrot.slane %v2620, 4
    %v2664 = vsel %vm106, %v2632, %v2663
    %v2666 = vunpack.c.l.s4 1934713408
    %v2667 = vunpack.c.0.s8 %v2666
    %v2668 = vperm.slane %v2662, %v2667
    %v2670 = vunpack.c.l.s4 1934713408
    %v2671 = vunpack.c.0.s8 %v2670
    %v2672 = vperm.slane %v2664, %v2671
    %v2673 = vrot.slane %v2636, 4
    %v2674 = vsel %vm106, %v2673, %v2624
    %v2675 = vrot.slane %v2624, 4
    %v2676 = vsel %vm106, %v2636, %v2675
    %v2678 = vunpack.c.l.s4 1934713408
    %v2679 = vunpack.c.0.s8 %v2678
    %v2680 = vperm.slane %v2674, %v2679
    %v2682 = vunpack.c.l.s4 1934713408
    %v2683 = vunpack.c.0.s8 %v2682
    %v2684 = vperm.slane %v2676, %v2683
    %v2685 = vrot.slane %v2656, 4
    %v2686 = vsel %vm106, %v2685, %v2644
    %v2687 = vrot.slane %v2644, 4
    %v2688 = vsel %vm106, %v2656, %v2687
    %v2690 = vunpack.c.l.s4 1934713408
    %v2691 = vunpack.c.0.s8 %v2690
    %v2692 = vperm.slane %v2686, %v2691
    %v2694 = vunpack.c.l.s4 1934713408
    %v2695 = vunpack.c.0.s8 %v2694
    %v2696 = vperm.slane %v2688, %v2695
    %v2697 = vrot.slane %v2660, 4
    %v2698 = vsel %vm106, %v2697, %v2648
    %v2699 = vrot.slane %v2648, 4
    %v2700 = vsel %vm106, %v2660, %v2699
    %v2702 = vunpack.c.l.s4 1934713408
    %v2703 = vunpack.c.0.s8 %v2702
    %v2704 = vperm.slane %v2698, %v2703
    %v2706 = vunpack.c.l.s4 1934713408
    %v2707 = vunpack.c.0.s8 %v2706
    %v2708 = vperm.slane %v2700, %v2707
    %v2709 = vrot.slane %v2692, 4
    %v2710 = vsel %vm106, %v2709, %v2668
    %v2711 = vrot.slane %v2668, 4
    %v2712 = vsel %vm106, %v2692, %v2711
    %v2713 = vrot.slane %v2696, 4
    %v2714 = vsel %vm106, %v2713, %v2672
    %v2715 = vrot.slane %v2672, 4
    %v2716 = vsel %vm106, %v2696, %v2715
    %v2717 = vrot.slane %v2704, 4
    %v2718 = vsel %vm106, %v2717, %v2680
    %v2719 = vrot.slane %v2680, 4
    %v2720 = vsel %vm106, %v2704, %v2719
    %v2721 = vrot.slane %v2708, 4
    %v2722 = vsel %vm106, %v2721, %v2684
    %v2723 = vrot.slane %v2684, 4
    %v2724 = vsel %vm106, %v2708, %v2723
    %v2725 = vrot.slane %v2714, 4
    %v2726 = vsel %vm106, %v2725, %v2710
    %v2727 = vrot.slane %v2710, 4
    %v2728 = vsel %vm106, %v2714, %v2727
    %v2730 = vunpack.c.l.s4 1983009808
    %v2731 = vunpack.c.0.s8 %v2730
    %v2732 = vperm.slane %v2726, %v2731
    %v2734 = vunpack.c.l.s4 1983009808
    %v2735 = vunpack.c.0.s8 %v2734
    %v2736 = vperm.slane %v2728, %v2735
    %v2737 = vrot.slane %v2716, 4
    %v2738 = vsel %vm106, %v2737, %v2712
    %v2739 = vrot.slane %v2712, 4
    %v2740 = vsel %vm106, %v2716, %v2739
    %v2742 = vunpack.c.l.s4 1983009808
    %v2743 = vunpack.c.0.s8 %v2742
    %v2744 = vperm.slane %v2738, %v2743
    %v2746 = vunpack.c.l.s4 1983009808
    %v2747 = vunpack.c.0.s8 %v2746
    %v2748 = vperm.slane %v2740, %v2747
    %v2749 = vrot.slane %v2722, 4
    %v2750 = vsel %vm106, %v2749, %v2718
    %v2751 = vrot.slane %v2718, 4
    %v2752 = vsel %vm106, %v2722, %v2751
    %v2754 = vunpack.c.l.s4 1983009808
    %v2755 = vunpack.c.0.s8 %v2754
    %v2756 = vperm.slane %v2750, %v2755
    %v2758 = vunpack.c.l.s4 1983009808
    %v2759 = vunpack.c.0.s8 %v2758
    %v2760 = vperm.slane %v2752, %v2759
    %v2761 = vrot.slane %v2724, 4
    %v2762 = vsel %vm106, %v2761, %v2720
    %v2763 = vrot.slane %v2720, 4
    %v2764 = vsel %vm106, %v2724, %v2763
    %v2766 = vunpack.c.l.s4 1983009808
    %v2767 = vunpack.c.0.s8 %v2766
    %v2768 = vperm.slane %v2762, %v2767
    %v2770 = vunpack.c.l.s4 1983009808
    %v2771 = vunpack.c.0.s8 %v2770
    %v2772 = vperm.slane %v2764, %v2771
    %v2773 = vrot.slane %v2744, 4
    %v2774 = vsel %vm106, %v2773, %v2732
    %v2775 = vrot.slane %v2732, 4
    %v2776 = vsel %vm106, %v2744, %v2775
    %v2778 = vunpack.c.l.s4 1934713408
    %v2779 = vunpack.c.0.s8 %v2778
    %v2780 = vperm.slane %v2774, %v2779
    %v2782 = vunpack.c.l.s4 1934713408
    %v2783 = vunpack.c.0.s8 %v2782
    %v2784 = vperm.slane %v2776, %v2783
    %v2785 = vrot.slane %v2748, 4
    %v2786 = vsel %vm106, %v2785, %v2736
    %v2787 = vrot.slane %v2736, 4
    %v2788 = vsel %vm106, %v2748, %v2787
    %v2790 = vunpack.c.l.s4 1934713408
    %v2791 = vunpack.c.0.s8 %v2790
    %v2792 = vperm.slane %v2786, %v2791
    %v2794 = vunpack.c.l.s4 1934713408
    %v2795 = vunpack.c.0.s8 %v2794
    %v2796 = vperm.slane %v2788, %v2795
    %v2797 = vrot.slane %v2768, 4
    %v2798 = vsel %vm106, %v2797, %v2756
    %v2799 = vrot.slane %v2756, 4
    %v2800 = vsel %vm106, %v2768, %v2799
    %v2802 = vunpack.c.l.s4 1934713408
    %v2803 = vunpack.c.0.s8 %v2802
    %v2804 = vperm.slane %v2798, %v2803
    %v2806 = vunpack.c.l.s4 1934713408
    %v2807 = vunpack.c.0.s8 %v2806
    %v2808 = vperm.slane %v2800, %v2807
    %v2809 = vrot.slane %v2772, 4
    %v2810 = vsel %vm106, %v2809, %v2760
    %v2811 = vrot.slane %v2760, 4
    %v2812 = vsel %vm106, %v2772, %v2811
    %v2814 = vunpack.c.l.s4 1934713408
    %v2815 = vunpack.c.0.s8 %v2814
    %v2816 = vperm.slane %v2810, %v2815
    %v2818 = vunpack.c.l.s4 1934713408
    %v2819 = vunpack.c.0.s8 %v2818
    %v2820 = vperm.slane %v2812, %v2819
    %v2821 = vrot.slane %v2804, 4
    %v2822 = vsel %vm106, %v2821, %v2780
    %v2823 = vrot.slane %v2780, 4
    %v2824 = vsel %vm106, %v2804, %v2823
    %v2825 = vrot.slane %v2808, 4
    %v2826 = vsel %vm106, %v2825, %v2784
    %v2827 = vrot.slane %v2784, 4
    %v2828 = vsel %vm106, %v2808, %v2827
    %v2829 = vrot.slane %v2816, 4
    %v2830 = vsel %vm106, %v2829, %v2792
    %v2831 = vrot.slane %v2792, 4
    %v2832 = vsel %vm106, %v2816, %v2831
    %v2833 = vrot.slane %v2820, 4
    %v2834 = vsel %vm106, %v2833, %v2796
    %v2835 = vrot.slane %v2796, 4
    %v2836 = vsel %vm106, %v2820, %v2835
    %2838 = vrot.lane.b32.xlu0 %v2327, 124
    %v2839 = vpop.permute.xlu0 %2838
    %2840 = vrot.lane.b32.xlu0 %v2327, 120
    %v2841 = vpop.permute.xlu0 %2840
    %2842 = vrot.lane.b32.xlu0 %v2327, 116
    %v2843 = vpop.permute.xlu0 %2842
    %2844 = vrot.lane.b32.xlu0 %v2327, 112
    %v2845 = vpop.permute.xlu0 %2844
    %2846 = vrot.lane.b32.xlu0 %v2327, 108
    %v2847 = vpop.permute.xlu0 %2846
    %2848 = vrot.lane.b32.xlu0 %v2327, 104
    %v2849 = vpop.permute.xlu0 %2848
    %2850 = vrot.lane.b32.xlu0 %v2327, 100
    %v2851 = vpop.permute.xlu0 %2850
    %2852 = vrot.lane.b32.xlu0 %v2327, 64
    %v2853 = vpop.permute.xlu0 %2852
    %2854 = vrot.lane.b32.xlu0 %v2839, 64
    %v2855 = vpop.permute.xlu0 %2854
    %2856 = vrot.lane.b32.xlu0 %v2841, 64
    %v2857 = vpop.permute.xlu0 %2856
    %2858 = vrot.lane.b32.xlu0 %v2843, 64
    %v2859 = vpop.permute.xlu0 %2858
    %2860 = vrot.lane.b32.xlu0 %v2845, 64
    %v2861 = vpop.permute.xlu0 %2860
    %2862 = vrot.lane.b32.xlu0 %v2847, 64
    %v2863 = vpop.permute.xlu0 %2862
    %2864 = vrot.lane.b32.xlu0 %v2849, 64
    %v2865 = vpop.permute.xlu0 %2864
    %2866 = vrot.lane.b32.xlu0 %v2851, 64
    %v2867 = vpop.permute.xlu0 %2866
    %v2876 = vrot.slane %v2857, 4
    %v2877 = vsel %vm106, %v2876, %v2853
    %v2878 = vrot.slane %v2853, 4
    %v2879 = vsel %vm106, %v2857, %v2878
    %v2881 = vunpack.c.l.s4 1983009808
    %v2882 = vunpack.c.0.s8 %v2881
    %v2883 = vperm.slane %v2877, %v2882
    %v2885 = vunpack.c.l.s4 1983009808
    %v2886 = vunpack.c.0.s8 %v2885
    %v2887 = vperm.slane %v2879, %v2886
    %v2888 = vrot.slane %v2859, 4
    %v2889 = vsel %vm106, %v2888, %v2855
    %v2890 = vrot.slane %v2855, 4
    %v2891 = vsel %vm106, %v2859, %v2890
    %v2893 = vunpack.c.l.s4 1983009808
    %v2894 = vunpack.c.0.s8 %v2893
    %v2895 = vperm.slane %v2889, %v2894
    %v2897 = vunpack.c.l.s4 1983009808
    %v2898 = vunpack.c.0.s8 %v2897
    %v2899 = vperm.slane %v2891, %v2898
    %v2900 = vrot.slane %v2865, 4
    %v2901 = vsel %vm106, %v2900, %v2861
    %v2902 = vrot.slane %v2861, 4
    %v2903 = vsel %vm106, %v2865, %v2902
    %v2905 = vunpack.c.l.s4 1983009808
    %v2906 = vunpack.c.0.s8 %v2905
    %v2907 = vperm.slane %v2901, %v2906
    %v2909 = vunpack.c.l.s4 1983009808
    %v2910 = vunpack.c.0.s8 %v2909
    %v2911 = vperm.slane %v2903, %v2910
    %v2912 = vrot.slane %v2867, 4
    %v2913 = vsel %vm106, %v2912, %v2863
    %v2914 = vrot.slane %v2863, 4
    %v2915 = vsel %vm106, %v2867, %v2914
    %v2917 = vunpack.c.l.s4 1983009808
    %v2918 = vunpack.c.0.s8 %v2917
    %v2919 = vperm.slane %v2913, %v2918
    %v2921 = vunpack.c.l.s4 1983009808
    %v2922 = vunpack.c.0.s8 %v2921
    %v2923 = vperm.slane %v2915, %v2922
    %v2924 = vrot.slane %v2895, 4
    %v2925 = vsel %vm106, %v2924, %v2883
    %v2926 = vrot.slane %v2883, 4
    %v2927 = vsel %vm106, %v2895, %v2926
    %v2929 = vunpack.c.l.s4 1934713408
    %v2930 = vunpack.c.0.s8 %v2929
    %v2931 = vperm.slane %v2925, %v2930
    %v2933 = vunpack.c.l.s4 1934713408
    %v2934 = vunpack.c.0.s8 %v2933
    %v2935 = vperm.slane %v2927, %v2934
    %v2936 = vrot.slane %v2899, 4
    %v2937 = vsel %vm106, %v2936, %v2887
    %v2938 = vrot.slane %v2887, 4
    %v2939 = vsel %vm106, %v2899, %v2938
    %v2941 = vunpack.c.l.s4 1934713408
    %v2942 = vunpack.c.0.s8 %v2941
    %v2943 = vperm.slane %v2937, %v2942
    %v2945 = vunpack.c.l.s4 1934713408
    %v2946 = vunpack.c.0.s8 %v2945
    %v2947 = vperm.slane %v2939, %v2946
    %v2948 = vrot.slane %v2919, 4
    %v2949 = vsel %vm106, %v2948, %v2907
    %v2950 = vrot.slane %v2907, 4
    %v2951 = vsel %vm106, %v2919, %v2950
    %v2953 = vunpack.c.l.s4 1934713408
    %v2954 = vunpack.c.0.s8 %v2953
    %v2955 = vperm.slane %v2949, %v2954
    %v2957 = vunpack.c.l.s4 1934713408
    %v2958 = vunpack.c.0.s8 %v2957
    %v2959 = vperm.slane %v2951, %v2958
    %v2960 = vrot.slane %v2923, 4
    %v2961 = vsel %vm106, %v2960, %v2911
    %v2962 = vrot.slane %v2911, 4
    %v2963 = vsel %vm106, %v2923, %v2962
    %v2965 = vunpack.c.l.s4 1934713408
    %v2966 = vunpack.c.0.s8 %v2965
    %v2967 = vperm.slane %v2961, %v2966
    %v2969 = vunpack.c.l.s4 1934713408
    %v2970 = vunpack.c.0.s8 %v2969
    %v2971 = vperm.slane %v2963, %v2970
    %v2972 = vrot.slane %v2955, 4
    %v2973 = vsel %vm106, %v2972, %v2931
    %v2974 = vrot.slane %v2931, 4
    %v2975 = vsel %vm106, %v2955, %v2974
    %v2976 = vrot.slane %v2959, 4
    %v2977 = vsel %vm106, %v2976, %v2935
    %v2978 = vrot.slane %v2935, 4
    %v2979 = vsel %vm106, %v2959, %v2978
    %v2980 = vrot.slane %v2967, 4
    %v2981 = vsel %vm106, %v2980, %v2943
    %v2982 = vrot.slane %v2943, 4
    %v2983 = vsel %vm106, %v2967, %v2982
    %v2984 = vrot.slane %v2971, 4
    %v2985 = vsel %vm106, %v2984, %v2947
    %v2986 = vrot.slane %v2947, 4
    %v2987 = vsel %vm106, %v2971, %v2986
    %v2988 = vrot.slane %v2977, 4
    %v2989 = vsel %vm106, %v2988, %v2973
    %v2990 = vrot.slane %v2973, 4
    %v2991 = vsel %vm106, %v2977, %v2990
    %v2993 = vunpack.c.l.s4 1983009808
    %v2994 = vunpack.c.0.s8 %v2993
    %v2995 = vperm.slane %v2989, %v2994
    %v2997 = vunpack.c.l.s4 1983009808
    %v2998 = vunpack.c.0.s8 %v2997
    %v2999 = vperm.slane %v2991, %v2998
    %v3000 = vrot.slane %v2979, 4
    %v3001 = vsel %vm106, %v3000, %v2975
    %v3002 = vrot.slane %v2975, 4
    %v3003 = vsel %vm106, %v2979, %v3002
    %v3005 = vunpack.c.l.s4 1983009808
    %v3006 = vunpack.c.0.s8 %v3005
    %v3007 = vperm.slane %v3001, %v3006
    %v3009 = vunpack.c.l.s4 1983009808
    %v3010 = vunpack.c.0.s8 %v3009
    %v3011 = vperm.slane %v3003, %v3010
    %v3012 = vrot.slane %v2985, 4
    %v3013 = vsel %vm106, %v3012, %v2981
    %v3014 = vrot.slane %v2981, 4
    %v3015 = vsel %vm106, %v2985, %v3014
    %v3017 = vunpack.c.l.s4 1983009808
    %v3018 = vunpack.c.0.s8 %v3017
    %v3019 = vperm.slane %v3013, %v3018
    %v3021 = vunpack.c.l.s4 1983009808
    %v3022 = vunpack.c.0.s8 %v3021
    %v3023 = vperm.slane %v3015, %v3022
    %v3024 = vrot.slane %v2987, 4
    %v3025 = vsel %vm106, %v3024, %v2983
    %v3026 = vrot.slane %v2983, 4
    %v3027 = vsel %vm106, %v2987, %v3026
    %v3029 = vunpack.c.l.s4 1983009808
    %v3030 = vunpack.c.0.s8 %v3029
    %v3031 = vperm.slane %v3025, %v3030
    %v3033 = vunpack.c.l.s4 1983009808
    %v3034 = vunpack.c.0.s8 %v3033
    %v3035 = vperm.slane %v3027, %v3034
    %v3036 = vrot.slane %v3007, 4
    %v3037 = vsel %vm106, %v3036, %v2995
    %v3038 = vrot.slane %v2995, 4
    %v3039 = vsel %vm106, %v3007, %v3038
    %v3041 = vunpack.c.l.s4 1934713408
    %v3042 = vunpack.c.0.s8 %v3041
    %v3043 = vperm.slane %v3037, %v3042
    %v3045 = vunpack.c.l.s4 1934713408
    %v3046 = vunpack.c.0.s8 %v3045
    %v3047 = vperm.slane %v3039, %v3046
    %v3048 = vrot.slane %v3011, 4
    %v3049 = vsel %vm106, %v3048, %v2999
    %v3050 = vrot.slane %v2999, 4
    %v3051 = vsel %vm106, %v3011, %v3050
    %v3053 = vunpack.c.l.s4 1934713408
    %v3054 = vunpack.c.0.s8 %v3053
    %v3055 = vperm.slane %v3049, %v3054
    %v3057 = vunpack.c.l.s4 1934713408
    %v3058 = vunpack.c.0.s8 %v3057
    %v3059 = vperm.slane %v3051, %v3058
    %v3060 = vrot.slane %v3031, 4
    %v3061 = vsel %vm106, %v3060, %v3019
    %v3062 = vrot.slane %v3019, 4
    %v3063 = vsel %vm106, %v3031, %v3062
    %v3065 = vunpack.c.l.s4 1934713408
    %v3066 = vunpack.c.0.s8 %v3065
    %v3067 = vperm.slane %v3061, %v3066
    %v3069 = vunpack.c.l.s4 1934713408
    %v3070 = vunpack.c.0.s8 %v3069
    %v3071 = vperm.slane %v3063, %v3070
    %v3072 = vrot.slane %v3035, 4
    %v3073 = vsel %vm106, %v3072, %v3023
    %v3074 = vrot.slane %v3023, 4
    %v3075 = vsel %vm106, %v3035, %v3074
    %v3077 = vunpack.c.l.s4 1934713408
    %v3078 = vunpack.c.0.s8 %v3077
    %v3079 = vperm.slane %v3073, %v3078
    %v3081 = vunpack.c.l.s4 1934713408
    %v3082 = vunpack.c.0.s8 %v3081
    %v3083 = vperm.slane %v3075, %v3082
    %v3084 = vrot.slane %v3067, 4
    %v3085 = vsel %vm106, %v3084, %v3043
    %v3086 = vrot.slane %v3043, 4
    %v3087 = vsel %vm106, %v3067, %v3086
    %v3088 = vrot.slane %v3071, 4
    %v3089 = vsel %vm106, %v3088, %v3047
    %v3090 = vrot.slane %v3047, 4
    %v3091 = vsel %vm106, %v3071, %v3090
    %v3092 = vrot.slane %v3079, 4
    %v3093 = vsel %vm106, %v3092, %v3055
    %v3094 = vrot.slane %v3055, 4
    %v3095 = vsel %vm106, %v3079, %v3094
    %v3096 = vrot.slane %v3083, 4
    %v3097 = vsel %vm106, %v3096, %v3059
    %v3098 = vrot.slane %v3059, 4
    %v3099 = vsel %vm106, %v3083, %v3098
    %v3101 = vsel %vm856, %v2559, 0
    %v3104 = vsel %vm856, %v2822, 0
    %3106 = vmatpush.xpose.msra.mxu0 0.0
    %3107 = vmatpush.xpose.msra.mxu0 0.0
    %3108 = vmatpush.xpose.msra.mxu0 0.0
    %3109 = vmatpush.xpose.msra.mxu0 0.0
    %3110 = vmatpush.xpose.msra.mxu0 0.0
    %3111 = vmatpush.xpose.msra.mxu0 0.0
    %3112 = vmatpush.xpose.msra.mxu0 0.0
    %3113 = vmatpush.xpose.msra.mxu0 0.0
    %3114 = vmatpush.xpose.msra.mxu0 0.0
    %3115 = vmatpush.xpose.msra.mxu0 0.0
    %3116 = vmatpush.xpose.msra.mxu0 0.0
    %3117 = vmatpush.xpose.msra.mxu0 0.0
    %3118 = vmatpush.xpose.msra.mxu0 0.0
    %3119 = vmatpush.xpose.msra.mxu0 0.0
    %3120 = vmatpush.xpose.msra.mxu0 0.0
    %3121 = vmatpush.xpose.msra.mxu0 %v3104
    %3122 = vmatmul.f32.gmra.mxu0 %v3101
    %v3123 = vpop.f32.mrf.mxu0
    %v3124 = vadd.f32 0.0, %v3123
    %3125 = vdwg.mxu0
    %v3127 = vsel %vm856, %v2561, 0
    %v3130 = vsel %vm856, %v2824, 0
    %3132 = vmatpush.xpose.msra.mxu0 0.0
    %3133 = vmatpush.xpose.msra.mxu0 0.0
    %3134 = vmatpush.xpose.msra.mxu0 0.0
    %3135 = vmatpush.xpose.msra.mxu0 0.0
    %3136 = vmatpush.xpose.msra.mxu0 0.0
    %3137 = vmatpush.xpose.msra.mxu0 0.0
    %3138 = vmatpush.xpose.msra.mxu0 0.0
    %3139 = vmatpush.xpose.msra.mxu0 0.0
    %3140 = vmatpush.xpose.msra.mxu0 0.0
    %3141 = vmatpush.xpose.msra.mxu0 0.0
    %3142 = vmatpush.xpose.msra.mxu0 0.0
    %3143 = vmatpush.xpose.msra.mxu0 0.0
    %3144 = vmatpush.xpose.msra.mxu0 0.0
    %3145 = vmatpush.xpose.msra.mxu0 0.0
    %3146 = vmatpush.xpose.msra.mxu0 0.0
    %3147 = vmatpush.xpose.msra.mxu0 %v3130
    %3148 = vmatmul.f32.gmra.mxu0 %v3127
    %v3149 = vpop.f32.mrf.mxu0
    %v3150 = vadd.f32 0.0, %v3149
    %3151 = vdwg.mxu0
    %v3153 = vsel %vm856, %v2563, 0
    %v3156 = vsel %vm856, %v2826, 0
    %3158 = vmatpush.xpose.msra.mxu0 0.0
    %3159 = vmatpush.xpose.msra.mxu0 0.0
    %3160 = vmatpush.xpose.msra.mxu0 0.0
    %3161 = vmatpush.xpose.msra.mxu0 0.0
    %3162 = vmatpush.xpose.msra.mxu0 0.0
    %3163 = vmatpush.xpose.msra.mxu0 0.0
    %3164 = vmatpush.xpose.msra.mxu0 0.0
    %3165 = vmatpush.xpose.msra.mxu0 0.0
    %3166 = vmatpush.xpose.msra.mxu0 0.0
    %3167 = vmatpush.xpose.msra.mxu0 0.0
    %3168 = vmatpush.xpose.msra.mxu0 0.0
    %3169 = vmatpush.xpose.msra.mxu0 0.0
    %3170 = vmatpush.xpose.msra.mxu0 0.0
    %3171 = vmatpush.xpose.msra.mxu0 0.0
    %3172 = vmatpush.xpose.msra.mxu0 0.0
    %3173 = vmatpush.xpose.msra.mxu0 %v3156
    %3174 = vmatmul.f32.gmra.mxu0 %v3153
    %v3175 = vpop.f32.mrf.mxu0
    %v3176 = vadd.f32 0.0, %v3175
    %3177 = vdwg.mxu0
    %v3179 = vsel %vm856, %v2565, 0
    %v3182 = vsel %vm856, %v2828, 0
    %3184 = vmatpush.xpose.msra.mxu0 0.0
    %3185 = vmatpush.xpose.msra.mxu0 0.0
    %3186 = vmatpush.xpose.msra.mxu0 0.0
    %3187 = vmatpush.xpose.msra.mxu0 0.0
    %3188 = vmatpush.xpose.msra.mxu0 0.0
    %3189 = vmatpush.xpose.msra.mxu0 0.0
    %3190 = vmatpush.xpose.msra.mxu0 0.0
    %3191 = vmatpush.xpose.msra.mxu0 0.0
    %3192 = vmatpush.xpose.msra.mxu0 0.0
    %3193 = vmatpush.xpose.msra.mxu0 0.0
    %3194 = vmatpush.xpose.msra.mxu0 0.0
    %3195 = vmatpush.xpose.msra.mxu0 0.0
    %3196 = vmatpush.xpose.msra.mxu0 0.0
    %3197 = vmatpush.xpose.msra.mxu0 0.0
    %3198 = vmatpush.xpose.msra.mxu0 0.0
    %3199 = vmatpush.xpose.msra.mxu0 %v3182
    %3200 = vmatmul.f32.gmra.mxu0 %v3179
    %v3201 = vpop.f32.mrf.mxu0
    %v3202 = vadd.f32 0.0, %v3201
    %3203 = vdwg.mxu0
    %v3205 = vsel %vm856, %v2567, 0
    %v3208 = vsel %vm856, %v2830, 0
    %3210 = vmatpush.xpose.msra.mxu0 0.0
    %3211 = vmatpush.xpose.msra.mxu0 0.0
    %3212 = vmatpush.xpose.msra.mxu0 0.0
    %3213 = vmatpush.xpose.msra.mxu0 0.0
    %3214 = vmatpush.xpose.msra.mxu0 0.0
    %3215 = vmatpush.xpose.msra.mxu0 0.0
    %3216 = vmatpush.xpose.msra.mxu0 0.0
    %3217 = vmatpush.xpose.msra.mxu0 0.0
    %3218 = vmatpush.xpose.msra.mxu0 0.0
    %3219 = vmatpush.xpose.msra.mxu0 0.0
    %3220 = vmatpush.xpose.msra.mxu0 0.0
    %3221 = vmatpush.xpose.msra.mxu0 0.0
    %3222 = vmatpush.xpose.msra.mxu0 0.0
    %3223 = vmatpush.xpose.msra.mxu0 0.0
    %3224 = vmatpush.xpose.msra.mxu0 0.0
    %3225 = vmatpush.xpose.msra.mxu0 %v3208
    %3226 = vmatmul.f32.gmra.mxu0 %v3205
    %v3227 = vpop.f32.mrf.mxu0
    %v3228 = vadd.f32 0.0, %v3227
    %3229 = vdwg.mxu0
    %v3231 = vsel %vm856, %v2569, 0
    %v3234 = vsel %vm856, %v2832, 0
    %3236 = vmatpush.xpose.msra.mxu0 0.0
    %3237 = vmatpush.xpose.msra.mxu0 0.0
    %3238 = vmatpush.xpose.msra.mxu0 0.0
    %3239 = vmatpush.xpose.msra.mxu0 0.0
    %3240 = vmatpush.xpose.msra.mxu0 0.0
    %3241 = vmatpush.xpose.msra.mxu0 0.0
    %3242 = vmatpush.xpose.msra.mxu0 0.0
    %3243 = vmatpush.xpose.msra.mxu0 0.0
    %3244 = vmatpush.xpose.msra.mxu0 0.0
    %3245 = vmatpush.xpose.msra.mxu0 0.0
    %3246 = vmatpush.xpose.msra.mxu0 0.0
    %3247 = vmatpush.xpose.msra.mxu0 0.0
    %3248 = vmatpush.xpose.msra.mxu0 0.0
    %3249 = vmatpush.xpose.msra.mxu0 0.0
    %3250 = vmatpush.xpose.msra.mxu0 0.0
    %3251 = vmatpush.xpose.msra.mxu0 %v3234
    %3252 = vmatmul.f32.gmra.mxu0 %v3231
    %v3253 = vpop.f32.mrf.mxu0
    %v3254 = vadd.f32 0.0, %v3253
    %3255 = vdwg.mxu0
    %v3257 = vsel %vm856, %v2571, 0
    %v3260 = vsel %vm856, %v2834, 0
    %3262 = vmatpush.xpose.msra.mxu0 0.0
    %3263 = vmatpush.xpose.msra.mxu0 0.0
    %3264 = vmatpush.xpose.msra.mxu0 0.0
    %3265 = vmatpush.xpose.msra.mxu0 0.0
    %3266 = vmatpush.xpose.msra.mxu0 0.0
    %3267 = vmatpush.xpose.msra.mxu0 0.0
    %3268 = vmatpush.xpose.msra.mxu0 0.0
    %3269 = vmatpush.xpose.msra.mxu0 0.0
    %3270 = vmatpush.xpose.msra.mxu0 0.0
    %3271 = vmatpush.xpose.msra.mxu0 0.0
    %3272 = vmatpush.xpose.msra.mxu0 0.0
    %3273 = vmatpush.xpose.msra.mxu0 0.0
    %3274 = vmatpush.xpose.msra.mxu0 0.0
    %3275 = vmatpush.xpose.msra.mxu0 0.0
    %3276 = vmatpush.xpose.msra.mxu0 0.0
    %3277 = vmatpush.xpose.msra.mxu0 %v3260
    %3278 = vmatmul.f32.gmra.mxu0 %v3257
    %v3279 = vpop.f32.mrf.mxu0
    %v3280 = vadd.f32 0.0, %v3279
    %3281 = vdwg.mxu0
    %v3283 = vsel %vm856, %v2573, 0
    %v3286 = vsel %vm856, %v2836, 0
    %3288 = vmatpush.xpose.msra.mxu0 0.0
    %3289 = vmatpush.xpose.msra.mxu0 0.0
    %3290 = vmatpush.xpose.msra.mxu0 0.0
    %3291 = vmatpush.xpose.msra.mxu0 0.0
    %3292 = vmatpush.xpose.msra.mxu0 0.0
    %3293 = vmatpush.xpose.msra.mxu0 0.0
    %3294 = vmatpush.xpose.msra.mxu0 0.0
    %3295 = vmatpush.xpose.msra.mxu0 0.0
    %3296 = vmatpush.xpose.msra.mxu0 0.0
    %3297 = vmatpush.xpose.msra.mxu0 0.0
    %3298 = vmatpush.xpose.msra.mxu0 0.0
    %3299 = vmatpush.xpose.msra.mxu0 0.0
    %3300 = vmatpush.xpose.msra.mxu0 0.0
    %3301 = vmatpush.xpose.msra.mxu0 0.0
    %3302 = vmatpush.xpose.msra.mxu0 0.0
    %3303 = vmatpush.xpose.msra.mxu0 %v3286
    %3304 = vmatmul.f32.gmra.mxu0 %v3283
    %v3305 = vpop.f32.mrf.mxu0
    %v3306 = vadd.f32 0.0, %v3305
    %3307 = vdwg.mxu0
    %v3308 = vsel %vm1065, %v3124, -inf
    %3309 = vmax.xlane.f32.xlu0 %v3308
    %v3310 = vpop.xlane.xlu0 %3309
    %v3311 = vsel %vm1065, %v3150, -inf
    %3312 = vmax.xlane.f32.xlu0 %v3311
    %v3313 = vpop.xlane.xlu0 %3312
    %v3314 = vsel %vm1065, %v3176, -inf
    %3315 = vmax.xlane.f32.xlu0 %v3314
    %v3316 = vpop.xlane.xlu0 %3315
    %v3317 = vsel %vm1065, %v3202, -inf
    %3318 = vmax.xlane.f32.xlu0 %v3317
    %v3319 = vpop.xlane.xlu0 %3318
    %v3320 = vsel %vm1065, %v3228, -inf
    %3321 = vmax.xlane.f32.xlu0 %v3320
    %v3322 = vpop.xlane.xlu0 %3321
    %v3323 = vsel %vm1065, %v3254, -inf
    %3324 = vmax.xlane.f32.xlu0 %v3323
    %v3325 = vpop.xlane.xlu0 %3324
    %v3326 = vsel %vm1065, %v3280, -inf
    %3327 = vmax.xlane.f32.xlu0 %v3326
    %v3328 = vpop.xlane.xlu0 %3327
    %v3329 = vsel %vm1065, %v3306, -inf
    %3330 = vmax.xlane.f32.xlu0 %v3329
    %v3331 = vpop.xlane.xlu0 %3330
    %v3332 = vsub.f32 %v3124, %v3310
    %v3333 = vsub.f32 %v3150, %v3313
    %v3334 = vsub.f32 %v3176, %v3316
    %v3335 = vsub.f32 %v3202, %v3319
    %v3336 = vsub.f32 %v3228, %v3322
    %v3337 = vsub.f32 %v3254, %v3325
    %v3338 = vsub.f32 %v3280, %v3328
    %v3339 = vsub.f32 %v3306, %v3331
    %v3340 = vmul.f32 %v3332, 1.442695
    %v3341 = vpow.pop %v3340
    %v3342 = vmul.f32 %v3333, 1.442695
    %v3343 = vpow.pop %v3342
    %v3344 = vmul.f32 %v3334, 1.442695
    %v3345 = vpow.pop %v3344
    %v3346 = vmul.f32 %v3335, 1.442695
    %v3347 = vpow.pop %v3346
    %v3348 = vmul.f32 %v3336, 1.442695
    %v3349 = vpow.pop %v3348
    %v3350 = vmul.f32 %v3337, 1.442695
    %v3351 = vpow.pop %v3350
    %v3352 = vmul.f32 %v3338, 1.442695
    %v3353 = vpow.pop %v3352
    %v3354 = vmul.f32 %v3339, 1.442695
    %v3355 = vpow.pop %v3354
    %v3356 = vsel %vm1065, %v3341, 0.0
    %3357 = vadd.xlane.f32.xlu0 %v3356
    %v3358 = vpop.xlane.xlu0 %3357
    %v3359 = vsel %vm1065, %v3343, 0.0
    %3360 = vadd.xlane.f32.xlu0 %v3359
    %v3361 = vpop.xlane.xlu0 %3360
    %v3362 = vsel %vm1065, %v3345, 0.0
    %3363 = vadd.xlane.f32.xlu0 %v3362
    %v3364 = vpop.xlane.xlu0 %3363
    %v3365 = vsel %vm1065, %v3347, 0.0
    %3366 = vadd.xlane.f32.xlu0 %v3365
    %v3367 = vpop.xlane.xlu0 %3366
    %v3368 = vsel %vm1065, %v3349, 0.0
    %3369 = vadd.xlane.f32.xlu0 %v3368
    %v3370 = vpop.xlane.xlu0 %3369
    %v3371 = vsel %vm1065, %v3351, 0.0
    %3372 = vadd.xlane.f32.xlu0 %v3371
    %v3373 = vpop.xlane.xlu0 %3372
    %v3374 = vsel %vm1065, %v3353, 0.0
    %3375 = vadd.xlane.f32.xlu0 %v3374
    %v3376 = vpop.xlane.xlu0 %3375
    %v3377 = vsel %vm1065, %v3355, 0.0
    %3378 = vadd.xlane.f32.xlu0 %v3377
    %v3379 = vpop.xlane.xlu0 %3378
    %v3380 = vrcp.pop %v3358
    %v3381 = vrcp.pop %v3361
    %v3382 = vrcp.pop %v3364
    %v3383 = vrcp.pop %v3367
    %v3384 = vrcp.pop %v3370
    %v3385 = vrcp.pop %v3373
    %v3386 = vrcp.pop %v3376
    %v3387 = vrcp.pop %v3379
    %v3388 = vmul.f32 %v3341, %v3380
    %v3389 = vmul.f32 %v3343, %v3381
    %v3390 = vmul.f32 %v3345, %v3382
    %v3391 = vmul.f32 %v3347, %v3383
    %v3392 = vmul.f32 %v3349, %v3384
    %v3393 = vmul.f32 %v3351, %v3385
    %v3394 = vmul.f32 %v3353, %v3386
    %v3395 = vmul.f32 %v3355, %v3387
    %v3397 = vsel %vm1065, %v3388, 0
    %3399 = vmatpush.msra.mxu0 0.0
    %3400 = vmatpush.msra.mxu0 0.0
    %3401 = vmatpush.msra.mxu0 0.0
    %3402 = vmatpush.msra.mxu0 0.0
    %3403 = vmatpush.msra.mxu0 0.0
    %3404 = vmatpush.msra.mxu0 0.0
    %3405 = vmatpush.msra.mxu0 0.0
    %3406 = vmatpush.msra.mxu0 0.0
    %3407 = vmatpush.msra.mxu0 0.0
    %3408 = vmatpush.msra.mxu0 0.0
    %3409 = vmatpush.msra.mxu0 0.0
    %3410 = vmatpush.msra.mxu0 0.0
    %3411 = vmatpush.msra.mxu0 0.0
    %3412 = vmatpush.msra.mxu0 0.0
    %3413 = vmatpush.msra.mxu0 0.0
    %3414 = vmatpush.msra.mxu0 %v3085
    %3415 = vmatmul.f32.gmra.mxu0 %v3397
    %v3416 = vpop.f32.mrf.mxu0
    %v3417 = vadd.f32 0.0, %v3416
    %3418 = vdwg.mxu0
    %v3420 = vsel %vm1065, %v3389, 0
    %3422 = vmatpush.msra.mxu0 0.0
    %3423 = vmatpush.msra.mxu0 0.0
    %3424 = vmatpush.msra.mxu0 0.0
    %3425 = vmatpush.msra.mxu0 0.0
    %3426 = vmatpush.msra.mxu0 0.0
    %3427 = vmatpush.msra.mxu0 0.0
    %3428 = vmatpush.msra.mxu0 0.0
    %3429 = vmatpush.msra.mxu0 0.0
    %3430 = vmatpush.msra.mxu0 0.0
    %3431 = vmatpush.msra.mxu0 0.0
    %3432 = vmatpush.msra.mxu0 0.0
    %3433 = vmatpush.msra.mxu0 0.0
    %3434 = vmatpush.msra.mxu0 0.0
    %3435 = vmatpush.msra.mxu0 0.0
    %3436 = vmatpush.msra.mxu0 0.0
    %3437 = vmatpush.msra.mxu0 %v3087
    %3438 = vmatmul.f32.gmra.mxu0 %v3420
    %v3439 = vpop.f32.mrf.mxu0
    %v3440 = vadd.f32 0.0, %v3439
    %3441 = vdwg.mxu0
    %v3443 = vsel %vm1065, %v3390, 0
    %3445 = vmatpush.msra.mxu0 0.0
    %3446 = vmatpush.msra.mxu0 0.0
    %3447 = vmatpush.msra.mxu0 0.0
    %3448 = vmatpush.msra.mxu0 0.0
    %3449 = vmatpush.msra.mxu0 0.0
    %3450 = vmatpush.msra.mxu0 0.0
    %3451 = vmatpush.msra.mxu0 0.0
    %3452 = vmatpush.msra.mxu0 0.0
    %3453 = vmatpush.msra.mxu0 0.0
    %3454 = vmatpush.msra.mxu0 0.0
    %3455 = vmatpush.msra.mxu0 0.0
    %3456 = vmatpush.msra.mxu0 0.0
    %3457 = vmatpush.msra.mxu0 0.0
    %3458 = vmatpush.msra.mxu0 0.0
    %3459 = vmatpush.msra.mxu0 0.0
    %3460 = vmatpush.msra.mxu0 %v3089
    %3461 = vmatmul.f32.gmra.mxu0 %v3443
    %v3462 = vpop.f32.mrf.mxu0
    %v3463 = vadd.f32 0.0, %v3462
    %3464 = vdwg.mxu0
    %v3466 = vsel %vm1065, %v3391, 0
    %3468 = vmatpush.msra.mxu0 0.0
    %3469 = vmatpush.msra.mxu0 0.0
    %3470 = vmatpush.msra.mxu0 0.0
    %3471 = vmatpush.msra.mxu0 0.0
    %3472 = vmatpush.msra.mxu0 0.0
    %3473 = vmatpush.msra.mxu0 0.0
    %3474 = vmatpush.msra.mxu0 0.0
    %3475 = vmatpush.msra.mxu0 0.0
    %3476 = vmatpush.msra.mxu0 0.0
    %3477 = vmatpush.msra.mxu0 0.0
    %3478 = vmatpush.msra.mxu0 0.0
    %3479 = vmatpush.msra.mxu0 0.0
    %3480 = vmatpush.msra.mxu0 0.0
    %3481 = vmatpush.msra.mxu0 0.0
    %3482 = vmatpush.msra.mxu0 0.0
    %3483 = vmatpush.msra.mxu0 %v3091
    %3484 = vmatmul.f32.gmra.mxu0 %v3466
    %v3485 = vpop.f32.mrf.mxu0
    %v3486 = vadd.f32 0.0, %v3485
    %3487 = vdwg.mxu0
    %v3489 = vsel %vm1065, %v3392, 0
    %3491 = vmatpush.msra.mxu0 0.0
    %3492 = vmatpush.msra.mxu0 0.0
    %3493 = vmatpush.msra.mxu0 0.0
    %3494 = vmatpush.msra.mxu0 0.0
    %3495 = vmatpush.msra.mxu0 0.0
    %3496 = vmatpush.msra.mxu0 0.0
    %3497 = vmatpush.msra.mxu0 0.0
    %3498 = vmatpush.msra.mxu0 0.0
    %3499 = vmatpush.msra.mxu0 0.0
    %3500 = vmatpush.msra.mxu0 0.0
    %3501 = vmatpush.msra.mxu0 0.0
    %3502 = vmatpush.msra.mxu0 0.0
    %3503 = vmatpush.msra.mxu0 0.0
    %3504 = vmatpush.msra.mxu0 0.0
    %3505 = vmatpush.msra.mxu0 0.0
    %3506 = vmatpush.msra.mxu0 %v3093
    %3507 = vmatmul.f32.gmra.mxu0 %v3489
    %v3508 = vpop.f32.mrf.mxu0
    %v3509 = vadd.f32 0.0, %v3508
    %3510 = vdwg.mxu0
    %v3512 = vsel %vm1065, %v3393, 0
    %3514 = vmatpush.msra.mxu0 0.0
    %3515 = vmatpush.msra.mxu0 0.0
    %3516 = vmatpush.msra.mxu0 0.0
    %3517 = vmatpush.msra.mxu0 0.0
    %3518 = vmatpush.msra.mxu0 0.0
    %3519 = vmatpush.msra.mxu0 0.0
    %3520 = vmatpush.msra.mxu0 0.0
    %3521 = vmatpush.msra.mxu0 0.0
    %3522 = vmatpush.msra.mxu0 0.0
    %3523 = vmatpush.msra.mxu0 0.0
    %3524 = vmatpush.msra.mxu0 0.0
    %3525 = vmatpush.msra.mxu0 0.0
    %3526 = vmatpush.msra.mxu0 0.0
    %3527 = vmatpush.msra.mxu0 0.0
    %3528 = vmatpush.msra.mxu0 0.0
    %3529 = vmatpush.msra.mxu0 %v3095
    %3530 = vmatmul.f32.gmra.mxu0 %v3512
    %v3531 = vpop.f32.mrf.mxu0
    %v3532 = vadd.f32 0.0, %v3531
    %3533 = vdwg.mxu0
    %v3535 = vsel %vm1065, %v3394, 0
    %3537 = vmatpush.msra.mxu0 0.0
    %3538 = vmatpush.msra.mxu0 0.0
    %3539 = vmatpush.msra.mxu0 0.0
    %3540 = vmatpush.msra.mxu0 0.0
    %3541 = vmatpush.msra.mxu0 0.0
    %3542 = vmatpush.msra.mxu0 0.0
    %3543 = vmatpush.msra.mxu0 0.0
    %3544 = vmatpush.msra.mxu0 0.0
    %3545 = vmatpush.msra.mxu0 0.0
    %3546 = vmatpush.msra.mxu0 0.0
    %3547 = vmatpush.msra.mxu0 0.0
    %3548 = vmatpush.msra.mxu0 0.0
    %3549 = vmatpush.msra.mxu0 0.0
    %3550 = vmatpush.msra.mxu0 0.0
    %3551 = vmatpush.msra.mxu0 0.0
    %3552 = vmatpush.msra.mxu0 %v3097
    %3553 = vmatmul.f32.gmra.mxu0 %v3535
    %v3554 = vpop.f32.mrf.mxu0
    %v3555 = vadd.f32 0.0, %v3554
    %3556 = vdwg.mxu0
    %v3558 = vsel %vm1065, %v3395, 0
    %3560 = vmatpush.msra.mxu0 0.0
    %3561 = vmatpush.msra.mxu0 0.0
    %3562 = vmatpush.msra.mxu0 0.0
    %3563 = vmatpush.msra.mxu0 0.0
    %3564 = vmatpush.msra.mxu0 0.0
    %3565 = vmatpush.msra.mxu0 0.0
    %3566 = vmatpush.msra.mxu0 0.0
    %3567 = vmatpush.msra.mxu0 0.0
    %3568 = vmatpush.msra.mxu0 0.0
    %3569 = vmatpush.msra.mxu0 0.0
    %3570 = vmatpush.msra.mxu0 0.0
    %3571 = vmatpush.msra.mxu0 0.0
    %3572 = vmatpush.msra.mxu0 0.0
    %3573 = vmatpush.msra.mxu0 0.0
    %3574 = vmatpush.msra.mxu0 0.0
    %3575 = vmatpush.msra.mxu0 %v3099
    %3576 = vmatmul.f32.gmra.mxu0 %v3558
    %v3577 = vpop.f32.mrf.mxu0
    %v3578 = vadd.f32 0.0, %v3577
    %3579 = vdwg.mxu0
    %v3580 = vrot.slane %v3463, 4
    %v3581 = vsel %vm106, %v3580, %v3417
    %v3582 = vrot.slane %v3417, 4
    %v3583 = vsel %vm106, %v3463, %v3582
    %v3585 = vunpack.c.l.s4 1983009808
    %v3586 = vunpack.c.0.s8 %v3585
    %v3587 = vperm.slane %v3581, %v3586
    %v3589 = vunpack.c.l.s4 1983009808
    %v3590 = vunpack.c.0.s8 %v3589
    %v3591 = vperm.slane %v3583, %v3590
    %v3592 = vrot.slane %v3486, 4
    %v3593 = vsel %vm106, %v3592, %v3440
    %v3594 = vrot.slane %v3440, 4
    %v3595 = vsel %vm106, %v3486, %v3594
    %v3597 = vunpack.c.l.s4 1983009808
    %v3598 = vunpack.c.0.s8 %v3597
    %v3599 = vperm.slane %v3593, %v3598
    %v3601 = vunpack.c.l.s4 1983009808
    %v3602 = vunpack.c.0.s8 %v3601
    %v3603 = vperm.slane %v3595, %v3602
    %v3604 = vrot.slane %v3555, 4
    %v3605 = vsel %vm106, %v3604, %v3509
    %v3606 = vrot.slane %v3509, 4
    %v3607 = vsel %vm106, %v3555, %v3606
    %v3609 = vunpack.c.l.s4 1983009808
    %v3610 = vunpack.c.0.s8 %v3609
    %v3611 = vperm.slane %v3605, %v3610
    %v3613 = vunpack.c.l.s4 1983009808
    %v3614 = vunpack.c.0.s8 %v3613
    %v3615 = vperm.slane %v3607, %v3614
    %v3616 = vrot.slane %v3578, 4
    %v3617 = vsel %vm106, %v3616, %v3532
    %v3618 = vrot.slane %v3532, 4
    %v3619 = vsel %vm106, %v3578, %v3618
    %v3621 = vunpack.c.l.s4 1983009808
    %v3622 = vunpack.c.0.s8 %v3621
    %v3623 = vperm.slane %v3617, %v3622
    %v3625 = vunpack.c.l.s4 1983009808
    %v3626 = vunpack.c.0.s8 %v3625
    %v3627 = vperm.slane %v3619, %v3626
    %v3628 = vrot.slane %v3599, 4
    %v3629 = vsel %vm106, %v3628, %v3587
    %v3630 = vrot.slane %v3587, 4
    %v3631 = vsel %vm106, %v3599, %v3630
    %v3633 = vunpack.c.l.s4 1934713408
    %v3634 = vunpack.c.0.s8 %v3633
    %v3635 = vperm.slane %v3629, %v3634
    %v3637 = vunpack.c.l.s4 1934713408
    %v3638 = vunpack.c.0.s8 %v3637
    %v3639 = vperm.slane %v3631, %v3638
    %v3640 = vrot.slane %v3603, 4
    %v3641 = vsel %vm106, %v3640, %v3591
    %v3642 = vrot.slane %v3591, 4
    %v3643 = vsel %vm106, %v3603, %v3642
    %v3645 = vunpack.c.l.s4 1934713408
    %v3646 = vunpack.c.0.s8 %v3645
    %v3647 = vperm.slane %v3641, %v3646
    %v3649 = vunpack.c.l.s4 1934713408
    %v3650 = vunpack.c.0.s8 %v3649
    %v3651 = vperm.slane %v3643, %v3650
    %v3652 = vrot.slane %v3623, 4
    %v3653 = vsel %vm106, %v3652, %v3611
    %v3654 = vrot.slane %v3611, 4
    %v3655 = vsel %vm106, %v3623, %v3654
    %v3657 = vunpack.c.l.s4 1934713408
    %v3658 = vunpack.c.0.s8 %v3657
    %v3659 = vperm.slane %v3653, %v3658
    %v3661 = vunpack.c.l.s4 1934713408
    %v3662 = vunpack.c.0.s8 %v3661
    %v3663 = vperm.slane %v3655, %v3662
    %v3664 = vrot.slane %v3627, 4
    %v3665 = vsel %vm106, %v3664, %v3615
    %v3666 = vrot.slane %v3615, 4
    %v3667 = vsel %vm106, %v3627, %v3666
    %v3669 = vunpack.c.l.s4 1934713408
    %v3670 = vunpack.c.0.s8 %v3669
    %v3671 = vperm.slane %v3665, %v3670
    %v3673 = vunpack.c.l.s4 1934713408
    %v3674 = vunpack.c.0.s8 %v3673
    %v3675 = vperm.slane %v3667, %v3674
    %v3676 = vrot.slane %v3659, 4
    %v3677 = vsel %vm106, %v3676, %v3635
    %v3678 = vrot.slane %v3635, 4
    %v3679 = vsel %vm106, %v3659, %v3678
    %v3680 = vrot.slane %v3663, 4
    %v3681 = vsel %vm106, %v3680, %v3639
    %v3682 = vrot.slane %v3639, 4
    %v3683 = vsel %vm106, %v3663, %v3682
    %v3684 = vrot.slane %v3671, 4
    %v3685 = vsel %vm106, %v3684, %v3647
    %v3686 = vrot.slane %v3647, 4
    %v3687 = vsel %vm106, %v3671, %v3686
    %v3688 = vrot.slane %v3675, 4
    %v3689 = vsel %vm106, %v3688, %v3651
    %v3690 = vrot.slane %v3651, 4
    %v3691 = vsel %vm106, %v3675, %v3690
    %v3692 = vrot.slane %v3681, 4
    %v3693 = vsel %vm106, %v3692, %v3677
    %v3694 = vrot.slane %v3677, 4
    %v3695 = vsel %vm106, %v3681, %v3694
    %v3697 = vunpack.c.l.s4 1983009808
    %v3698 = vunpack.c.0.s8 %v3697
    %v3699 = vperm.slane %v3693, %v3698
    %v3701 = vunpack.c.l.s4 1983009808
    %v3702 = vunpack.c.0.s8 %v3701
    %v3703 = vperm.slane %v3695, %v3702
    %v3704 = vrot.slane %v3683, 4
    %v3705 = vsel %vm106, %v3704, %v3679
    %v3706 = vrot.slane %v3679, 4
    %v3707 = vsel %vm106, %v3683, %v3706
    %v3709 = vunpack.c.l.s4 1983009808
    %v3710 = vunpack.c.0.s8 %v3709
    %v3711 = vperm.slane %v3705, %v3710
    %v3713 = vunpack.c.l.s4 1983009808
    %v3714 = vunpack.c.0.s8 %v3713
    %v3715 = vperm.slane %v3707, %v3714
    %v3716 = vrot.slane %v3689, 4
    %v3717 = vsel %vm106, %v3716, %v3685
    %v3718 = vrot.slane %v3685, 4
    %v3719 = vsel %vm106, %v3689, %v3718
    %v3721 = vunpack.c.l.s4 1983009808
    %v3722 = vunpack.c.0.s8 %v3721
    %v3723 = vperm.slane %v3717, %v3722
    %v3725 = vunpack.c.l.s4 1983009808
    %v3726 = vunpack.c.0.s8 %v3725
    %v3727 = vperm.slane %v3719, %v3726
    %v3728 = vrot.slane %v3691, 4
    %v3729 = vsel %vm106, %v3728, %v3687
    %v3730 = vrot.slane %v3687, 4
    %v3731 = vsel %vm106, %v3691, %v3730
    %v3733 = vunpack.c.l.s4 1983009808
    %v3734 = vunpack.c.0.s8 %v3733
    %v3735 = vperm.slane %v3729, %v3734
    %v3737 = vunpack.c.l.s4 1983009808
    %v3738 = vunpack.c.0.s8 %v3737
    %v3739 = vperm.slane %v3731, %v3738
    %v3740 = vrot.slane %v3711, 4
    %v3741 = vsel %vm106, %v3740, %v3699
    %v3742 = vrot.slane %v3699, 4
    %v3743 = vsel %vm106, %v3711, %v3742
    %v3745 = vunpack.c.l.s4 1934713408
    %v3746 = vunpack.c.0.s8 %v3745
    %v3747 = vperm.slane %v3741, %v3746
    %v3749 = vunpack.c.l.s4 1934713408
    %v3750 = vunpack.c.0.s8 %v3749
    %v3751 = vperm.slane %v3743, %v3750
    %v3752 = vrot.slane %v3715, 4
    %v3753 = vsel %vm106, %v3752, %v3703
    %v3754 = vrot.slane %v3703, 4
    %v3755 = vsel %vm106, %v3715, %v3754
    %v3757 = vunpack.c.l.s4 1934713408
    %v3758 = vunpack.c.0.s8 %v3757
    %v3759 = vperm.slane %v3753, %v3758
    %v3761 = vunpack.c.l.s4 1934713408
    %v3762 = vunpack.c.0.s8 %v3761
    %v3763 = vperm.slane %v3755, %v3762
    %v3764 = vrot.slane %v3735, 4
    %v3765 = vsel %vm106, %v3764, %v3723
    %v3766 = vrot.slane %v3723, 4
    %v3767 = vsel %vm106, %v3735, %v3766
    %v3769 = vunpack.c.l.s4 1934713408
    %v3770 = vunpack.c.0.s8 %v3769
    %v3771 = vperm.slane %v3765, %v3770
    %v3773 = vunpack.c.l.s4 1934713408
    %v3774 = vunpack.c.0.s8 %v3773
    %v3775 = vperm.slane %v3767, %v3774
    %v3776 = vrot.slane %v3739, 4
    %v3777 = vsel %vm106, %v3776, %v3727
    %v3778 = vrot.slane %v3727, 4
    %v3779 = vsel %vm106, %v3739, %v3778
    %v3781 = vunpack.c.l.s4 1934713408
    %v3782 = vunpack.c.0.s8 %v3781
    %v3783 = vperm.slane %v3777, %v3782
    %v3785 = vunpack.c.l.s4 1934713408
    %v3786 = vunpack.c.0.s8 %v3785
    %v3787 = vperm.slane %v3779, %v3786
    %v3788 = vrot.slane %v3771, 4
    %v3789 = vsel %vm106, %v3788, %v3747
    %v3790 = vrot.slane %v3747, 4
    %v3791 = vsel %vm106, %v3771, %v3790
    %v3792 = vrot.slane %v3775, 4
    %v3793 = vsel %vm106, %v3792, %v3751
    %v3794 = vrot.slane %v3751, 4
    %v3795 = vsel %vm106, %v3775, %v3794
    %v3796 = vrot.slane %v3783, 4
    %v3797 = vsel %vm106, %v3796, %v3759
    %v3798 = vrot.slane %v3759, 4
    %v3799 = vsel %vm106, %v3783, %v3798
    %v3800 = vrot.slane %v3787, 4
    %v3801 = vsel %vm106, %v3800, %v3763
    %v3802 = vrot.slane %v3763, 4
    %v3803 = vsel %vm106, %v3787, %v3802
    %3805 = vrot.lane.b32.xlu0 %v3791, 4
    %v3806 = vpop.permute.xlu0 %3805
    %3809 = vrot.lane.b32.xlu0 %v3793, 8
    %v3810 = vpop.permute.xlu0 %3809
    %3813 = vrot.lane.b32.xlu0 %v3795, 12
    %v3814 = vpop.permute.xlu0 %3813
    %3817 = vrot.lane.b32.xlu0 %v3797, 16
    %v3818 = vpop.permute.xlu0 %3817
    %3821 = vrot.lane.b32.xlu0 %v3799, 20
    %v3822 = vpop.permute.xlu0 %3821
    %3825 = vrot.lane.b32.xlu0 %v3801, 24
    %v3826 = vpop.permute.xlu0 %3825
    %3829 = vrot.lane.b32.xlu0 %v3803, 28
    %v3830 = vpop.permute.xlu0 %3829
    %v3832 = vsel %vm856, %v3789, %v3806
    %v3833 = vsel %vm1065, %v3832, %v3810
    %v3834 = vsel %vm1592, %v3833, %v3814
    %v3835 = vsel %vm1594, %v3834, %v3818
    %v3836 = vsel %vm1596, %v3835, %v3822
    %v3837 = vsel %vm1598, %v3836, %v3826
    %v3838 = vsel %vm1600, %v3837, %v3830
    %v3839 = vperm.slane %v2289, 3
    %3844 = vrot.lane.b32.xlu0 %v2280, 32
    %v3845 = vpop.permute.xlu0 %3844
    %3846 = vrot.lane.b32.xlu0 %v2282, 32
    %v3847 = vpop.permute.xlu0 %3846
    %3848 = vrot.lane.b32.xlu0 %v2284, 32
    %v3849 = vpop.permute.xlu0 %3848
    %3850 = vrot.lane.b32.xlu0 %v2286, 32
    %v3851 = vpop.permute.xlu0 %3850
    %v3857 = vsel %vm45, %v3838, 0
    %3859 = vmatpush.msra.mxu0 0.0
    %3860 = vmatpush.msra.mxu0 0.0
    %3861 = vmatpush.msra.mxu0 0.0
    %3862 = vmatpush.msra.mxu0 0.0
    %3863 = vmatpush.msra.mxu0 0.0
    %3864 = vmatpush.msra.mxu0 0.0
    %3865 = vmatpush.msra.mxu0 0.0
    %3866 = vmatpush.msra.mxu0 0.0
    %3867 = vmatpush.msra.mxu0 0.0
    %3868 = vmatpush.msra.mxu0 0.0
    %3869 = vmatpush.msra.mxu0 0.0
    %3870 = vmatpush.msra.mxu0 0.0
    %3871 = vmatpush.msra.mxu0 %v3851
    %3872 = vmatpush.msra.mxu0 %v3849
    %3873 = vmatpush.msra.mxu0 %v3847
    %3874 = vmatpush.msra.mxu0 %v3845
    %3875 = vmatmul.f32.gmra.mxu0 %v3857
    %v3876 = vpop.f32.mrf.mxu0
    %v3877 = vadd.f32 %v3839, %v3876
    %3878 = vdwg.mxu0
    %v3879 = vadd.f32 %v2278, %v3877
    %3881 = vrot.lane.b32.xlu0 %v3879, 112
    %v3882 = vpop.permute.xlu0 %3881
    %v3884 = vrot.slane %v3879, 4
    %v3885 = vsel %vm106, 0.0, %v3884
    %v3887 = vunpack.c.l.s4 1983009808
    %v3888 = vunpack.c.0.s8 %v3887
    %v3889 = vperm.slane %v3879, %v3888
    %v3891 = vunpack.c.l.s4 1983009808
    %v3892 = vunpack.c.0.s8 %v3891
    %v3893 = vperm.slane %v3885, %v3892
    %v3894 = vrot.slane %v3882, 4
    %v3895 = vsel %vm106, 0.0, %v3894
    %v3897 = vunpack.c.l.s4 1983009808
    %v3898 = vunpack.c.0.s8 %v3897
    %v3899 = vperm.slane %v3882, %v3898
    %v3901 = vunpack.c.l.s4 1983009808
    %v3902 = vunpack.c.0.s8 %v3901
    %v3903 = vperm.slane %v3895, %v3902
    %v3904 = vrot.slane %v3899, 4
    %v3905 = vsel %vm106, %v3904, %v3889
    %v3906 = vrot.slane %v3889, 4
    %v3907 = vsel %vm106, %v3899, %v3906
    %v3909 = vunpack.c.l.s4 1934713408
    %v3910 = vunpack.c.0.s8 %v3909
    %v3911 = vperm.slane %v3905, %v3910
    %v3913 = vunpack.c.l.s4 1934713408
    %v3914 = vunpack.c.0.s8 %v3913
    %v3915 = vperm.slane %v3907, %v3914
    %v3916 = vrot.slane %v3903, 4
    %v3917 = vsel %vm106, %v3916, %v3893
    %v3918 = vrot.slane %v3893, 4
    %v3919 = vsel %vm106, %v3903, %v3918
    %v3921 = vunpack.c.l.s4 1934713408
    %v3922 = vunpack.c.0.s8 %v3921
    %v3923 = vperm.slane %v3917, %v3922
    %v3925 = vunpack.c.l.s4 1934713408
    %v3926 = vunpack.c.0.s8 %v3925
    %v3927 = vperm.slane %v3919, %v3926
    %v3928 = vrot.slane %v3911, 4
    %v3929 = vsel %vm106, 0.0, %v3928
    %v3930 = vrot.slane %v3915, 4
    %v3931 = vsel %vm106, 0.0, %v3930
    %v3932 = vrot.slane %v3923, 4
    %v3933 = vsel %vm106, 0.0, %v3932
    %v3934 = vrot.slane %v3927, 4
    %v3935 = vsel %vm106, 0.0, %v3934
    %v3936 = vsel %vm1699, %v3911, 0.0
    %3937 = vadd.xlane.f32.xlu0 %v3936
    %v3938 = vpop.xlane.xlu0 %3937
    %v3939 = vsel %vm1699, %v3929, 0.0
    %3940 = vadd.xlane.f32.xlu0 %v3939
    %v3941 = vpop.xlane.xlu0 %3940
    %v3942 = vsel %vm1699, %v3915, 0.0
    %3943 = vadd.xlane.f32.xlu0 %v3942
    %v3944 = vpop.xlane.xlu0 %3943
    %v3945 = vsel %vm1699, %v3931, 0.0
    %3946 = vadd.xlane.f32.xlu0 %v3945
    %v3947 = vpop.xlane.xlu0 %3946
    %v3948 = vsel %vm1699, %v3923, 0.0
    %3949 = vadd.xlane.f32.xlu0 %v3948
    %v3950 = vpop.xlane.xlu0 %3949
    %v3951 = vsel %vm1699, %v3933, 0.0
    %3952 = vadd.xlane.f32.xlu0 %v3951
    %v3953 = vpop.xlane.xlu0 %3952
    %v3954 = vsel %vm1699, %v3927, 0.0
    %3955 = vadd.xlane.f32.xlu0 %v3954
    %v3956 = vpop.xlane.xlu0 %3955
    %v3957 = vsel %vm1699, %v3935, 0.0
    %3958 = vadd.xlane.f32.xlu0 %v3957
    %v3959 = vpop.xlane.xlu0 %3958
    %v3960 = vmul.f32 %v3938, %v1730
    %v3961 = vmul.f32 %v3941, %v1730
    %v3962 = vmul.f32 %v3944, %v1730
    %v3963 = vmul.f32 %v3947, %v1730
    %v3964 = vmul.f32 %v3950, %v1730
    %v3965 = vmul.f32 %v3953, %v1730
    %v3966 = vmul.f32 %v3956, %v1730
    %v3967 = vmul.f32 %v3959, %v1730
    %v3968 = vsub.f32 %v3911, %v3960
    %v3969 = vsub.f32 %v3929, %v3961
    %v3970 = vsub.f32 %v3915, %v3962
    %v3971 = vsub.f32 %v3931, %v3963
    %v3972 = vsub.f32 %v3923, %v3964
    %v3973 = vsub.f32 %v3933, %v3965
    %v3974 = vsub.f32 %v3927, %v3966
    %v3975 = vsub.f32 %v3935, %v3967
    %v3976 = vmul.f32 %v3968, %v3968
    %v3977 = vmul.f32 %v3969, %v3969
    %v3978 = vmul.f32 %v3970, %v3970
    %v3979 = vmul.f32 %v3971, %v3971
    %v3980 = vmul.f32 %v3972, %v3972
    %v3981 = vmul.f32 %v3973, %v3973
    %v3982 = vmul.f32 %v3974, %v3974
    %v3983 = vmul.f32 %v3975, %v3975
    %v3984 = vsel %vm1699, %v3976, 0.0
    %3985 = vadd.xlane.f32.xlu0 %v3984
    %v3986 = vpop.xlane.xlu0 %3985
    %v3987 = vsel %vm1699, %v3977, 0.0
    %3988 = vadd.xlane.f32.xlu0 %v3987
    %v3989 = vpop.xlane.xlu0 %3988
    %v3990 = vsel %vm1699, %v3978, 0.0
    %3991 = vadd.xlane.f32.xlu0 %v3990
    %v3992 = vpop.xlane.xlu0 %3991
    %v3993 = vsel %vm1699, %v3979, 0.0
    %3994 = vadd.xlane.f32.xlu0 %v3993
    %v3995 = vpop.xlane.xlu0 %3994
    %v3996 = vsel %vm1699, %v3980, 0.0
    %3997 = vadd.xlane.f32.xlu0 %v3996
    %v3998 = vpop.xlane.xlu0 %3997
    %v3999 = vsel %vm1699, %v3981, 0.0
    %4000 = vadd.xlane.f32.xlu0 %v3999
    %v4001 = vpop.xlane.xlu0 %4000
    %v4002 = vsel %vm1699, %v3982, 0.0
    %4003 = vadd.xlane.f32.xlu0 %v4002
    %v4004 = vpop.xlane.xlu0 %4003
    %v4005 = vsel %vm1699, %v3983, 0.0
    %4006 = vadd.xlane.f32.xlu0 %v4005
    %v4007 = vpop.xlane.xlu0 %4006
    %v4008 = vmul.f32 %v3986, %v1730
    %v4009 = vmul.f32 %v3989, %v1730
    %v4010 = vmul.f32 %v3992, %v1730
    %v4011 = vmul.f32 %v3995, %v1730
    %v4012 = vmul.f32 %v3998, %v1730
    %v4013 = vmul.f32 %v4001, %v1730
    %v4014 = vmul.f32 %v4004, %v1730
    %v4015 = vmul.f32 %v4007, %v1730
    %v4016 = vadd.f32 %v4008, 1e-05
    %v4017 = vadd.f32 %v4009, 1e-05
    %v4018 = vadd.f32 %v4010, 1e-05
    %v4019 = vadd.f32 %v4011, 1e-05
    %v4020 = vadd.f32 %v4012, 1e-05
    %v4021 = vadd.f32 %v4013, 1e-05
    %v4022 = vadd.f32 %v4014, 1e-05
    %v4023 = vadd.f32 %v4015, 1e-05
    %v4024 = vrsqrt.pop %v4016
    %v4025 = vmul.f32 %v4024, %v4016
    %v4026 = vmul.f32 %v4025, %v4024
    %v4027 = vmul.f32 0.5, %v4026
    %v4028 = vsub.f32 1.5, %v4027
    %v4029 = vmul.f32 %v4024, %v4028
    %vm4030 = vweird.f32 %v4016
    %vm4031 = vweird.f32 %v4024
    %vm4032 = vmor %vm4030, %vm4031
    %v4033 = vsel %vm4032, %v4024, %v4029
    %v4034 = vrsqrt.pop %v4017
    %v4035 = vmul.f32 %v4034, %v4017
    %v4036 = vmul.f32 %v4035, %v4034
    %v4037 = vmul.f32 0.5, %v4036
    %v4038 = vsub.f32 1.5, %v4037
    %v4039 = vmul.f32 %v4034, %v4038
    %vm4040 = vweird.f32 %v4017
    %vm4041 = vweird.f32 %v4034
    %vm4042 = vmor %vm4040, %vm4041
    %v4043 = vsel %vm4042, %v4034, %v4039
    %v4044 = vrsqrt.pop %v4018
    %v4045 = vmul.f32 %v4044, %v4018
    %v4046 = vmul.f32 %v4045, %v4044
    %v4047 = vmul.f32 0.5, %v4046
    %v4048 = vsub.f32 1.5, %v4047
    %v4049 = vmul.f32 %v4044, %v4048
    %vm4050 = vweird.f32 %v4018
    %vm4051 = vweird.f32 %v4044
    %vm4052 = vmor %vm4050, %vm4051
    %v4053 = vsel %vm4052, %v4044, %v4049
    %v4054 = vrsqrt.pop %v4019
    %v4055 = vmul.f32 %v4054, %v4019
    %v4056 = vmul.f32 %v4055, %v4054
    %v4057 = vmul.f32 0.5, %v4056
    %v4058 = vsub.f32 1.5, %v4057
    %v4059 = vmul.f32 %v4054, %v4058
    %vm4060 = vweird.f32 %v4019
    %vm4061 = vweird.f32 %v4054
    %vm4062 = vmor %vm4060, %vm4061
    %v4063 = vsel %vm4062, %v4054, %v4059
    %v4064 = vrsqrt.pop %v4020
    %v4065 = vmul.f32 %v4064, %v4020
    %v4066 = vmul.f32 %v4065, %v4064
    %v4067 = vmul.f32 0.5, %v4066
    %v4068 = vsub.f32 1.5, %v4067
    %v4069 = vmul.f32 %v4064, %v4068
    %vm4070 = vweird.f32 %v4020
    %vm4071 = vweird.f32 %v4064
    %vm4072 = vmor %vm4070, %vm4071
    %v4073 = vsel %vm4072, %v4064, %v4069
    %v4074 = vrsqrt.pop %v4021
    %v4075 = vmul.f32 %v4074, %v4021
    %v4076 = vmul.f32 %v4075, %v4074
    %v4077 = vmul.f32 0.5, %v4076
    %v4078 = vsub.f32 1.5, %v4077
    %v4079 = vmul.f32 %v4074, %v4078
    %vm4080 = vweird.f32 %v4021
    %vm4081 = vweird.f32 %v4074
    %vm4082 = vmor %vm4080, %vm4081
    %v4083 = vsel %vm4082, %v4074, %v4079
    %v4084 = vrsqrt.pop %v4022
    %v4085 = vmul.f32 %v4084, %v4022
    %v4086 = vmul.f32 %v4085, %v4084
    %v4087 = vmul.f32 0.5, %v4086
    %v4088 = vsub.f32 1.5, %v4087
    %v4089 = vmul.f32 %v4084, %v4088
    %vm4090 = vweird.f32 %v4022
    %vm4091 = vweird.f32 %v4084
    %vm4092 = vmor %vm4090, %vm4091
    %v4093 = vsel %vm4092, %v4084, %v4089
    %v4094 = vrsqrt.pop %v4023
    %v4095 = vmul.f32 %v4094, %v4023
    %v4096 = vmul.f32 %v4095, %v4094
    %v4097 = vmul.f32 0.5, %v4096
    %v4098 = vsub.f32 1.5, %v4097
    %v4099 = vmul.f32 %v4094, %v4098
    %vm4100 = vweird.f32 %v4023
    %vm4101 = vweird.f32 %v4094
    %vm4102 = vmor %vm4100, %vm4101
    %v4103 = vsel %vm4102, %v4094, %v4099
    %v4104 = vmul.f32 %v3968, %v4033
    %v4105 = vmul.f32 %v3969, %v4043
    %v4106 = vmul.f32 %v3970, %v4053
    %v4107 = vmul.f32 %v3971, %v4063
    %v4108 = vmul.f32 %v3972, %v4073
    %v4109 = vmul.f32 %v3973, %v4083
    %v4110 = vmul.f32 %v3974, %v4093
    %v4111 = vmul.f32 %v3975, %v4103
    %v4112 = vrot.slane %v4106, 4
    %v4113 = vsel %vm106, %v4112, %v4104
    %v4115 = vunpack.c.l.s4 1983009808
    %v4116 = vunpack.c.0.s8 %v4115
    %v4117 = vperm.slane %v4113, %v4116
    %v4118 = vrot.slane %v4107, 4
    %v4119 = vsel %vm106, %v4118, %v4105
    %v4121 = vunpack.c.l.s4 1983009808
    %v4122 = vunpack.c.0.s8 %v4121
    %v4123 = vperm.slane %v4119, %v4122
    %v4124 = vrot.slane %v4110, 4
    %v4125 = vsel %vm106, %v4124, %v4108
    %v4127 = vunpack.c.l.s4 1983009808
    %v4128 = vunpack.c.0.s8 %v4127
    %v4129 = vperm.slane %v4125, %v4128
    %v4130 = vrot.slane %v4111, 4
    %v4131 = vsel %vm106, %v4130, %v4109
    %v4133 = vunpack.c.l.s4 1983009808
    %v4134 = vunpack.c.0.s8 %v4133
    %v4135 = vperm.slane %v4131, %v4134
    %v4136 = vrot.slane %v4123, 4
    %v4137 = vsel %vm106, %v4136, %v4117
    %v4139 = vunpack.c.l.s4 1934713408
    %v4140 = vunpack.c.0.s8 %v4139
    %v4141 = vperm.slane %v4137, %v4140
    %v4142 = vrot.slane %v4135, 4
    %v4143 = vsel %vm106, %v4142, %v4129
    %v4145 = vunpack.c.l.s4 1934713408
    %v4146 = vunpack.c.0.s8 %v4145
    %v4147 = vperm.slane %v4143, %v4146
    %v4148 = vrot.slane %v4147, 4
    %v4149 = vsel %vm106, %v4148, %v4141
    %v4150 = vrot.slane %v4141, 4
    %v4151 = vsel %vm106, %v4147, %v4150
    %4153 = vrot.lane.b32.xlu0 %v4151, 16
    %v4154 = vpop.permute.xlu0 %4153
    %v4156 = vsel %vm1594, %v4149, %v4154
    %v4157 = vperm.slane %v2289, 6
    %v4158 = vmul.f32 %v4156, %v4157
    %v4159 = vperm.slane %v2289, 7
    %v4160 = vadd.f32 %v4158, %v4159
    %v4161 = vperm.slane %v2289, 4
    %v4163 = vsel %vm45, %v4160, 0
    %4165 = vmatpush.msra.mxu0 0.0
    %4166 = vmatpush.msra.mxu0 0.0
    %4167 = vmatpush.msra.mxu0 0.0
    %4168 = vmatpush.msra.mxu0 0.0
    %4169 = vmatpush.msra.mxu0 0.0
    %4170 = vmatpush.msra.mxu0 0.0
    %4171 = vmatpush.msra.mxu0 0.0
    %4172 = vmatpush.msra.mxu0 0.0
    %4173 = vmatpush.msra.mxu0 0.0
    %4174 = vmatpush.msra.mxu0 0.0
    %4175 = vmatpush.msra.mxu0 0.0
    %4176 = vmatpush.msra.mxu0 0.0
    %4177 = vmatpush.msra.mxu0 %v2287
    %4178 = vmatpush.msra.mxu0 %v2285
    %4179 = vmatpush.msra.mxu0 %v2283
    %4180 = vmatpush.msra.mxu0 %v2281
    %4181 = vmatmul.f32.gmra.mxu0 %v4163
    %v4182 = vpop.f32.mrf.mxu0
    %v4183 = vadd.f32 %v4161, %v4182
    %4184 = vdwg.mxu0
    %v4185 = vmax.f32 %v4183, 0.0
    %v4186 = vperm.slane %v2289, 5
    %4191 = vrot.lane.b32.xlu0 %v2281, 96
    %v4192 = vpop.permute.xlu0 %4191
    %4193 = vrot.lane.b32.xlu0 %v2283, 96
    %v4194 = vpop.permute.xlu0 %4193
    %4195 = vrot.lane.b32.xlu0 %v2285, 96
    %v4196 = vpop.permute.xlu0 %4195
    %4197 = vrot.lane.b32.xlu0 %v2287, 96
    %v4198 = vpop.permute.xlu0 %4197
    %v4204 = vsel %vm45, %v4185, 0
    %4206 = vmatpush.msra.mxu0 0.0
    %4207 = vmatpush.msra.mxu0 0.0
    %4208 = vmatpush.msra.mxu0 0.0
    %4209 = vmatpush.msra.mxu0 0.0
    %4210 = vmatpush.msra.mxu0 0.0
    %4211 = vmatpush.msra.mxu0 0.0
    %4212 = vmatpush.msra.mxu0 0.0
    %4213 = vmatpush.msra.mxu0 0.0
    %4214 = vmatpush.msra.mxu0 0.0
    %4215 = vmatpush.msra.mxu0 0.0
    %4216 = vmatpush.msra.mxu0 0.0
    %4217 = vmatpush.msra.mxu0 0.0
    %4218 = vmatpush.msra.mxu0 %v4198
    %4219 = vmatpush.msra.mxu0 %v4196
    %4220 = vmatpush.msra.mxu0 %v4194
    %4221 = vmatpush.msra.mxu0 %v4192
    %4222 = vmatmul.f32.gmra.mxu0 %v4204
    %v4223 = vpop.f32.mrf.mxu0
    %v4224 = vadd.f32 %v4186, %v4223
    %4225 = vdwg.mxu0
    %v4226 = vadd.f32 %v4160, %v4224
    %4228 = vrot.lane.b32.xlu0 %v4226, 112
    %v4229 = vpop.permute.xlu0 %4228
    %v4231 = vrot.slane %v4226, 4
    %v4232 = vsel %vm106, 0.0, %v4231
    %v4234 = vunpack.c.l.s4 1983009808
    %v4235 = vunpack.c.0.s8 %v4234
    %v4236 = vperm.slane %v4226, %v4235
    %v4238 = vunpack.c.l.s4 1983009808
    %v4239 = vunpack.c.0.s8 %v4238
    %v4240 = vperm.slane %v4232, %v4239
    %v4241 = vrot.slane %v4229, 4
    %v4242 = vsel %vm106, 0.0, %v4241
    %v4244 = vunpack.c.l.s4 1983009808
    %v4245 = vunpack.c.0.s8 %v4244
    %v4246 = vperm.slane %v4229, %v4245
    %v4248 = vunpack.c.l.s4 1983009808
    %v4249 = vunpack.c.0.s8 %v4248
    %v4250 = vperm.slane %v4242, %v4249
    %v4251 = vrot.slane %v4246, 4
    %v4252 = vsel %vm106, %v4251, %v4236
    %v4253 = vrot.slane %v4236, 4
    %v4254 = vsel %vm106, %v4246, %v4253
    %v4256 = vunpack.c.l.s4 1934713408
    %v4257 = vunpack.c.0.s8 %v4256
    %v4258 = vperm.slane %v4252, %v4257
    %v4260 = vunpack.c.l.s4 1934713408
    %v4261 = vunpack.c.0.s8 %v4260
    %v4262 = vperm.slane %v4254, %v4261
    %v4263 = vrot.slane %v4250, 4
    %v4264 = vsel %vm106, %v4263, %v4240
    %v4265 = vrot.slane %v4240, 4
    %v4266 = vsel %vm106, %v4250, %v4265
    %v4268 = vunpack.c.l.s4 1934713408
    %v4269 = vunpack.c.0.s8 %v4268
    %v4270 = vperm.slane %v4264, %v4269
    %v4272 = vunpack.c.l.s4 1934713408
    %v4273 = vunpack.c.0.s8 %v4272
    %v4274 = vperm.slane %v4266, %v4273
    %v4275 = vrot.slane %v4258, 4
    %v4276 = vsel %vm106, 0.0, %v4275
    %v4277 = vrot.slane %v4262, 4
    %v4278 = vsel %vm106, 0.0, %v4277
    %v4279 = vrot.slane %v4270, 4
    %v4280 = vsel %vm106, 0.0, %v4279
    %v4281 = vrot.slane %v4274, 4
    %v4282 = vsel %vm106, 0.0, %v4281
    %v4283 = vsel %vm1699, %v4258, 0.0
    %4284 = vadd.xlane.f32.xlu0 %v4283
    %v4285 = vpop.xlane.xlu0 %4284
    %v4286 = vsel %vm1699, %v4276, 0.0
    %4287 = vadd.xlane.f32.xlu0 %v4286
    %v4288 = vpop.xlane.xlu0 %4287
    %v4289 = vsel %vm1699, %v4262, 0.0
    %4290 = vadd.xlane.f32.xlu0 %v4289
    %v4291 = vpop.xlane.xlu0 %4290
    %v4292 = vsel %vm1699, %v4278, 0.0
    %4293 = vadd.xlane.f32.xlu0 %v4292
    %v4294 = vpop.xlane.xlu0 %4293
    %v4295 = vsel %vm1699, %v4270, 0.0
    %4296 = vadd.xlane.f32.xlu0 %v4295
    %v4297 = vpop.xlane.xlu0 %4296
    %v4298 = vsel %vm1699, %v4280, 0.0
    %4299 = vadd.xlane.f32.xlu0 %v4298
    %v4300 = vpop.xlane.xlu0 %4299
    %v4301 = vsel %vm1699, %v4274, 0.0
    %4302 = vadd.xlane.f32.xlu0 %v4301
    %v4303 = vpop.xlane.xlu0 %4302
    %v4304 = vsel %vm1699, %v4282, 0.0
    %4305 = vadd.xlane.f32.xlu0 %v4304
    %v4306 = vpop.xlane.xlu0 %4305
    %v4307 = vmul.f32 %v4285, %v1730
    %v4308 = vmul.f32 %v4288, %v1730
    %v4309 = vmul.f32 %v4291, %v1730
    %v4310 = vmul.f32 %v4294, %v1730
    %v4311 = vmul.f32 %v4297, %v1730
    %v4312 = vmul.f32 %v4300, %v1730
    %v4313 = vmul.f32 %v4303, %v1730
    %v4314 = vmul.f32 %v4306, %v1730
    %v4315 = vsub.f32 %v4258, %v4307
    %v4316 = vsub.f32 %v4276, %v4308
    %v4317 = vsub.f32 %v4262, %v4309
    %v4318 = vsub.f32 %v4278, %v4310
    %v4319 = vsub.f32 %v4270, %v4311
    %v4320 = vsub.f32 %v4280, %v4312
    %v4321 = vsub.f32 %v4274, %v4313
    %v4322 = vsub.f32 %v4282, %v4314
    %v4323 = vmul.f32 %v4315, %v4315
    %v4324 = vmul.f32 %v4316, %v4316
    %v4325 = vmul.f32 %v4317, %v4317
    %v4326 = vmul.f32 %v4318, %v4318
    %v4327 = vmul.f32 %v4319, %v4319
    %v4328 = vmul.f32 %v4320, %v4320
    %v4329 = vmul.f32 %v4321, %v4321
    %v4330 = vmul.f32 %v4322, %v4322
    %v4331 = vsel %vm1699, %v4323, 0.0
    %4332 = vadd.xlane.f32.xlu0 %v4331
    %v4333 = vpop.xlane.xlu0 %4332
    %v4334 = vsel %vm1699, %v4324, 0.0
    %4335 = vadd.xlane.f32.xlu0 %v4334
    %v4336 = vpop.xlane.xlu0 %4335
    %v4337 = vsel %vm1699, %v4325, 0.0
    %4338 = vadd.xlane.f32.xlu0 %v4337
    %v4339 = vpop.xlane.xlu0 %4338
    %v4340 = vsel %vm1699, %v4326, 0.0
    %4341 = vadd.xlane.f32.xlu0 %v4340
    %v4342 = vpop.xlane.xlu0 %4341
    %v4343 = vsel %vm1699, %v4327, 0.0
    %4344 = vadd.xlane.f32.xlu0 %v4343
    %v4345 = vpop.xlane.xlu0 %4344
    %v4346 = vsel %vm1699, %v4328, 0.0
    %4347 = vadd.xlane.f32.xlu0 %v4346
    %v4348 = vpop.xlane.xlu0 %4347
    %v4349 = vsel %vm1699, %v4329, 0.0
    %4350 = vadd.xlane.f32.xlu0 %v4349
    %v4351 = vpop.xlane.xlu0 %4350
    %v4352 = vsel %vm1699, %v4330, 0.0
    %4353 = vadd.xlane.f32.xlu0 %v4352
    %v4354 = vpop.xlane.xlu0 %4353
    %v4355 = vmul.f32 %v4333, %v1730
    %v4356 = vmul.f32 %v4336, %v1730
    %v4357 = vmul.f32 %v4339, %v1730
    %v4358 = vmul.f32 %v4342, %v1730
    %v4359 = vmul.f32 %v4345, %v1730
    %v4360 = vmul.f32 %v4348, %v1730
    %v4361 = vmul.f32 %v4351, %v1730
    %v4362 = vmul.f32 %v4354, %v1730
    %v4363 = vadd.f32 %v4355, 1e-05
    %v4364 = vadd.f32 %v4356, 1e-05
    %v4365 = vadd.f32 %v4357, 1e-05
    %v4366 = vadd.f32 %v4358, 1e-05
    %v4367 = vadd.f32 %v4359, 1e-05
    %v4368 = vadd.f32 %v4360, 1e-05
    %v4369 = vadd.f32 %v4361, 1e-05
    %v4370 = vadd.f32 %v4362, 1e-05
    %v4371 = vrsqrt.pop %v4363
    %v4372 = vmul.f32 %v4371, %v4363
    %v4373 = vmul.f32 %v4372, %v4371
    %v4374 = vmul.f32 0.5, %v4373
    %v4375 = vsub.f32 1.5, %v4374
    %v4376 = vmul.f32 %v4371, %v4375
    %vm4377 = vweird.f32 %v4363
    %vm4378 = vweird.f32 %v4371
    %vm4379 = vmor %vm4377, %vm4378
    %v4380 = vsel %vm4379, %v4371, %v4376
    %v4381 = vrsqrt.pop %v4364
    %v4382 = vmul.f32 %v4381, %v4364
    %v4383 = vmul.f32 %v4382, %v4381
    %v4384 = vmul.f32 0.5, %v4383
    %v4385 = vsub.f32 1.5, %v4384
    %v4386 = vmul.f32 %v4381, %v4385
    %vm4387 = vweird.f32 %v4364
    %vm4388 = vweird.f32 %v4381
    %vm4389 = vmor %vm4387, %vm4388
    %v4390 = vsel %vm4389, %v4381, %v4386
    %v4391 = vrsqrt.pop %v4365
    %v4392 = vmul.f32 %v4391, %v4365
    %v4393 = vmul.f32 %v4392, %v4391
    %v4394 = vmul.f32 0.5, %v4393
    %v4395 = vsub.f32 1.5, %v4394
    %v4396 = vmul.f32 %v4391, %v4395
    %vm4397 = vweird.f32 %v4365
    %vm4398 = vweird.f32 %v4391
    %vm4399 = vmor %vm4397, %vm4398
    %v4400 = vsel %vm4399, %v4391, %v4396
    %v4401 = vrsqrt.pop %v4366
    %v4402 = vmul.f32 %v4401, %v4366
    %v4403 = vmul.f32 %v4402, %v4401
    %v4404 = vmul.f32 0.5, %v4403
    %v4405 = vsub.f32 1.5, %v4404
    %v4406 = vmul.f32 %v4401, %v4405
    %vm4407 = vweird.f32 %v4366
    %vm4408 = vweird.f32 %v4401
    %vm4409 = vmor %vm4407, %vm4408
    %v4410 = vsel %vm4409, %v4401, %v4406
    %v4411 = vrsqrt.pop %v4367
    %v4412 = vmul.f32 %v4411, %v4367
    %v4413 = vmul.f32 %v4412, %v4411
    %v4414 = vmul.f32 0.5, %v4413
    %v4415 = vsub.f32 1.5, %v4414
    %v4416 = vmul.f32 %v4411, %v4415
    %vm4417 = vweird.f32 %v4367
    %vm4418 = vweird.f32 %v4411
    %vm4419 = vmor %vm4417, %vm4418
    %v4420 = vsel %vm4419, %v4411, %v4416
    %v4421 = vrsqrt.pop %v4368
    %v4422 = vmul.f32 %v4421, %v4368
    %v4423 = vmul.f32 %v4422, %v4421
    %v4424 = vmul.f32 0.5, %v4423
    %v4425 = vsub.f32 1.5, %v4424
    %v4426 = vmul.f32 %v4421, %v4425
    %vm4427 = vweird.f32 %v4368
    %vm4428 = vweird.f32 %v4421
    %vm4429 = vmor %vm4427, %vm4428
    %v4430 = vsel %vm4429, %v4421, %v4426
    %v4431 = vrsqrt.pop %v4369
    %v4432 = vmul.f32 %v4431, %v4369
    %v4433 = vmul.f32 %v4432, %v4431
    %v4434 = vmul.f32 0.5, %v4433
    %v4435 = vsub.f32 1.5, %v4434
    %v4436 = vmul.f32 %v4431, %v4435
    %vm4437 = vweird.f32 %v4369
    %vm4438 = vweird.f32 %v4431
    %vm4439 = vmor %vm4437, %vm4438
    %v4440 = vsel %vm4439, %v4431, %v4436
    %v4441 = vrsqrt.pop %v4370
    %v4442 = vmul.f32 %v4441, %v4370
    %v4443 = vmul.f32 %v4442, %v4441
    %v4444 = vmul.f32 0.5, %v4443
    %v4445 = vsub.f32 1.5, %v4444
    %v4446 = vmul.f32 %v4441, %v4445
    %vm4447 = vweird.f32 %v4370
    %vm4448 = vweird.f32 %v4441
    %vm4449 = vmor %vm4447, %vm4448
    %v4450 = vsel %vm4449, %v4441, %v4446
    %v4451 = vmul.f32 %v4315, %v4380
    %v4452 = vmul.f32 %v4316, %v4390
    %v4453 = vmul.f32 %v4317, %v4400
    %v4454 = vmul.f32 %v4318, %v4410
    %v4455 = vmul.f32 %v4319, %v4420
    %v4456 = vmul.f32 %v4320, %v4430
    %v4457 = vmul.f32 %v4321, %v4440
    %v4458 = vmul.f32 %v4322, %v4450
    %v4459 = vrot.slane %v4453, 4
    %v4460 = vsel %vm106, %v4459, %v4451
    %v4462 = vunpack.c.l.s4 1983009808
    %v4463 = vunpack.c.0.s8 %v4462
    %v4464 = vperm.slane %v4460, %v4463
    %v4465 = vrot.slane %v4454, 4
    %v4466 = vsel %vm106, %v4465, %v4452
    %v4468 = vunpack.c.l.s4 1983009808
    %v4469 = vunpack.c.0.s8 %v4468
    %v4470 = vperm.slane %v4466, %v4469
    %v4471 = vrot.slane %v4457, 4
    %v4472 = vsel %vm106, %v4471, %v4455
    %v4474 = vunpack.c.l.s4 1983009808
    %v4475 = vunpack.c.0.s8 %v4474
    %v4476 = vperm.slane %v4472, %v4475
    %v4477 = vrot.slane %v4458, 4
    %v4478 = vsel %vm106, %v4477, %v4456
    %v4480 = vunpack.c.l.s4 1983009808
    %v4481 = vunpack.c.0.s8 %v4480
    %v4482 = vperm.slane %v4478, %v4481
    %v4483 = vrot.slane %v4470, 4
    %v4484 = vsel %vm106, %v4483, %v4464
    %v4486 = vunpack.c.l.s4 1934713408
    %v4487 = vunpack.c.0.s8 %v4486
    %v4488 = vperm.slane %v4484, %v4487
    %v4489 = vrot.slane %v4482, 4
    %v4490 = vsel %vm106, %v4489, %v4476
    %v4492 = vunpack.c.l.s4 1934713408
    %v4493 = vunpack.c.0.s8 %v4492
    %v4494 = vperm.slane %v4490, %v4493
    %v4495 = vrot.slane %v4494, 4
    %v4496 = vsel %vm106, %v4495, %v4488
    %v4497 = vrot.slane %v4488, 4
    %v4498 = vsel %vm106, %v4494, %v4497
    %4500 = vrot.lane.b32.xlu0 %v4498, 16
    %v4501 = vpop.permute.xlu0 %4500
    %v4503 = vsel %vm1594, %v4496, %v4501
    %v4504 = vperm.slane %v2290, 0
    %v4505 = vmul.f32 %v4503, %v4504
    %v4506 = vperm.slane %v2290, 1
    %v4507 = vadd.f32 %v4505, %v4506
    %v4508 = vld [vmem:[%s3] sm:$0xff]
    %v4509 = vld [vmem:[%s3 + $0x8] sm:$0xff]
    %v4510 = vld [vmem:[%s3 + $0x10] sm:$0xff]
    %v4511 = vld [vmem:[%s3 + $0x18] sm:$0xff]
    %v4512 = vld [vmem:[%s3 + $0x20] sm:$0x1]
    %v4513 = vmax.f32 %v4507, 0.0
    %v4514 = vperm.slane %v4512, 0
    %v4516 = vsel %vm45, %v4513, 0
    %4518 = vmatpush.msra.mxu0 0.0
    %4519 = vmatpush.msra.mxu0 0.0
    %4520 = vmatpush.msra.mxu0 0.0
    %4521 = vmatpush.msra.mxu0 0.0
    %4522 = vmatpush.msra.mxu0 0.0
    %4523 = vmatpush.msra.mxu0 0.0
    %4524 = vmatpush.msra.mxu0 0.0
    %4525 = vmatpush.msra.mxu0 0.0
    %4526 = vmatpush.msra.mxu0 0.0
    %4527 = vmatpush.msra.mxu0 0.0
    %4528 = vmatpush.msra.mxu0 0.0
    %4529 = vmatpush.msra.mxu0 0.0
    %4530 = vmatpush.msra.mxu0 %v4511
    %4531 = vmatpush.msra.mxu0 %v4510
    %4532 = vmatpush.msra.mxu0 %v4509
    %4533 = vmatpush.msra.mxu0 %v4508
    %4534 = vmatmul.f32.gmra.mxu0 %v4516
    %v4535 = vpop.f32.mrf.mxu0
    %v4536 = vadd.f32 %v4514, %v4535
    %4537 = vdwg.mxu0
    %4538 = vst.msk [vmem:[#allocation5] sm:$0xff] %vm1594, %v4536
    // Predicated region
    $region22: #{tpu_custom_call.1} parent=1 // pred_check
      _
    $region23: #{tpu_custom_call.1} parent=1 // pred_check_branch
      %4540 = sbr.rel (0) target = $region25
    $region24: #{tpu_custom_call.1} parent=1 // pred_region
      %4542 = vsyncadd [#allocation4], 0
      %s4544 = sshll.u32 [#allocation5], 4
      %s4545 = int_to_ptr.vmem [resolvable:$true] %s4544
      %s4546 = sshll.u32 %s4, 4
      %s4547 = int_to_ptr.hbm [resolvable:$true] %s4546
      %4549 = dma.vmem_to_hbm [thread:$0]  %s4545, 128, %s4547, [#allocation4]
    $region25: #{tpu_custom_call.1} parent=1 // pred_fallthru
      _
    // Predicated region
    $region26: #{tpu_custom_call.1} parent=1 // pred_check
      _
    $region27: #{tpu_custom_call.1} parent=1 // pred_check_branch
      %4551 = sbr.rel (0) target = $region29
    $region28: #{tpu_custom_call.1} parent=1 // pred_region
      %4553 = dma.done [#allocation4], 128
    $region29: #{tpu_custom_call.1} parent=1 // pred_fallthru
      _
    %4554 = vsyncpa [#allocation3], 1
    %4555 = vsyncpa [#allocation4], 1

</llo_original>
